<compile_context>
chip_gen: v5e
topology: v5e:2x2
jax: 0.10.0
libtpu: 0.0.40
codegen_flags: <defaults>
</compile_context>

<pallas_src>
import functools

import jax
import jax.numpy as jnp
import numpy as np
from jax import lax
from jax.experimental import pallas as pl
from jax.experimental.pallas import tpu as pltpu

_HIGHEST = jax.lax.Precision.HIGHEST


def _hashnet_loss_kernel(
    # scalar prefetch
    ind_ref,                                   # [B] int32 in SMEM
    # inputs
    u_ref, y_ref, U_ref, Y_ref,                # u/y resident, U/Y streamed tiles
    # outputs
    loss_ref, U_hbm_ref, Y_hbm_ref,            # scalar loss (SMEM), banks (HBM)
    # scratch
    ut_ref, ysrc_ref, pos_ref, tot_ref, s1_ref, dma_sem,
    *, alpha, scale, num_train, batch, tile_n):
  i = pl.program_id(0)
  nt = pl.num_programs(0)

  # ---------------- one-time work at the first grid step -------------------
  @pl.when(i == 0)
  def _():
    u = u_ref[...]
    if scale != 1.0:                            # compile-time constant fold
      u = u * scale
    ut_ref[...] = jnp.tanh(u)                   # [B, bit]
    ysrc_ref[...] = y_ref[...]                  # stage y for the scatter DMAs
    pos_ref[...] = jnp.zeros_like(pos_ref)
    tot_ref[...] = jnp.zeros_like(tot_ref)
    s1_ref[...] = jnp.zeros_like(s1_ref)

    # Scatter: U[ind[b]] = u_t[b] ; Y[ind[b]] = y[b].  Only the B touched rows
    # are written back to HBM (the banks are input->output aliased), instead of
    # re-writing the entire banks.
    # NOTE: indices within a minibatch are assumed unique ("last write wins"
    # would be nondeterministic in torch as well for duplicates).
    for b in range(batch):
      row = ind_ref[b]
      pltpu.make_async_copy(ut_ref.at[pl.ds(b, 1), :],
                            U_hbm_ref.at[pl.ds(row, 1), :],
                            dma_sem.at[0, b]).start()
      pltpu.make_async_copy(ysrc_ref.at[pl.ds(b, 1), :],
                            Y_hbm_ref.at[pl.ds(row, 1), :],
                            dma_sem.at[1, b]).start()
    for b in range(batch):
      row = ind_ref[b]
      pltpu.make_async_copy(ut_ref.at[pl.ds(b, 1), :],
                            U_hbm_ref.at[pl.ds(row, 1), :],
                            dma_sem.at[0, b]).wait()
      pltpu.make_async_copy(ysrc_ref.at[pl.ds(b, 1), :],
                            Y_hbm_ref.at[pl.ds(row, 1), :],
                            dma_sem.at[1, b]).wait()

    # Minibatch-vs-touched-rows block: the freshly written bank rows are exactly
    # (u_t, y), so these BxB pair terms are computed directly here; the matching
    # columns are masked out of the streamed tiles below.
    u_t = ut_ref[...]
    y = y_ref[...]
    sim_s = (lax.dot_general(y, y, (((1,), (1,)), ((), ())),
                             preferred_element_type=jnp.float32) > 0.0)
    dp_s = alpha * lax.dot_general(u_t, u_t, (((1,), (1,)), ((), ())),
                                   precision=_HIGHEST,
                                   preferred_element_type=jnp.float32)
    el_s = (jnp.log(1.0 + jnp.exp(-jnp.abs(dp_s))) + jnp.maximum(dp_s, 0.0)
            - jnp.where(sim_s, dp_s, 0.0))
    sim_sf = sim_s.astype(jnp.float32)
    pos_ref[...] += jnp.sum(el_s * sim_sf, axis=1, keepdims=True)
    tot_ref[...] += jnp.sum(el_s, axis=1, keepdims=True)
    s1_ref[...] += jnp.sum(sim_sf, axis=1, keepdims=True)

  # ---------------- streamed bank tile: pairwise terms ---------------------
  u_t = ut_ref[...]                             # [B, bit]
  y = y_ref[...]                                # [B, C]
  U_tile = U_ref[...]                           # [tile_n, bit]
  Y_tile = Y_ref[...]                           # [tile_n, C]

  # column validity: inside the bank AND not one of the just-updated rows
  col = i * tile_n + lax.broadcasted_iota(jnp.int32, (1, tile_n), 1)
  valid = col < num_train
  for b in range(batch):
    valid = jnp.logical_and(valid, col != ind_ref[b])

  # similarity: {0,1} labels -> exact even at default MXU precision
  sim_t = (lax.dot_general(y, Y_tile, (((1,), (1,)), ((), ())),
                           preferred_element_type=jnp.float32) > 0.0)
  dp = alpha * lax.dot_general(u_t, U_tile, (((1,), (1,)), ((), ())),
                               precision=_HIGHEST,
                               preferred_element_type=jnp.float32)
  el = (jnp.log(1.0 + jnp.exp(-jnp.abs(dp))) + jnp.maximum(dp, 0.0)
        - jnp.where(sim_t, dp, 0.0))

  sim_f = jnp.where(jnp.logical_and(valid, sim_t), 1.0, 0.0)   # [B, tile_n]
  el_v = jnp.where(valid, el, 0.0)
  pos_ref[...] += jnp.sum(el_v * sim_f, axis=1, keepdims=True)
  tot_ref[...] += jnp.sum(el_v, axis=1, keepdims=True)
  s1_ref[...] += jnp.sum(sim_f, axis=1, keepdims=True)

  # ---------------- finalize the scalar loss on the last step --------------
  @pl.when(i == nt - 1)
  def _():
    S = float(batch * num_train)
    S1 = jnp.sum(s1_ref[...])
    S0 = S - S1
    pos = jnp.sum(pos_ref[...])
    neg = jnp.sum(tot_ref[...]) - pos
    # loss = (pos*S/S1 + neg*S/S0) / S, with the torch masked-assign guards
    loss = (jnp.where(S1 > 0.0, pos / S1, 0.0)
            + jnp.where(S0 > 0.0, neg / S0, 0.0))
    loss_ref[0, 0] = loss


def hashnet_loss(u, y, ind, U, Y, *, alpha, scale=1.0, tile_n=1024):
  """Functional HashNetLoss.forward: returns (loss, U_new, Y_new).

  The bank inputs are HBM-aliased onto the bank outputs; only the B touched
  rows are written by the kernel.  Callers that keep the banks as training
  state should donate U / Y to avoid an XLA defensive copy.
  """
  # TODO(synk): config['device'] placement and the in-place mutation of
  # self.U / self.Y have no direct Pallas equivalent; banks are returned
  # functionally (aliased in HBM).
  u = jnp.asarray(u, jnp.float32)
  y = jnp.asarray(y, jnp.float32)
  U = jnp.asarray(U, jnp.float32)
  Y = jnp.asarray(Y, jnp.float32)
  ind = jnp.asarray(ind, jnp.int32).reshape(-1)

  batch, bit = u.shape
  num_train, n_class = Y.shape
  assert U.shape == (num_train, bit) and y.shape == (batch, n_class)
  assert ind.shape == (batch,)

  tile_n = int(min(tile_n, num_train))
  if tile_n != num_train:
    tile_n -= tile_n % 8
  assert tile_n > 0 and (tile_n == num_train or tile_n % 8 == 0)
  nt = pl.cdiv(num_train, tile_n)

  kernel = functools.partial(
      _hashnet_loss_kernel, alpha=float(alpha), scale=float(scale),
      num_train=int(num_train), batch=int(batch), tile_n=int(tile_n))

  grid_spec = pltpu.PrefetchScalarGridSpec(
      num_scalar_prefetch=1,
      grid=(nt,),
      in_specs=[
          pl.BlockSpec((batch, bit), lambda i, ind: (0, 0)),       # u (resident)
          pl.BlockSpec((batch, n_class), lambda i, ind: (0, 0)),   # y (resident)
          pl.BlockSpec((tile_n, bit), lambda i, ind: (i, 0)),      # U tile
          pl.BlockSpec((tile_n, n_class), lambda i, ind: (i, 0)),  # Y tile
      ],
      out_specs=(
          pl.BlockSpec(memory_space=pltpu.MemorySpace.SMEM),  # scalar loss
          pl.BlockSpec(memory_space=pl.ANY),                  # U bank (HBM)
          pl.BlockSpec(memory_space=pl.ANY),                  # Y bank (HBM)
      ),
      scratch_shapes=[
          pltpu.VMEM((batch, bit), jnp.float32),      # u_t = tanh(scale*u)
          pltpu.VMEM((batch, n_class), jnp.float32),  # y staging for DMA
          pltpu.VMEM((batch, 1), jnp.float32),        # pos_sum accumulator
          pltpu.VMEM((batch, 1), jnp.float32),        # total_sum accumulator
          pltpu.VMEM((batch, 1), jnp.float32),        # S1 accumulator
          pltpu.SemaphoreType.DMA((2, batch)),        # scatter DMA sems
      ],
  )

  loss, U_new, Y_new = pl.pallas_call(
      kernel,
      out_shape=(jax.ShapeDtypeStruct((1, 1), jnp.float32),
                 jax.ShapeDtypeStruct((num_train, bit), jnp.float32),
                 jax.ShapeDtypeStruct((num_train, n_class), jnp.float32)),
      grid_spec=grid_spec,
      # in-place semantics of self.U / self.Y: bank inputs alias bank outputs.
      # call args are (ind, u, y, U, Y) -> U is input 3, Y is input 4.
      input_output_aliases={3: 1, 4: 2},
      compiler_params=pltpu.CompilerParams(
          dimension_semantics=("arbitrary",),
          vmem_limit_bytes=32 * 1024 * 1024),
  )(ind, u, y, U, Y)
  return loss[0, 0], U_new, Y_new


def hashnet_loss_reference(u, y, ind, U, Y, *, alpha, scale=1.0):
  """Pure-JAX replica of the PyTorch forward, for correctness checking."""
  u = jnp.asarray(u, jnp.float32)
  y = jnp.asarray(y, jnp.float32)
  u_t = jnp.tanh(scale * u)
  U_new = U.at[ind].set(u_t)
  Y_new = Y.at[ind].set(y)
  sim = (jnp.matmul(y, Y_new.T, precision=_HIGHEST) > 0).astype(jnp.float32)
  dp = alpha * jnp.matmul(u_t, U_new.T, precision=_HIGHEST)
  exp_loss = (jnp.log(1.0 + jnp.exp(-jnp.abs(dp)))
              + jnp.maximum(dp, 0.0) - sim * dp)
  S1 = jnp.sum(sim)
  S = float(sim.size)
  S0 = S - S1
  w = jnp.where(sim > 0, S / S1, S / S0)
  loss = jnp.sum(exp_loss * w) / S
  return loss, U_new, Y_new


if __name__ == "__main__":
  key = jax.random.PRNGKey(0)
  k1, k2, k3, k4, k5 = jax.random.split(key, 5)

  batch, bit, n_class, num_train = 8, 64, 16, 512
  alpha = 0.1   # config['alpha']

  # minibatch: raw hash codes u, one-hot labels y, dataset indices ind (unique)
  u = jax.random.normal(k1, (batch, bit), dtype=jnp.float32)
  classes = jax.random.randint(k2, (batch,), 0, n_class)
  y = jax.nn.one_hot(classes, n_class, dtype=jnp.float32)
  ind = jax.random.permutation(k3, num_train)[:batch].astype(jnp.int32)

  # "previous training state" of the U / Y memory banks
  U_state = jnp.tanh(jax.random.normal(k4, (num_train, bit), dtype=jnp.float32))
  Y_state = jax.nn.one_hot(
      jax.random.randint(k5, (num_train,), 0, n_class), n_class,
      dtype=jnp.float32)

  ref_loss, ref_U, ref_Y = hashnet_loss_reference(
      u, y, ind, U_state, Y_state, alpha=alpha)
  ref_loss, ref_U, ref_Y = jax.block_until_ready((ref_loss, ref_U, ref_Y))

  # tile_n=128 -> grid of 4 tiles, exercising the streamed accumulation path.
  loss, U_new, Y_new = hashnet_loss(
      u, y, ind, U_state, Y_state, alpha=alpha, tile_n=128)
  loss, U_new, Y_new = jax.block_until_ready((loss, U_new, Y_new))

  np.testing.assert_allclose(np.asarray(loss), np.asarray(ref_loss),
                             rtol=1e-3, atol=1e-5)
  np.testing.assert_allclose(np.asarray(U_new), np.asarray(ref_U),
                             rtol=1e-4, atol=1e-6)
  np.testing.assert_allclose(np.asarray(Y_new), np.asarray(ref_Y),
                             rtol=1e-5, atol=1e-6)
  assert np.isfinite(np.asarray(loss))
  print("KERNEL_OK")
</pallas_src>

<mosaic_0001>
module attributes {stable_mosaic.version = 11 : i64} {
  func.func @_hashnet_loss_kernel(%arg0: i32, %arg1: memref<8xi32, #tpu.memory_space<smem>>, %arg2: memref<8x64xf32, #tpu.memory_space<vmem>>, %arg3: memref<8x16xf32, #tpu.memory_space<vmem>>, %arg4: memref<128x64xf32, #tpu.memory_space<vmem>>, %arg5: memref<128x16xf32, #tpu.memory_space<vmem>>, %arg6: memref<1x1xf32, #tpu.memory_space<smem>>, %arg7: memref<512x64xf32, #tpu.memory_space<any>>, %arg8: memref<512x16xf32, #tpu.memory_space<any>>, %arg9: memref<8x64xf32, #tpu.memory_space<vmem>>, %arg10: memref<8x16xf32, #tpu.memory_space<vmem>>, %arg11: memref<8x1xf32, #tpu.memory_space<vmem>>, %arg12: memref<8x1xf32, #tpu.memory_space<vmem>>, %arg13: memref<8x1xf32, #tpu.memory_space<vmem>>, %arg14: memref<2x8x!tpu.dma_semaphore, #tpu.memory_space<semaphore_mem>>) attributes {dimension_semantics = [#tpu.dimension_semantics<arbitrary>], iteration_bounds = array<i64: 4>, scalar_prefetch = 1 : i64, scratch_operands = 6 : i64, tpu.core_type = #tpu.core_type<tc>, window_params = [{pipeline_mode = #tpu.pipeline_mode<synchronous>, transform_indices = @transform_0, window_bounds = array<i64: 8, 64>}, {pipeline_mode = #tpu.pipeline_mode<synchronous>, transform_indices = @transform_1, window_bounds = array<i64: 8, 16>}, {transform_indices = @transform_2, window_bounds = array<i64: 128, 64>}, {transform_indices = @transform_3, window_bounds = array<i64: 128, 16>}, {transform_indices = @transform_4, window_bounds = array<i64: 1, 1>}, {}, {}]} {
    %c0_i32 = arith.constant 0 : i32
    %0 = arith.cmpi eq, %arg0, %c0_i32 : i32
    %1 = arith.extui %0 : i1 to i32
    %c0_i32_0 = arith.constant 0 : i32
    %2 = arith.cmpi ne, %1, %c0_i32_0 : i32
    scf.if %2 {
      %c0_35 = arith.constant 0 : index
      %c0_36 = arith.constant 0 : index
      %92 = vector.load %arg2[%c0_35, %c0_36] : memref<8x64xf32, #tpu.memory_space<vmem>>, vector<8x64xf32>
      %93 = math.tanh %92 : vector<8x64xf32>
      %c0_37 = arith.constant 0 : index
      %c0_38 = arith.constant 0 : index
      %94 = vector.load %arg9[%c0_37, %c0_38] : memref<8x64xf32, #tpu.memory_space<vmem>>, vector<8x64xf32>
      tpu.vector_store %arg9[%c0_37, %c0_38], %93 {strides = array<i32>} : memref<8x64xf32, #tpu.memory_space<vmem>>, vector<8x64xf32>,
      %c0_39 = arith.constant 0 : index
      %c0_40 = arith.constant 0 : index
      %95 = vector.load %arg3[%c0_39, %c0_40] : memref<8x16xf32, #tpu.memory_space<vmem>>, vector<8x16xf32>
      %c0_41 = arith.constant 0 : index
      %c0_42 = arith.constant 0 : index
      %96 = vector.load %arg10[%c0_41, %c0_42] : memref<8x16xf32, #tpu.memory_space<vmem>>, vector<8x16xf32>
      tpu.vector_store %arg10[%c0_41, %c0_42], %95 {strides = array<i32>} : memref<8x16xf32, #tpu.memory_space<vmem>>, vector<8x16xf32>,
      %cst_43 = arith.constant 0.000000e+00 : f32
      %97 = vector.broadcast %cst_43 : f32 to vector<8x1xf32>
      %c0_44 = arith.constant 0 : index
      %c0_45 = arith.constant 0 : index
      %98 = vector.load %arg11[%c0_44, %c0_45] : memref<8x1xf32, #tpu.memory_space<vmem>>, vector<8x1xf32>
      tpu.vector_store %arg11[%c0_44, %c0_45], %97 {strides = array<i32>} : memref<8x1xf32, #tpu.memory_space<vmem>>, vector<8x1xf32>,
      %cst_46 = arith.constant 0.000000e+00 : f32
      %99 = vector.broadcast %cst_46 : f32 to vector<8x1xf32>
      %c0_47 = arith.constant 0 : index
      %c0_48 = arith.constant 0 : index
      %100 = vector.load %arg12[%c0_47, %c0_48] : memref<8x1xf32, #tpu.memory_space<vmem>>, vector<8x1xf32>
      tpu.vector_store %arg12[%c0_47, %c0_48], %99 {strides = array<i32>} : memref<8x1xf32, #tpu.memory_space<vmem>>, vector<8x1xf32>,
      %cst_49 = arith.constant 0.000000e+00 : f32
      %101 = vector.broadcast %cst_49 : f32 to vector<8x1xf32>
      %c0_50 = arith.constant 0 : index
      %c0_51 = arith.constant 0 : index
      %102 = vector.load %arg13[%c0_50, %c0_51] : memref<8x1xf32, #tpu.memory_space<vmem>>, vector<8x1xf32>
      tpu.vector_store %arg13[%c0_50, %c0_51], %101 {strides = array<i32>} : memref<8x1xf32, #tpu.memory_space<vmem>>, vector<8x1xf32>,
      %c0_52 = arith.constant 0 : index
      %103 = memref.load %arg1[%c0_52] : memref<8xi32, #tpu.memory_space<smem>>
      %c0_i32_53 = arith.constant 0 : i32
      %c0_i32_54 = arith.constant 0 : i32
      %c0_i32_55 = arith.constant 0 : i32
      %c0_i32_56 = arith.constant 0 : i32
      %104 = tpu.memref_slice %arg9[%c0_i32_55, %c0_i32_56] : memref<8x64xf32, #tpu.memory_space<vmem>> -> memref<1x64xf32, #tpu.memory_space<vmem>>
      %c0_i32_57 = arith.constant 0 : i32
      %105 = tpu.memref_slice %arg7[%103, %c0_i32_57] : memref<512x64xf32, #tpu.memory_space<any>> -> memref<1x64xf32, #tpu.memory_space<any>>
      %106 = tpu.memref_slice %arg14[%c0_i32_53, %c0_i32_54] : memref<2x8x!tpu.dma_semaphore, #tpu.memory_space<semaphore_mem>> -> memref<1x1x!tpu.dma_semaphore, #tpu.memory_space<semaphore_mem>>
      %107 = tpu.memref_squeeze %106 : memref<1x1x!tpu.dma_semaphore, #tpu.memory_space<semaphore_mem>> -> memref<!tpu.dma_semaphore, #tpu.memory_space<semaphore_mem>>
      tpu.enqueue_dma source(%104 : memref<1x64xf32, #tpu.memory_space<vmem>>) target(%105 : memref<1x64xf32, #tpu.memory_space<any>>) target_semaphore(%107 : memref<!tpu.dma_semaphore, #tpu.memory_space<semaphore_mem>>)
      %c1_i32 = arith.constant 1 : i32
      %c0_i32_58 = arith.constant 0 : i32
      %c0_i32_59 = arith.constant 0 : i32
      %c0_i32_60 = arith.constant 0 : i32
      %108 = tpu.memref_slice %arg10[%c0_i32_59, %c0_i32_60] : memref<8x16xf32, #tpu.memory_space<vmem>> -> memref<1x16xf32, #tpu.memory_space<vmem>>
      %c0_i32_61 = arith.constant 0 : i32
      %109 = tpu.memref_slice %arg8[%103, %c0_i32_61] : memref<512x16xf32, #tpu.memory_space<any>> -> memref<1x16xf32, #tpu.memory_space<any>>
      %110 = tpu.memref_slice %arg14[%c1_i32, %c0_i32_58] : memref<2x8x!tpu.dma_semaphore, #tpu.memory_space<semaphore_mem>> -> memref<1x1x!tpu.dma_semaphore, #tpu.memory_space<semaphore_mem>>
      %111 = tpu.memref_squeeze %110 : memref<1x1x!tpu.dma_semaphore, #tpu.memory_space<semaphore_mem>> -> memref<!tpu.dma_semaphore, #tpu.memory_space<semaphore_mem>>
      tpu.enqueue_dma source(%108 : memref<1x16xf32, #tpu.memory_space<vmem>>) target(%109 : memref<1x16xf32, #tpu.memory_space<any>>) target_semaphore(%111 : memref<!tpu.dma_semaphore, #tpu.memory_space<semaphore_mem>>)
      %c1_62 = arith.constant 1 : index
      %112 = memref.load %arg1[%c1_62] : memref<8xi32, #tpu.memory_space<smem>>
      %c0_i32_63 = arith.constant 0 : i32
      %c1_i32_64 = arith.constant 1 : i32
      %c1_i32_65 = arith.constant 1 : i32
      %c0_i32_66 = arith.constant 0 : i32
      %113 = tpu.memref_slice %arg9[%c1_i32_65, %c0_i32_66] : memref<8x64xf32, #tpu.memory_space<vmem>> -> memref<1x64xf32, #tpu.memory_space<vmem>>
      %c0_i32_67 = arith.constant 0 : i32
      %114 = tpu.memref_slice %arg7[%112, %c0_i32_67] : memref<512x64xf32, #tpu.memory_space<any>> -> memref<1x64xf32, #tpu.memory_space<any>>
      %115 = tpu.memref_slice %arg14[%c0_i32_63, %c1_i32_64] : memref<2x8x!tpu.dma_semaphore, #tpu.memory_space<semaphore_mem>> -> memref<1x1x!tpu.dma_semaphore, #tpu.memory_space<semaphore_mem>>
      %116 = tpu.memref_squeeze %115 : memref<1x1x!tpu.dma_semaphore, #tpu.memory_space<semaphore_mem>> -> memref<!tpu.dma_semaphore, #tpu.memory_space<semaphore_mem>>
      tpu.enqueue_dma source(%113 : memref<1x64xf32, #tpu.memory_space<vmem>>) target(%114 : memref<1x64xf32, #tpu.memory_space<any>>) target_semaphore(%116 : memref<!tpu.dma_semaphore, #tpu.memory_space<semaphore_mem>>)
      %c1_i32_68 = arith.constant 1 : i32
      %c1_i32_69 = arith.constant 1 : i32
      %c1_i32_70 = arith.constant 1 : i32
      %c0_i32_71 = arith.constant 0 : i32
      %117 = tpu.memref_slice %arg10[%c1_i32_70, %c0_i32_71] : memref<8x16xf32, #tpu.memory_space<vmem>> -> memref<1x16xf32, #tpu.memory_space<vmem>>
      %c0_i32_72 = arith.constant 0 : i32
      %118 = tpu.memref_slice %arg8[%112, %c0_i32_72] : memref<512x16xf32, #tpu.memory_space<any>> -> memref<1x16xf32, #tpu.memory_space<any>>
      %119 = tpu.memref_slice %arg14[%c1_i32_68, %c1_i32_69] : memref<2x8x!tpu.dma_semaphore, #tpu.memory_space<semaphore_mem>> -> memref<1x1x!tpu.dma_semaphore, #tpu.memory_space<semaphore_mem>>
      %120 = tpu.memref_squeeze %119 : memref<1x1x!tpu.dma_semaphore, #tpu.memory_space<semaphore_mem>> -> memref<!tpu.dma_semaphore, #tpu.memory_space<semaphore_mem>>
      tpu.enqueue_dma source(%117 : memref<1x16xf32, #tpu.memory_space<vmem>>) target(%118 : memref<1x16xf32, #tpu.memory_space<any>>) target_semaphore(%120 : memref<!tpu.dma_semaphore, #tpu.memory_space<semaphore_mem>>)
      %c2_73 = arith.constant 2 : index
      %121 = memref.load %arg1[%c2_73] : memref<8xi32, #tpu.memory_space<smem>>
      %c0_i32_74 = arith.constant 0 : i32
      %c2_i32 = arith.constant 2 : i32
      %c2_i32_75 = arith.constant 2 : i32
      %c0_i32_76 = arith.constant 0 : i32
      %122 = tpu.memref_slice %arg9[%c2_i32_75, %c0_i32_76] : memref<8x64xf32, #tpu.memory_space<vmem>> -> memref<1x64xf32, #tpu.memory_space<vmem>>
      %c0_i32_77 = arith.constant 0 : i32
      %123 = tpu.memref_slice %arg7[%121, %c0_i32_77] : memref<512x64xf32, #tpu.memory_space<any>> -> memref<1x64xf32, #tpu.memory_space<any>>
      %124 = tpu.memref_slice %arg14[%c0_i32_74, %c2_i32] : memref<2x8x!tpu.dma_semaphore, #tpu.memory_space<semaphore_mem>> -> memref<1x1x!tpu.dma_semaphore, #tpu.memory_space<semaphore_mem>>
      %125 = tpu.memref_squeeze %124 : memref<1x1x!tpu.dma_semaphore, #tpu.memory_space<semaphore_mem>> -> memref<!tpu.dma_semaphore, #tpu.memory_space<semaphore_mem>>
      tpu.enqueue_dma source(%122 : memref<1x64xf32, #tpu.memory_space<vmem>>) target(%123 : memref<1x64xf32, #tpu.memory_space<any>>) target_semaphore(%125 : memref<!tpu.dma_semaphore, #tpu.memory_space<semaphore_mem>>)
      %c1_i32_78 = arith.constant 1 : i32
      %c2_i32_79 = arith.constant 2 : i32
      %c2_i32_80 = arith.constant 2 : i32
      %c0_i32_81 = arith.constant 0 : i32
      %126 = tpu.memref_slice %arg10[%c2_i32_80, %c0_i32_81] : memref<8x16xf32, #tpu.memory_space<vmem>> -> memref<1x16xf32, #tpu.memory_space<vmem>>
      %c0_i32_82 = arith.constant 0 : i32
      %127 = tpu.memref_slice %arg8[%121, %c0_i32_82] : memref<512x16xf32, #tpu.memory_space<any>> -> memref<1x16xf32, #tpu.memory_space<any>>
      %128 = tpu.memref_slice %arg14[%c1_i32_78, %c2_i32_79] : memref<2x8x!tpu.dma_semaphore, #tpu.memory_space<semaphore_mem>> -> memref<1x1x!tpu.dma_semaphore, #tpu.memory_space<semaphore_mem>>
      %129 = tpu.memref_squeeze %128 : memref<1x1x!tpu.dma_semaphore, #tpu.memory_space<semaphore_mem>> -> memref<!tpu.dma_semaphore, #tpu.memory_space<semaphore_mem>>
      tpu.enqueue_dma source(%126 : memref<1x16xf32, #tpu.memory_space<vmem>>) target(%127 : memref<1x16xf32, #tpu.memory_space<any>>) target_semaphore(%129 : memref<!tpu.dma_semaphore, #tpu.memory_space<semaphore_mem>>)
      %c3_83 = arith.constant 3 : index
      %130 = memref.load %arg1[%c3_83] : memref<8xi32, #tpu.memory_space<smem>>
      %c0_i32_84 = arith.constant 0 : i32
      %c3_i32_85 = arith.constant 3 : i32
      %c3_i32_86 = arith.constant 3 : i32
      %c0_i32_87 = arith.constant 0 : i32
      %131 = tpu.memref_slice %arg9[%c3_i32_86, %c0_i32_87] : memref<8x64xf32, #tpu.memory_space<vmem>> -> memref<1x64xf32, #tpu.memory_space<vmem>>
      %c0_i32_88 = arith.constant 0 : i32
      %132 = tpu.memref_slice %arg7[%130, %c0_i32_88] : memref<512x64xf32, #tpu.memory_space<any>> -> memref<1x64xf32, #tpu.memory_space<any>>
      %133 = tpu.memref_slice %arg14[%c0_i32_84, %c3_i32_85] : memref<2x8x!tpu.dma_semaphore, #tpu.memory_space<semaphore_mem>> -> memref<1x1x!tpu.dma_semaphore, #tpu.memory_space<semaphore_mem>>
      %134 = tpu.memref_squeeze %133 : memref<1x1x!tpu.dma_semaphore, #tpu.memory_space<semaphore_mem>> -> memref<!tpu.dma_semaphore, #tpu.memory_space<semaphore_mem>>
      tpu.enqueue_dma source(%131 : memref<1x64xf32, #tpu.memory_space<vmem>>) target(%132 : memref<1x64xf32, #tpu.memory_space<any>>) target_semaphore(%134 : memref<!tpu.dma_semaphore, #tpu.memory_space<semaphore_mem>>)
      %c1_i32_89 = arith.constant 1 : i32
      %c3_i32_90 = arith.constant 3 : i32
      %c3_i32_91 = arith.constant 3 : i32
      %c0_i32_92 = arith.constant 0 : i32
      %135 = tpu.memref_slice %arg10[%c3_i32_91, %c0_i32_92] : memref<8x16xf32, #tpu.memory_space<vmem>> -> memref<1x16xf32, #tpu.memory_space<vmem>>
      %c0_i32_93 = arith.constant 0 : i32
      %136 = tpu.memref_slice %arg8[%130, %c0_i32_93] : memref<512x16xf32, #tpu.memory_space<any>> -> memref<1x16xf32, #tpu.memory_space<any>>
      %137 = tpu.memref_slice %arg14[%c1_i32_89, %c3_i32_90] : memref<2x8x!tpu.dma_semaphore, #tpu.memory_space<semaphore_mem>> -> memref<1x1x!tpu.dma_semaphore, #tpu.memory_space<semaphore_mem>>
      %138 = tpu.memref_squeeze %137 : memref<1x1x!tpu.dma_semaphore, #tpu.memory_space<semaphore_mem>> -> memref<!tpu.dma_semaphore, #tpu.memory_space<semaphore_mem>>
      tpu.enqueue_dma source(%135 : memref<1x16xf32, #tpu.memory_space<vmem>>) target(%136 : memref<1x16xf32, #tpu.memory_space<any>>) target_semaphore(%138 : memref<!tpu.dma_semaphore, #tpu.memory_space<semaphore_mem>>)
      %c4_94 = arith.constant 4 : index
      %139 = memref.load %arg1[%c4_94] : memref<8xi32, #tpu.memory_space<smem>>
      %c0_i32_95 = arith.constant 0 : i32
      %c4_i32 = arith.constant 4 : i32
      %c4_i32_96 = arith.constant 4 : i32
      %c0_i32_97 = arith.constant 0 : i32
      %140 = tpu.memref_slice %arg9[%c4_i32_96, %c0_i32_97] : memref<8x64xf32, #tpu.memory_space<vmem>> -> memref<1x64xf32, #tpu.memory_space<vmem>>
      %c0_i32_98 = arith.constant 0 : i32
      %141 = tpu.memref_slice %arg7[%139, %c0_i32_98] : memref<512x64xf32, #tpu.memory_space<any>> -> memref<1x64xf32, #tpu.memory_space<any>>
      %142 = tpu.memref_slice %arg14[%c0_i32_95, %c4_i32] : memref<2x8x!tpu.dma_semaphore, #tpu.memory_space<semaphore_mem>> -> memref<1x1x!tpu.dma_semaphore, #tpu.memory_space<semaphore_mem>>
      %143 = tpu.memref_squeeze %142 : memref<1x1x!tpu.dma_semaphore, #tpu.memory_space<semaphore_mem>> -> memref<!tpu.dma_semaphore, #tpu.memory_space<semaphore_mem>>
      tpu.enqueue_dma source(%140 : memref<1x64xf32, #tpu.memory_space<vmem>>) target(%141 : memref<1x64xf32, #tpu.memory_space<any>>) target_semaphore(%143 : memref<!tpu.dma_semaphore, #tpu.memory_space<semaphore_mem>>)
      %c1_i32_99 = arith.constant 1 : i32
      %c4_i32_100 = arith.constant 4 : i32
      %c4_i32_101 = arith.constant 4 : i32
      %c0_i32_102 = arith.constant 0 : i32
      %144 = tpu.memref_slice %arg10[%c4_i32_101, %c0_i32_102] : memref<8x16xf32, #tpu.memory_space<vmem>> -> memref<1x16xf32, #tpu.memory_space<vmem>>
      %c0_i32_103 = arith.constant 0 : i32
      %145 = tpu.memref_slice %arg8[%139, %c0_i32_103] : memref<512x16xf32, #tpu.memory_space<any>> -> memref<1x16xf32, #tpu.memory_space<any>>
      %146 = tpu.memref_slice %arg14[%c1_i32_99, %c4_i32_100] : memref<2x8x!tpu.dma_semaphore, #tpu.memory_space<semaphore_mem>> -> memref<1x1x!tpu.dma_semaphore, #tpu.memory_space<semaphore_mem>>
      %147 = tpu.memref_squeeze %146 : memref<1x1x!tpu.dma_semaphore, #tpu.memory_space<semaphore_mem>> -> memref<!tpu.dma_semaphore, #tpu.memory_space<semaphore_mem>>
      tpu.enqueue_dma source(%144 : memref<1x16xf32, #tpu.memory_space<vmem>>) target(%145 : memref<1x16xf32, #tpu.memory_space<any>>) target_semaphore(%147 : memref<!tpu.dma_semaphore, #tpu.memory_space<semaphore_mem>>)
      %c5_104 = arith.constant 5 : index
      %148 = memref.load %arg1[%c5_104] : memref<8xi32, #tpu.memory_space<smem>>
      %c0_i32_105 = arith.constant 0 : i32
      %c5_i32 = arith.constant 5 : i32
      %c5_i32_106 = arith.constant 5 : i32
      %c0_i32_107 = arith.constant 0 : i32
      %149 = tpu.memref_slice %arg9[%c5_i32_106, %c0_i32_107] : memref<8x64xf32, #tpu.memory_space<vmem>> -> memref<1x64xf32, #tpu.memory_space<vmem>>
      %c0_i32_108 = arith.constant 0 : i32
      %150 = tpu.memref_slice %arg7[%148, %c0_i32_108] : memref<512x64xf32, #tpu.memory_space<any>> -> memref<1x64xf32, #tpu.memory_space<any>>
      %151 = tpu.memref_slice %arg14[%c0_i32_105, %c5_i32] : memref<2x8x!tpu.dma_semaphore, #tpu.memory_space<semaphore_mem>> -> memref<1x1x!tpu.dma_semaphore, #tpu.memory_space<semaphore_mem>>
      %152 = tpu.memref_squeeze %151 : memref<1x1x!tpu.dma_semaphore, #tpu.memory_space<semaphore_mem>> -> memref<!tpu.dma_semaphore, #tpu.memory_space<semaphore_mem>>
      tpu.enqueue_dma source(%149 : memref<1x64xf32, #tpu.memory_space<vmem>>) target(%150 : memref<1x64xf32, #tpu.memory_space<any>>) target_semaphore(%152 : memref<!tpu.dma_semaphore, #tpu.memory_space<semaphore_mem>>)
      %c1_i32_109 = arith.constant 1 : i32
      %c5_i32_110 = arith.constant 5 : i32
      %c5_i32_111 = arith.constant 5 : i32
      %c0_i32_112 = arith.constant 0 : i32
      %153 = tpu.memref_slice %arg10[%c5_i32_111, %c0_i32_112] : memref<8x16xf32, #tpu.memory_space<vmem>> -> memref<1x16xf32, #tpu.memory_space<vmem>>
      %c0_i32_113 = arith.constant 0 : i32
      %154 = tpu.memref_slice %arg8[%148, %c0_i32_113] : memref<512x16xf32, #tpu.memory_space<any>> -> memref<1x16xf32, #tpu.memory_space<any>>
      %155 = tpu.memref_slice %arg14[%c1_i32_109, %c5_i32_110] : memref<2x8x!tpu.dma_semaphore, #tpu.memory_space<semaphore_mem>> -> memref<1x1x!tpu.dma_semaphore, #tpu.memory_space<semaphore_mem>>
      %156 = tpu.memref_squeeze %155 : memref<1x1x!tpu.dma_semaphore, #tpu.memory_space<semaphore_mem>> -> memref<!tpu.dma_semaphore, #tpu.memory_space<semaphore_mem>>
      tpu.enqueue_dma source(%153 : memref<1x16xf32, #tpu.memory_space<vmem>>) target(%154 : memref<1x16xf32, #tpu.memory_space<any>>) target_semaphore(%156 : memref<!tpu.dma_semaphore, #tpu.memory_space<semaphore_mem>>)
      %c6_114 = arith.constant 6 : index
      %157 = memref.load %arg1[%c6_114] : memref<8xi32, #tpu.memory_space<smem>>
      %c0_i32_115 = arith.constant 0 : i32
      %c6_i32 = arith.constant 6 : i32
      %c6_i32_116 = arith.constant 6 : i32
      %c0_i32_117 = arith.constant 0 : i32
      %158 = tpu.memref_slice %arg9[%c6_i32_116, %c0_i32_117] : memref<8x64xf32, #tpu.memory_space<vmem>> -> memref<1x64xf32, #tpu.memory_space<vmem>>
      %c0_i32_118 = arith.constant 0 : i32
      %159 = tpu.memref_slice %arg7[%157, %c0_i32_118] : memref<512x64xf32, #tpu.memory_space<any>> -> memref<1x64xf32, #tpu.memory_space<any>>
      %160 = tpu.memref_slice %arg14[%c0_i32_115, %c6_i32] : memref<2x8x!tpu.dma_semaphore, #tpu.memory_space<semaphore_mem>> -> memref<1x1x!tpu.dma_semaphore, #tpu.memory_space<semaphore_mem>>
      %161 = tpu.memref_squeeze %160 : memref<1x1x!tpu.dma_semaphore, #tpu.memory_space<semaphore_mem>> -> memref<!tpu.dma_semaphore, #tpu.memory_space<semaphore_mem>>
      tpu.enqueue_dma source(%158 : memref<1x64xf32, #tpu.memory_space<vmem>>) target(%159 : memref<1x64xf32, #tpu.memory_space<any>>) target_semaphore(%161 : memref<!tpu.dma_semaphore, #tpu.memory_space<semaphore_mem>>)
      %c1_i32_119 = arith.constant 1 : i32
      %c6_i32_120 = arith.constant 6 : i32
      %c6_i32_121 = arith.constant 6 : i32
      %c0_i32_122 = arith.constant 0 : i32
      %162 = tpu.memref_slice %arg10[%c6_i32_121, %c0_i32_122] : memref<8x16xf32, #tpu.memory_space<vmem>> -> memref<1x16xf32, #tpu.memory_space<vmem>>
      %c0_i32_123 = arith.constant 0 : i32
      %163 = tpu.memref_slice %arg8[%157, %c0_i32_123] : memref<512x16xf32, #tpu.memory_space<any>> -> memref<1x16xf32, #tpu.memory_space<any>>
      %164 = tpu.memref_slice %arg14[%c1_i32_119, %c6_i32_120] : memref<2x8x!tpu.dma_semaphore, #tpu.memory_space<semaphore_mem>> -> memref<1x1x!tpu.dma_semaphore, #tpu.memory_space<semaphore_mem>>
      %165 = tpu.memref_squeeze %164 : memref<1x1x!tpu.dma_semaphore, #tpu.memory_space<semaphore_mem>> -> memref<!tpu.dma_semaphore, #tpu.memory_space<semaphore_mem>>
      tpu.enqueue_dma source(%162 : memref<1x16xf32, #tpu.memory_space<vmem>>) target(%163 : memref<1x16xf32, #tpu.memory_space<any>>) target_semaphore(%165 : memref<!tpu.dma_semaphore, #tpu.memory_space<semaphore_mem>>)
      %c7_124 = arith.constant 7 : index
      %166 = memref.load %arg1[%c7_124] : memref<8xi32, #tpu.memory_space<smem>>
      %c0_i32_125 = arith.constant 0 : i32
      %c7_i32 = arith.constant 7 : i32
      %c7_i32_126 = arith.constant 7 : i32
      %c0_i32_127 = arith.constant 0 : i32
      %167 = tpu.memref_slice %arg9[%c7_i32_126, %c0_i32_127] : memref<8x64xf32, #tpu.memory_space<vmem>> -> memref<1x64xf32, #tpu.memory_space<vmem>>
      %c0_i32_128 = arith.constant 0 : i32
      %168 = tpu.memref_slice %arg7[%166, %c0_i32_128] : memref<512x64xf32, #tpu.memory_space<any>> -> memref<1x64xf32, #tpu.memory_space<any>>
      %169 = tpu.memref_slice %arg14[%c0_i32_125, %c7_i32] : memref<2x8x!tpu.dma_semaphore, #tpu.memory_space<semaphore_mem>> -> memref<1x1x!tpu.dma_semaphore, #tpu.memory_space<semaphore_mem>>
      %170 = tpu.memref_squeeze %169 : memref<1x1x!tpu.dma_semaphore, #tpu.memory_space<semaphore_mem>> -> memref<!tpu.dma_semaphore, #tpu.memory_space<semaphore_mem>>
      tpu.enqueue_dma source(%167 : memref<1x64xf32, #tpu.memory_space<vmem>>) target(%168 : memref<1x64xf32, #tpu.memory_space<any>>) target_semaphore(%170 : memref<!tpu.dma_semaphore, #tpu.memory_space<semaphore_mem>>)
      %c1_i32_129 = arith.constant 1 : i32
      %c7_i32_130 = arith.constant 7 : i32
      %c7_i32_131 = arith.constant 7 : i32
      %c0_i32_132 = arith.constant 0 : i32
      %171 = tpu.memref_slice %arg10[%c7_i32_131, %c0_i32_132] : memref<8x16xf32, #tpu.memory_space<vmem>> -> memref<1x16xf32, #tpu.memory_space<vmem>>
      %c0_i32_133 = arith.constant 0 : i32
      %172 = tpu.memref_slice %arg8[%166, %c0_i32_133] : memref<512x16xf32, #tpu.memory_space<any>> -> memref<1x16xf32, #tpu.memory_space<any>>
      %173 = tpu.memref_slice %arg14[%c1_i32_129, %c7_i32_130] : memref<2x8x!tpu.dma_semaphore, #tpu.memory_space<semaphore_mem>> -> memref<1x1x!tpu.dma_semaphore, #tpu.memory_space<semaphore_mem>>
      %174 = tpu.memref_squeeze %173 : memref<1x1x!tpu.dma_semaphore, #tpu.memory_space<semaphore_mem>> -> memref<!tpu.dma_semaphore, #tpu.memory_space<semaphore_mem>>
      tpu.enqueue_dma source(%171 : memref<1x16xf32, #tpu.memory_space<vmem>>) target(%172 : memref<1x16xf32, #tpu.memory_space<any>>) target_semaphore(%174 : memref<!tpu.dma_semaphore, #tpu.memory_space<semaphore_mem>>)
      %c0_134 = arith.constant 0 : index
      %175 = memref.load %arg1[%c0_134] : memref<8xi32, #tpu.memory_space<smem>>
      %c0_i32_135 = arith.constant 0 : i32
      %c0_i32_136 = arith.constant 0 : i32
      %c0_i32_137 = arith.constant 0 : i32
      %c0_i32_138 = arith.constant 0 : i32
      %176 = tpu.memref_slice %arg9[%c0_i32_137, %c0_i32_138] : memref<8x64xf32, #tpu.memory_space<vmem>> -> memref<1x64xf32, #tpu.memory_space<vmem>>
      %c0_i32_139 = arith.constant 0 : i32
      %177 = tpu.memref_slice %arg7[%175, %c0_i32_139] : memref<512x64xf32, #tpu.memory_space<any>> -> memref<1x64xf32, #tpu.memory_space<any>>
      %178 = tpu.memref_slice %arg14[%c0_i32_135, %c0_i32_136] : memref<2x8x!tpu.dma_semaphore, #tpu.memory_space<semaphore_mem>> -> memref<1x1x!tpu.dma_semaphore, #tpu.memory_space<semaphore_mem>>
      %179 = tpu.memref_squeeze %178 : memref<1x1x!tpu.dma_semaphore, #tpu.memory_space<semaphore_mem>> -> memref<!tpu.dma_semaphore, #tpu.memory_space<semaphore_mem>>
      tpu.wait_dma2 semaphore(%179 : memref<!tpu.dma_semaphore, #tpu.memory_space<semaphore_mem>>) src(%176 : memref<1x64xf32, #tpu.memory_space<vmem>>) dst(%177 : memref<1x64xf32, #tpu.memory_space<any>>)
      %c1_i32_140 = arith.constant 1 : i32
      %c0_i32_141 = arith.constant 0 : i32
      %c0_i32_142 = arith.constant 0 : i32
      %c0_i32_143 = arith.constant 0 : i32
      %180 = tpu.memref_slice %arg10[%c0_i32_142, %c0_i32_143] : memref<8x16xf32, #tpu.memory_space<vmem>> -> memref<1x16xf32, #tpu.memory_space<vmem>>
      %c0_i32_144 = arith.constant 0 : i32
      %181 = tpu.memref_slice %arg8[%175, %c0_i32_144] : memref<512x16xf32, #tpu.memory_space<any>> -> memref<1x16xf32, #tpu.memory_space<any>>
      %182 = tpu.memref_slice %arg14[%c1_i32_140, %c0_i32_141] : memref<2x8x!tpu.dma_semaphore, #tpu.memory_space<semaphore_mem>> -> memref<1x1x!tpu.dma_semaphore, #tpu.memory_space<semaphore_mem>>
      %183 = tpu.memref_squeeze %182 : memref<1x1x!tpu.dma_semaphore, #tpu.memory_space<semaphore_mem>> -> memref<!tpu.dma_semaphore, #tpu.memory_space<semaphore_mem>>
      tpu.wait_dma2 semaphore(%183 : memref<!tpu.dma_semaphore, #tpu.memory_space<semaphore_mem>>) src(%180 : memref<1x16xf32, #tpu.memory_space<vmem>>) dst(%181 : memref<1x16xf32, #tpu.memory_space<any>>)
      %c1_145 = arith.constant 1 : index
      %184 = memref.load %arg1[%c1_145] : memref<8xi32, #tpu.memory_space<smem>>
      %c0_i32_146 = arith.constant 0 : i32
      %c1_i32_147 = arith.constant 1 : i32
      %c1_i32_148 = arith.constant 1 : i32
      %c0_i32_149 = arith.constant 0 : i32
      %185 = tpu.memref_slice %arg9[%c1_i32_148, %c0_i32_149] : memref<8x64xf32, #tpu.memory_space<vmem>> -> memref<1x64xf32, #tpu.memory_space<vmem>>
      %c0_i32_150 = arith.constant 0 : i32
      %186 = tpu.memref_slice %arg7[%184, %c0_i32_150] : memref<512x64xf32, #tpu.memory_space<any>> -> memref<1x64xf32, #tpu.memory_space<any>>
      %187 = tpu.memref_slice %arg14[%c0_i32_146, %c1_i32_147] : memref<2x8x!tpu.dma_semaphore, #tpu.memory_space<semaphore_mem>> -> memref<1x1x!tpu.dma_semaphore, #tpu.memory_space<semaphore_mem>>
      %188 = tpu.memref_squeeze %187 : memref<1x1x!tpu.dma_semaphore, #tpu.memory_space<semaphore_mem>> -> memref<!tpu.dma_semaphore, #tpu.memory_space<semaphore_mem>>
      tpu.wait_dma2 semaphore(%188 : memref<!tpu.dma_semaphore, #tpu.memory_space<semaphore_mem>>) src(%185 : memref<1x64xf32, #tpu.memory_space<vmem>>) dst(%186 : memref<1x64xf32, #tpu.memory_space<any>>)
      %c1_i32_151 = arith.constant 1 : i32
      %c1_i32_152 = arith.constant 1 : i32
      %c1_i32_153 = arith.constant 1 : i32
      %c0_i32_154 = arith.constant 0 : i32
      %189 = tpu.memref_slice %arg10[%c1_i32_153, %c0_i32_154] : memref<8x16xf32, #tpu.memory_space<vmem>> -> memref<1x16xf32, #tpu.memory_space<vmem>>
      %c0_i32_155 = arith.constant 0 : i32
      %190 = tpu.memref_slice %arg8[%184, %c0_i32_155] : memref<512x16xf32, #tpu.memory_space<any>> -> memref<1x16xf32, #tpu.memory_space<any>>
      %191 = tpu.memref_slice %arg14[%c1_i32_151, %c1_i32_152] : memref<2x8x!tpu.dma_semaphore, #tpu.memory_space<semaphore_mem>> -> memref<1x1x!tpu.dma_semaphore, #tpu.memory_space<semaphore_mem>>
      %192 = tpu.memref_squeeze %191 : memref<1x1x!tpu.dma_semaphore, #tpu.memory_space<semaphore_mem>> -> memref<!tpu.dma_semaphore, #tpu.memory_space<semaphore_mem>>
      tpu.wait_dma2 semaphore(%192 : memref<!tpu.dma_semaphore, #tpu.memory_space<semaphore_mem>>) src(%189 : memref<1x16xf32, #tpu.memory_space<vmem>>) dst(%190 : memref<1x16xf32, #tpu.memory_space<any>>)
      %c2_156 = arith.constant 2 : index
      %193 = memref.load %arg1[%c2_156] : memref<8xi32, #tpu.memory_space<smem>>
      %c0_i32_157 = arith.constant 0 : i32
      %c2_i32_158 = arith.constant 2 : i32
      %c2_i32_159 = arith.constant 2 : i32
      %c0_i32_160 = arith.constant 0 : i32
      %194 = tpu.memref_slice %arg9[%c2_i32_159, %c0_i32_160] : memref<8x64xf32, #tpu.memory_space<vmem>> -> memref<1x64xf32, #tpu.memory_space<vmem>>
      %c0_i32_161 = arith.constant 0 : i32
      %195 = tpu.memref_slice %arg7[%193, %c0_i32_161] : memref<512x64xf32, #tpu.memory_space<any>> -> memref<1x64xf32, #tpu.memory_space<any>>
      %196 = tpu.memref_slice %arg14[%c0_i32_157, %c2_i32_158] : memref<2x8x!tpu.dma_semaphore, #tpu.memory_space<semaphore_mem>> -> memref<1x1x!tpu.dma_semaphore, #tpu.memory_space<semaphore_mem>>
      %197 = tpu.memref_squeeze %196 : memref<1x1x!tpu.dma_semaphore, #tpu.memory_space<semaphore_mem>> -> memref<!tpu.dma_semaphore, #tpu.memory_space<semaphore_mem>>
      tpu.wait_dma2 semaphore(%197 : memref<!tpu.dma_semaphore, #tpu.memory_space<semaphore_mem>>) src(%194 : memref<1x64xf32, #tpu.memory_space<vmem>>) dst(%195 : memref<1x64xf32, #tpu.memory_space<any>>)
      %c1_i32_162 = arith.constant 1 : i32
      %c2_i32_163 = arith.constant 2 : i32
      %c2_i32_164 = arith.constant 2 : i32
      %c0_i32_165 = arith.constant 0 : i32
      %198 = tpu.memref_slice %arg10[%c2_i32_164, %c0_i32_165] : memref<8x16xf32, #tpu.memory_space<vmem>> -> memref<1x16xf32, #tpu.memory_space<vmem>>
      %c0_i32_166 = arith.constant 0 : i32
      %199 = tpu.memref_slice %arg8[%193, %c0_i32_166] : memref<512x16xf32, #tpu.memory_space<any>> -> memref<1x16xf32, #tpu.memory_space<any>>
      %200 = tpu.memref_slice %arg14[%c1_i32_162, %c2_i32_163] : memref<2x8x!tpu.dma_semaphore, #tpu.memory_space<semaphore_mem>> -> memref<1x1x!tpu.dma_semaphore, #tpu.memory_space<semaphore_mem>>
      %201 = tpu.memref_squeeze %200 : memref<1x1x!tpu.dma_semaphore, #tpu.memory_space<semaphore_mem>> -> memref<!tpu.dma_semaphore, #tpu.memory_space<semaphore_mem>>
      tpu.wait_dma2 semaphore(%201 : memref<!tpu.dma_semaphore, #tpu.memory_space<semaphore_mem>>) src(%198 : memref<1x16xf32, #tpu.memory_space<vmem>>) dst(%199 : memref<1x16xf32, #tpu.memory_space<any>>)
      %c3_167 = arith.constant 3 : index
      %202 = memref.load %arg1[%c3_167] : memref<8xi32, #tpu.memory_space<smem>>
      %c0_i32_168 = arith.constant 0 : i32
      %c3_i32_169 = arith.constant 3 : i32
      %c3_i32_170 = arith.constant 3 : i32
      %c0_i32_171 = arith.constant 0 : i32
      %203 = tpu.memref_slice %arg9[%c3_i32_170, %c0_i32_171] : memref<8x64xf32, #tpu.memory_space<vmem>> -> memref<1x64xf32, #tpu.memory_space<vmem>>
      %c0_i32_172 = arith.constant 0 : i32
      %204 = tpu.memref_slice %arg7[%202, %c0_i32_172] : memref<512x64xf32, #tpu.memory_space<any>> -> memref<1x64xf32, #tpu.memory_space<any>>
      %205 = tpu.memref_slice %arg14[%c0_i32_168, %c3_i32_169] : memref<2x8x!tpu.dma_semaphore, #tpu.memory_space<semaphore_mem>> -> memref<1x1x!tpu.dma_semaphore, #tpu.memory_space<semaphore_mem>>
      %206 = tpu.memref_squeeze %205 : memref<1x1x!tpu.dma_semaphore, #tpu.memory_space<semaphore_mem>> -> memref<!tpu.dma_semaphore, #tpu.memory_space<semaphore_mem>>
      tpu.wait_dma2 semaphore(%206 : memref<!tpu.dma_semaphore, #tpu.memory_space<semaphore_mem>>) src(%203 : memref<1x64xf32, #tpu.memory_space<vmem>>) dst(%204 : memref<1x64xf32, #tpu.memory_space<any>>)
      %c1_i32_173 = arith.constant 1 : i32
      %c3_i32_174 = arith.constant 3 : i32
      %c3_i32_175 = arith.constant 3 : i32
      %c0_i32_176 = arith.constant 0 : i32
      %207 = tpu.memref_slice %arg10[%c3_i32_175, %c0_i32_176] : memref<8x16xf32, #tpu.memory_space<vmem>> -> memref<1x16xf32, #tpu.memory_space<vmem>>
      %c0_i32_177 = arith.constant 0 : i32
      %208 = tpu.memref_slice %arg8[%202, %c0_i32_177] : memref<512x16xf32, #tpu.memory_space<any>> -> memref<1x16xf32, #tpu.memory_space<any>>
      %209 = tpu.memref_slice %arg14[%c1_i32_173, %c3_i32_174] : memref<2x8x!tpu.dma_semaphore, #tpu.memory_space<semaphore_mem>> -> memref<1x1x!tpu.dma_semaphore, #tpu.memory_space<semaphore_mem>>
      %210 = tpu.memref_squeeze %209 : memref<1x1x!tpu.dma_semaphore, #tpu.memory_space<semaphore_mem>> -> memref<!tpu.dma_semaphore, #tpu.memory_space<semaphore_mem>>
      tpu.wait_dma2 semaphore(%210 : memref<!tpu.dma_semaphore, #tpu.memory_space<semaphore_mem>>) src(%207 : memref<1x16xf32, #tpu.memory_space<vmem>>) dst(%208 : memref<1x16xf32, #tpu.memory_space<any>>)
      %c4_178 = arith.constant 4 : index
      %211 = memref.load %arg1[%c4_178] : memref<8xi32, #tpu.memory_space<smem>>
      %c0_i32_179 = arith.constant 0 : i32
      %c4_i32_180 = arith.constant 4 : i32
      %c4_i32_181 = arith.constant 4 : i32
      %c0_i32_182 = arith.constant 0 : i32
      %212 = tpu.memref_slice %arg9[%c4_i32_181, %c0_i32_182] : memref<8x64xf32, #tpu.memory_space<vmem>> -> memref<1x64xf32, #tpu.memory_space<vmem>>
      %c0_i32_183 = arith.constant 0 : i32
      %213 = tpu.memref_slice %arg7[%211, %c0_i32_183] : memref<512x64xf32, #tpu.memory_space<any>> -> memref<1x64xf32, #tpu.memory_space<any>>
      %214 = tpu.memref_slice %arg14[%c0_i32_179, %c4_i32_180] : memref<2x8x!tpu.dma_semaphore, #tpu.memory_space<semaphore_mem>> -> memref<1x1x!tpu.dma_semaphore, #tpu.memory_space<semaphore_mem>>
      %215 = tpu.memref_squeeze %214 : memref<1x1x!tpu.dma_semaphore, #tpu.memory_space<semaphore_mem>> -> memref<!tpu.dma_semaphore, #tpu.memory_space<semaphore_mem>>
      tpu.wait_dma2 semaphore(%215 : memref<!tpu.dma_semaphore, #tpu.memory_space<semaphore_mem>>) src(%212 : memref<1x64xf32, #tpu.memory_space<vmem>>) dst(%213 : memref<1x64xf32, #tpu.memory_space<any>>)
      %c1_i32_184 = arith.constant 1 : i32
      %c4_i32_185 = arith.constant 4 : i32
      %c4_i32_186 = arith.constant 4 : i32
      %c0_i32_187 = arith.constant 0 : i32
      %216 = tpu.memref_slice %arg10[%c4_i32_186, %c0_i32_187] : memref<8x16xf32, #tpu.memory_space<vmem>> -> memref<1x16xf32, #tpu.memory_space<vmem>>
      %c0_i32_188 = arith.constant 0 : i32
      %217 = tpu.memref_slice %arg8[%211, %c0_i32_188] : memref<512x16xf32, #tpu.memory_space<any>> -> memref<1x16xf32, #tpu.memory_space<any>>
      %218 = tpu.memref_slice %arg14[%c1_i32_184, %c4_i32_185] : memref<2x8x!tpu.dma_semaphore, #tpu.memory_space<semaphore_mem>> -> memref<1x1x!tpu.dma_semaphore, #tpu.memory_space<semaphore_mem>>
      %219 = tpu.memref_squeeze %218 : memref<1x1x!tpu.dma_semaphore, #tpu.memory_space<semaphore_mem>> -> memref<!tpu.dma_semaphore, #tpu.memory_space<semaphore_mem>>
      tpu.wait_dma2 semaphore(%219 : memref<!tpu.dma_semaphore, #tpu.memory_space<semaphore_mem>>) src(%216 : memref<1x16xf32, #tpu.memory_space<vmem>>) dst(%217 : memref<1x16xf32, #tpu.memory_space<any>>)
      %c5_189 = arith.constant 5 : index
      %220 = memref.load %arg1[%c5_189] : memref<8xi32, #tpu.memory_space<smem>>
      %c0_i32_190 = arith.constant 0 : i32
      %c5_i32_191 = arith.constant 5 : i32
      %c5_i32_192 = arith.constant 5 : i32
      %c0_i32_193 = arith.constant 0 : i32
      %221 = tpu.memref_slice %arg9[%c5_i32_192, %c0_i32_193] : memref<8x64xf32, #tpu.memory_space<vmem>> -> memref<1x64xf32, #tpu.memory_space<vmem>>
      %c0_i32_194 = arith.constant 0 : i32
      %222 = tpu.memref_slice %arg7[%220, %c0_i32_194] : memref<512x64xf32, #tpu.memory_space<any>> -> memref<1x64xf32, #tpu.memory_space<any>>
      %223 = tpu.memref_slice %arg14[%c0_i32_190, %c5_i32_191] : memref<2x8x!tpu.dma_semaphore, #tpu.memory_space<semaphore_mem>> -> memref<1x1x!tpu.dma_semaphore, #tpu.memory_space<semaphore_mem>>
      %224 = tpu.memref_squeeze %223 : memref<1x1x!tpu.dma_semaphore, #tpu.memory_space<semaphore_mem>> -> memref<!tpu.dma_semaphore, #tpu.memory_space<semaphore_mem>>
      tpu.wait_dma2 semaphore(%224 : memref<!tpu.dma_semaphore, #tpu.memory_space<semaphore_mem>>) src(%221 : memref<1x64xf32, #tpu.memory_space<vmem>>) dst(%222 : memref<1x64xf32, #tpu.memory_space<any>>)
      %c1_i32_195 = arith.constant 1 : i32
      %c5_i32_196 = arith.constant 5 : i32
      %c5_i32_197 = arith.constant 5 : i32
      %c0_i32_198 = arith.constant 0 : i32
      %225 = tpu.memref_slice %arg10[%c5_i32_197, %c0_i32_198] : memref<8x16xf32, #tpu.memory_space<vmem>> -> memref<1x16xf32, #tpu.memory_space<vmem>>
      %c0_i32_199 = arith.constant 0 : i32
      %226 = tpu.memref_slice %arg8[%220, %c0_i32_199] : memref<512x16xf32, #tpu.memory_space<any>> -> memref<1x16xf32, #tpu.memory_space<any>>
      %227 = tpu.memref_slice %arg14[%c1_i32_195, %c5_i32_196] : memref<2x8x!tpu.dma_semaphore, #tpu.memory_space<semaphore_mem>> -> memref<1x1x!tpu.dma_semaphore, #tpu.memory_space<semaphore_mem>>
      %228 = tpu.memref_squeeze %227 : memref<1x1x!tpu.dma_semaphore, #tpu.memory_space<semaphore_mem>> -> memref<!tpu.dma_semaphore, #tpu.memory_space<semaphore_mem>>
      tpu.wait_dma2 semaphore(%228 : memref<!tpu.dma_semaphore, #tpu.memory_space<semaphore_mem>>) src(%225 : memref<1x16xf32, #tpu.memory_space<vmem>>) dst(%226 : memref<1x16xf32, #tpu.memory_space<any>>)
      %c6_200 = arith.constant 6 : index
      %229 = memref.load %arg1[%c6_200] : memref<8xi32, #tpu.memory_space<smem>>
      %c0_i32_201 = arith.constant 0 : i32
      %c6_i32_202 = arith.constant 6 : i32
      %c6_i32_203 = arith.constant 6 : i32
      %c0_i32_204 = arith.constant 0 : i32
      %230 = tpu.memref_slice %arg9[%c6_i32_203, %c0_i32_204] : memref<8x64xf32, #tpu.memory_space<vmem>> -> memref<1x64xf32, #tpu.memory_space<vmem>>
      %c0_i32_205 = arith.constant 0 : i32
      %231 = tpu.memref_slice %arg7[%229, %c0_i32_205] : memref<512x64xf32, #tpu.memory_space<any>> -> memref<1x64xf32, #tpu.memory_space<any>>
      %232 = tpu.memref_slice %arg14[%c0_i32_201, %c6_i32_202] : memref<2x8x!tpu.dma_semaphore, #tpu.memory_space<semaphore_mem>> -> memref<1x1x!tpu.dma_semaphore, #tpu.memory_space<semaphore_mem>>
      %233 = tpu.memref_squeeze %232 : memref<1x1x!tpu.dma_semaphore, #tpu.memory_space<semaphore_mem>> -> memref<!tpu.dma_semaphore, #tpu.memory_space<semaphore_mem>>
      tpu.wait_dma2 semaphore(%233 : memref<!tpu.dma_semaphore, #tpu.memory_space<semaphore_mem>>) src(%230 : memref<1x64xf32, #tpu.memory_space<vmem>>) dst(%231 : memref<1x64xf32, #tpu.memory_space<any>>)
      %c1_i32_206 = arith.constant 1 : i32
      %c6_i32_207 = arith.constant 6 : i32
      %c6_i32_208 = arith.constant 6 : i32
      %c0_i32_209 = arith.constant 0 : i32
      %234 = tpu.memref_slice %arg10[%c6_i32_208, %c0_i32_209] : memref<8x16xf32, #tpu.memory_space<vmem>> -> memref<1x16xf32, #tpu.memory_space<vmem>>
      %c0_i32_210 = arith.constant 0 : i32
      %235 = tpu.memref_slice %arg8[%229, %c0_i32_210] : memref<512x16xf32, #tpu.memory_space<any>> -> memref<1x16xf32, #tpu.memory_space<any>>
      %236 = tpu.memref_slice %arg14[%c1_i32_206, %c6_i32_207] : memref<2x8x!tpu.dma_semaphore, #tpu.memory_space<semaphore_mem>> -> memref<1x1x!tpu.dma_semaphore, #tpu.memory_space<semaphore_mem>>
      %237 = tpu.memref_squeeze %236 : memref<1x1x!tpu.dma_semaphore, #tpu.memory_space<semaphore_mem>> -> memref<!tpu.dma_semaphore, #tpu.memory_space<semaphore_mem>>
      tpu.wait_dma2 semaphore(%237 : memref<!tpu.dma_semaphore, #tpu.memory_space<semaphore_mem>>) src(%234 : memref<1x16xf32, #tpu.memory_space<vmem>>) dst(%235 : memref<1x16xf32, #tpu.memory_space<any>>)
      %c7_211 = arith.constant 7 : index
      %238 = memref.load %arg1[%c7_211] : memref<8xi32, #tpu.memory_space<smem>>
      %c0_i32_212 = arith.constant 0 : i32
      %c7_i32_213 = arith.constant 7 : i32
      %c7_i32_214 = arith.constant 7 : i32
      %c0_i32_215 = arith.constant 0 : i32
      %239 = tpu.memref_slice %arg9[%c7_i32_214, %c0_i32_215] : memref<8x64xf32, #tpu.memory_space<vmem>> -> memref<1x64xf32, #tpu.memory_space<vmem>>
      %c0_i32_216 = arith.constant 0 : i32
      %240 = tpu.memref_slice %arg7[%238, %c0_i32_216] : memref<512x64xf32, #tpu.memory_space<any>> -> memref<1x64xf32, #tpu.memory_space<any>>
      %241 = tpu.memref_slice %arg14[%c0_i32_212, %c7_i32_213] : memref<2x8x!tpu.dma_semaphore, #tpu.memory_space<semaphore_mem>> -> memref<1x1x!tpu.dma_semaphore, #tpu.memory_space<semaphore_mem>>
      %242 = tpu.memref_squeeze %241 : memref<1x1x!tpu.dma_semaphore, #tpu.memory_space<semaphore_mem>> -> memref<!tpu.dma_semaphore, #tpu.memory_space<semaphore_mem>>
      tpu.wait_dma2 semaphore(%242 : memref<!tpu.dma_semaphore, #tpu.memory_space<semaphore_mem>>) src(%239 : memref<1x64xf32, #tpu.memory_space<vmem>>) dst(%240 : memref<1x64xf32, #tpu.memory_space<any>>)
      %c1_i32_217 = arith.constant 1 : i32
      %c7_i32_218 = arith.constant 7 : i32
      %c7_i32_219 = arith.constant 7 : i32
      %c0_i32_220 = arith.constant 0 : i32
      %243 = tpu.memref_slice %arg10[%c7_i32_219, %c0_i32_220] : memref<8x16xf32, #tpu.memory_space<vmem>> -> memref<1x16xf32, #tpu.memory_space<vmem>>
      %c0_i32_221 = arith.constant 0 : i32
      %244 = tpu.memref_slice %arg8[%238, %c0_i32_221] : memref<512x16xf32, #tpu.memory_space<any>> -> memref<1x16xf32, #tpu.memory_space<any>>
      %245 = tpu.memref_slice %arg14[%c1_i32_217, %c7_i32_218] : memref<2x8x!tpu.dma_semaphore, #tpu.memory_space<semaphore_mem>> -> memref<1x1x!tpu.dma_semaphore, #tpu.memory_space<semaphore_mem>>
      %246 = tpu.memref_squeeze %245 : memref<1x1x!tpu.dma_semaphore, #tpu.memory_space<semaphore_mem>> -> memref<!tpu.dma_semaphore, #tpu.memory_space<semaphore_mem>>
      tpu.wait_dma2 semaphore(%246 : memref<!tpu.dma_semaphore, #tpu.memory_space<semaphore_mem>>) src(%243 : memref<1x16xf32, #tpu.memory_space<vmem>>) dst(%244 : memref<1x16xf32, #tpu.memory_space<any>>)
      %c0_222 = arith.constant 0 : index
      %c0_223 = arith.constant 0 : index
      %247 = vector.load %arg9[%c0_222, %c0_223] : memref<8x64xf32, #tpu.memory_space<vmem>>, vector<8x64xf32>
      %c0_224 = arith.constant 0 : index
      %c0_225 = arith.constant 0 : index
      %248 = vector.load %arg3[%c0_224, %c0_225] : memref<8x16xf32, #tpu.memory_space<vmem>>, vector<8x16xf32>
      %cst_226 = arith.constant dense<0.000000e+00> : vector<8x8xf32>
      %249 = tpu.matmul %248, %248, %cst_226 {dimension_numbers = #tpu.dot_dimension_numbers<[1], [1], [0], [0], [0, 0, 1, 0], [], []>} : vector<8x16xf32>, vector<8x16xf32>, vector<8x8xf32> -> vector<8x8xf32>
      %cst_227 = arith.constant 0.000000e+00 : f32
      %250 = vector.broadcast %cst_227 : f32 to vector<8x8xf32>
      %251 = arith.cmpf ogt, %249, %250 : vector<8x8xf32>
      %cst_228 = arith.constant dense<0.000000e+00> : vector<8x8xf32>
      %252 = tpu.matmul %247, %247, %cst_228 {dimension_numbers = #tpu.dot_dimension_numbers<[1], [1], [0], [0], [0, 0, 1, 0], [], []>, precision = #tpu.contract_precision<fp32>} : vector<8x64xf32>, vector<8x64xf32>, vector<8x8xf32> -> vector<8x8xf32>
      %cst_229 = arith.constant 1.000000e-01 : f32
      %253 = vector.broadcast %cst_229 : f32 to vector<8x8xf32>
      %254 = arith.mulf %253, %252 : vector<8x8xf32>
      %255 = math.absf %254 : vector<8x8xf32>
      %cst_230 = arith.constant 0.000000e+00 : f32
      %256 = vector.broadcast %cst_230 : f32 to vector<8x8xf32>
      %257 = arith.subf %256, %255 : vector<8x8xf32>
      %258 = math.exp %257 : vector<8x8xf32>
      %cst_231 = arith.constant 1.000000e+00 : f32
      %259 = vector.broadcast %cst_231 : f32 to vector<8x8xf32>
      %260 = arith.addf %259, %258 : vector<8x8xf32>
      %261 = math.log %260 : vector<8x8xf32>
      %cst_232 = arith.constant 0.000000e+00 : f32
      %262 = vector.broadcast %cst_232 : f32 to vector<8x8xf32>
      %263 = arith.maximumf %254, %262 : vector<8x8xf32>
      %264 = arith.addf %261, %263 : vector<8x8xf32>
      %cst_233 = arith.constant 0.000000e+00 : f32
      %265 = vector.broadcast %cst_233 : f32 to vector<8x8xf32>
      %266 = arith.select %251, %254, %265 : vector<8x8xi1>, vector<8x8xf32>
      %267 = arith.subf %264, %266 : vector<8x8xf32>
      %268 = arith.extui %251 : vector<8x8xi1> to vector<8x8xi32>
      %269 = arith.sitofp %268 : vector<8x8xi32> to vector<8x8xf32>
      %c0_234 = arith.constant 0 : index
      %c0_235 = arith.constant 0 : index
      %270 = vector.load %arg11[%c0_234, %c0_235] : memref<8x1xf32, #tpu.memory_space<vmem>>, vector<8x1xf32>
      %271 = arith.mulf %267, %269 : vector<8x8xf32>
      %cst_236 = arith.constant dense<0.000000e+00> : vector<8xf32>
      %272 = vector.multi_reduction <add>, %271, %cst_236 [1] : vector<8x8xf32> to vector<8xf32>
      %273 = vector.shape_cast %272 : vector<8xf32> to vector<8x1xf32>
      %274 = arith.addf %270, %273 : vector<8x1xf32>
      %c0_237 = arith.constant 0 : index
      %c0_238 = arith.constant 0 : index
      %275 = vector.load %arg11[%c0_237, %c0_238] : memref<8x1xf32, #tpu.memory_space<vmem>>, vector<8x1xf32>
      tpu.vector_store %arg11[%c0_237, %c0_238], %274 {strides = array<i32>} : memref<8x1xf32, #tpu.memory_space<vmem>>, vector<8x1xf32>,
      %c0_239 = arith.constant 0 : index
      %c0_240 = arith.constant 0 : index
      %276 = vector.load %arg12[%c0_239, %c0_240] : memref<8x1xf32, #tpu.memory_space<vmem>>, vector<8x1xf32>
      %cst_241 = arith.constant dense<0.000000e+00> : vector<8xf32>
      %277 = vector.multi_reduction <add>, %267, %cst_241 [1] : vector<8x8xf32> to vector<8xf32>
      %278 = vector.shape_cast %277 : vector<8xf32> to vector<8x1xf32>
      %279 = arith.addf %276, %278 : vector<8x1xf32>
      %c0_242 = arith.constant 0 : index
      %c0_243 = arith.constant 0 : index
      %280 = vector.load %arg12[%c0_242, %c0_243] : memref<8x1xf32, #tpu.memory_space<vmem>>, vector<8x1xf32>
      tpu.vector_store %arg12[%c0_242, %c0_243], %279 {strides = array<i32>} : memref<8x1xf32, #tpu.memory_space<vmem>>, vector<8x1xf32>,
      %c0_244 = arith.constant 0 : index
      %c0_245 = arith.constant 0 : index
      %281 = vector.load %arg13[%c0_244, %c0_245] : memref<8x1xf32, #tpu.memory_space<vmem>>, vector<8x1xf32>
      %cst_246 = arith.constant dense<0.000000e+00> : vector<8xf32>
      %282 = vector.multi_reduction <add>, %269, %cst_246 [1] : vector<8x8xf32> to vector<8xf32>
      %283 = vector.shape_cast %282 : vector<8xf32> to vector<8x1xf32>
      %284 = arith.addf %281, %283 : vector<8x1xf32>
      %c0_247 = arith.constant 0 : index
      %c0_248 = arith.constant 0 : index
      %285 = vector.load %arg13[%c0_247, %c0_248] : memref<8x1xf32, #tpu.memory_space<vmem>>, vector<8x1xf32>
      tpu.vector_store %arg13[%c0_247, %c0_248], %284 {strides = array<i32>} : memref<8x1xf32, #tpu.memory_space<vmem>>, vector<8x1xf32>,
    } else {
    }
    %c0 = arith.constant 0 : index
    %c0_1 = arith.constant 0 : index
    %3 = vector.load %arg9[%c0, %c0_1] : memref<8x64xf32, #tpu.memory_space<vmem>>, vector<8x64xf32>
    %c0_2 = arith.constant 0 : index
    %c0_3 = arith.constant 0 : index
    %4 = vector.load %arg3[%c0_2, %c0_3] : memref<8x16xf32, #tpu.memory_space<vmem>>, vector<8x16xf32>
    %c0_4 = arith.constant 0 : index
    %c0_5 = arith.constant 0 : index
    %5 = vector.load %arg4[%c0_4, %c0_5] : memref<128x64xf32, #tpu.memory_space<vmem>>, vector<128x64xf32>
    %c0_6 = arith.constant 0 : index
    %c0_7 = arith.constant 0 : index
    %6 = vector.load %arg5[%c0_6, %c0_7] : memref<128x16xf32, #tpu.memory_space<vmem>>, vector<128x16xf32>
    %c128_i32 = arith.constant 128 : i32
    %7 = arith.muli %arg0, %c128_i32 : i32
    %8 = tpu.iota {dimensions = array<i32: 1>} : vector<1x128xi32>
    %9 = vector.broadcast %7 : i32 to vector<1x128xi32>
    %10 = arith.addi %9, %8 : vector<1x128xi32>
    %c512_i32 = arith.constant 512 : i32
    %11 = vector.broadcast %c512_i32 : i32 to vector<1x128xi32>
    %12 = arith.cmpi slt, %10, %11 : vector<1x128xi32>
    %c0_8 = arith.constant 0 : index
    %13 = memref.load %arg1[%c0_8] : memref<8xi32, #tpu.memory_space<smem>>
    %14 = vector.broadcast %13 : i32 to vector<1x128xi32>
    %15 = arith.cmpi ne, %10, %14 : vector<1x128xi32>
    %16 = arith.andi %12, %15 : vector<1x128xi1>
    %c1 = arith.constant 1 : index
    %17 = memref.load %arg1[%c1] : memref<8xi32, #tpu.memory_space<smem>>
    %18 = vector.broadcast %17 : i32 to vector<1x128xi32>
    %19 = arith.cmpi ne, %10, %18 : vector<1x128xi32>
    %20 = arith.andi %16, %19 : vector<1x128xi1>
    %c2 = arith.constant 2 : index
    %21 = memref.load %arg1[%c2] : memref<8xi32, #tpu.memory_space<smem>>
    %22 = vector.broadcast %21 : i32 to vector<1x128xi32>
    %23 = arith.cmpi ne, %10, %22 : vector<1x128xi32>
    %24 = arith.andi %20, %23 : vector<1x128xi1>
    %c3 = arith.constant 3 : index
    %25 = memref.load %arg1[%c3] : memref<8xi32, #tpu.memory_space<smem>>
    %26 = vector.broadcast %25 : i32 to vector<1x128xi32>
    %27 = arith.cmpi ne, %10, %26 : vector<1x128xi32>
    %28 = arith.andi %24, %27 : vector<1x128xi1>
    %c4 = arith.constant 4 : index
    %29 = memref.load %arg1[%c4] : memref<8xi32, #tpu.memory_space<smem>>
    %30 = vector.broadcast %29 : i32 to vector<1x128xi32>
    %31 = arith.cmpi ne, %10, %30 : vector<1x128xi32>
    %32 = arith.andi %28, %31 : vector<1x128xi1>
    %c5 = arith.constant 5 : index
    %33 = memref.load %arg1[%c5] : memref<8xi32, #tpu.memory_space<smem>>
    %34 = vector.broadcast %33 : i32 to vector<1x128xi32>
    %35 = arith.cmpi ne, %10, %34 : vector<1x128xi32>
    %36 = arith.andi %32, %35 : vector<1x128xi1>
    %c6 = arith.constant 6 : index
    %37 = memref.load %arg1[%c6] : memref<8xi32, #tpu.memory_space<smem>>
    %38 = vector.broadcast %37 : i32 to vector<1x128xi32>
    %39 = arith.cmpi ne, %10, %38 : vector<1x128xi32>
    %40 = arith.andi %36, %39 : vector<1x128xi1>
    %c7 = arith.constant 7 : index
    %41 = memref.load %arg1[%c7] : memref<8xi32, #tpu.memory_space<smem>>
    %42 = vector.broadcast %41 : i32 to vector<1x128xi32>
    %43 = arith.cmpi ne, %10, %42 : vector<1x128xi32>
    %44 = arith.andi %40, %43 : vector<1x128xi1>
    %cst = arith.constant dense<0.000000e+00> : vector<8x128xf32>
    %45 = tpu.matmul %4, %6, %cst {dimension_numbers = #tpu.dot_dimension_numbers<[1], [1], [0], [0], [0, 0, 1, 0], [], []>} : vector<8x16xf32>, vector<128x16xf32>, vector<8x128xf32> -> vector<8x128xf32>
    %cst_9 = arith.constant 0.000000e+00 : f32
    %46 = vector.broadcast %cst_9 : f32 to vector<8x128xf32>
    %47 = arith.cmpf ogt, %45, %46 : vector<8x128xf32>
    %cst_10 = arith.constant dense<0.000000e+00> : vector<8x128xf32>
    %48 = tpu.matmul %3, %5, %cst_10 {dimension_numbers = #tpu.dot_dimension_numbers<[1], [1], [0], [0], [0, 0, 1, 0], [], []>, precision = #tpu.contract_precision<fp32>} : vector<8x64xf32>, vector<128x64xf32>, vector<8x128xf32> -> vector<8x128xf32>
    %cst_11 = arith.constant 1.000000e-01 : f32
    %49 = vector.broadcast %cst_11 : f32 to vector<8x128xf32>
    %50 = arith.mulf %49, %48 : vector<8x128xf32>
    %51 = math.absf %50 : vector<8x128xf32>
    %cst_12 = arith.constant 0.000000e+00 : f32
    %52 = vector.broadcast %cst_12 : f32 to vector<8x128xf32>
    %53 = arith.subf %52, %51 : vector<8x128xf32>
    %54 = math.exp %53 : vector<8x128xf32>
    %cst_13 = arith.constant 1.000000e+00 : f32
    %55 = vector.broadcast %cst_13 : f32 to vector<8x128xf32>
    %56 = arith.addf %55, %54 : vector<8x128xf32>
    %57 = math.log %56 : vector<8x128xf32>
    %cst_14 = arith.constant 0.000000e+00 : f32
    %58 = vector.broadcast %cst_14 : f32 to vector<8x128xf32>
    %59 = arith.maximumf %50, %58 : vector<8x128xf32>
    %60 = arith.addf %57, %59 : vector<8x128xf32>
    %cst_15 = arith.constant 0.000000e+00 : f32
    %61 = vector.broadcast %cst_15 : f32 to vector<8x128xf32>
    %62 = arith.select %47, %50, %61 : vector<8x128xi1>, vector<8x128xf32>
    %63 = arith.subf %60, %62 : vector<8x128xf32>
    %64 = vector.broadcast %44 : vector<1x128xi1> to vector<8x128xi1>
    %65 = arith.andi %64, %47 : vector<8x128xi1>
    %cst_16 = arith.constant 1.000000e+00 : f32
    %cst_17 = arith.constant 0.000000e+00 : f32
    %66 = vector.broadcast %cst_16 : f32 to vector<8x128xf32>
    %67 = vector.broadcast %cst_17 : f32 to vector<8x128xf32>
    %68 = arith.select %65, %66, %67 : vector<8x128xi1>, vector<8x128xf32>
    %cst_18 = arith.constant 0.000000e+00 : f32
    %69 = vector.shape_cast %44 : vector<1x128xi1> to vector<1x128xi1>
    %70 = vector.broadcast %69 : vector<1x128xi1> to vector<8x128xi1>
    %71 = vector.broadcast %cst_18 : f32 to vector<8x128xf32>
    %72 = arith.select %70, %63, %71 : vector<8x128xi1>, vector<8x128xf32>
    %c0_19 = arith.constant 0 : index
    %c0_20 = arith.constant 0 : index
    %73 = vector.load %arg11[%c0_19, %c0_20] : memref<8x1xf32, #tpu.memory_space<vmem>>, vector<8x1xf32>
    %74 = arith.mulf %72, %68 : vector<8x128xf32>
    %cst_21 = arith.constant dense<0.000000e+00> : vector<8xf32>
    %75 = vector.multi_reduction <add>, %74, %cst_21 [1] : vector<8x128xf32> to vector<8xf32>
    %76 = vector.shape_cast %75 : vector<8xf32> to vector<8x1xf32>
    %77 = arith.addf %73, %76 : vector<8x1xf32>
    %c0_22 = arith.constant 0 : index
    %c0_23 = arith.constant 0 : index
    %78 = vector.load %arg11[%c0_22, %c0_23] : memref<8x1xf32, #tpu.memory_space<vmem>>, vector<8x1xf32>
    tpu.vector_store %arg11[%c0_22, %c0_23], %77 {strides = array<i32>} : memref<8x1xf32, #tpu.memory_space<vmem>>, vector<8x1xf32>,
    %c0_24 = arith.constant 0 : index
    %c0_25 = arith.constant 0 : index
    %79 = vector.load %arg12[%c0_24, %c0_25] : memref<8x1xf32, #tpu.memory_space<vmem>>, vector<8x1xf32>
    %cst_26 = arith.constant dense<0.000000e+00> : vector<8xf32>
    %80 = vector.multi_reduction <add>, %72, %cst_26 [1] : vector<8x128xf32> to vector<8xf32>
    %81 = vector.shape_cast %80 : vector<8xf32> to vector<8x1xf32>
    %82 = arith.addf %79, %81 : vector<8x1xf32>
    %c0_27 = arith.constant 0 : index
    %c0_28 = arith.constant 0 : index
    %83 = vector.load %arg12[%c0_27, %c0_28] : memref<8x1xf32, #tpu.memory_space<vmem>>, vector<8x1xf32>
    tpu.vector_store %arg12[%c0_27, %c0_28], %82 {strides = array<i32>} : memref<8x1xf32, #tpu.memory_space<vmem>>, vector<8x1xf32>,
    %c0_29 = arith.constant 0 : index
    %c0_30 = arith.constant 0 : index
    %84 = vector.load %arg13[%c0_29, %c0_30] : memref<8x1xf32, #tpu.memory_space<vmem>>, vector<8x1xf32>
    %cst_31 = arith.constant dense<0.000000e+00> : vector<8xf32>
    %85 = vector.multi_reduction <add>, %68, %cst_31 [1] : vector<8x128xf32> to vector<8xf32>
    %86 = vector.shape_cast %85 : vector<8xf32> to vector<8x1xf32>
    %87 = arith.addf %84, %86 : vector<8x1xf32>
    %c0_32 = arith.constant 0 : index
    %c0_33 = arith.constant 0 : index
    %88 = vector.load %arg13[%c0_32, %c0_33] : memref<8x1xf32, #tpu.memory_space<vmem>>, vector<8x1xf32>
    tpu.vector_store %arg13[%c0_32, %c0_33], %87 {strides = array<i32>} : memref<8x1xf32, #tpu.memory_space<vmem>>, vector<8x1xf32>,
    %c3_i32 = arith.constant 3 : i32
    %89 = arith.cmpi eq, %arg0, %c3_i32 : i32
    %90 = arith.extui %89 : i1 to i32
    %c0_i32_34 = arith.constant 0 : i32
    %91 = arith.cmpi ne, %90, %c0_i32_34 : i32
    scf.if %91 {
      %c0_35 = arith.constant 0 : index
      %c0_36 = arith.constant 0 : index
      %92 = vector.load %arg13[%c0_35, %c0_36] : memref<8x1xf32, #tpu.memory_space<vmem>>, vector<8x1xf32>
      %93 = vector.shape_cast %92 : vector<8x1xf32> to vector<1x8x1xf32>
      %cst_37 = arith.constant dense<0.000000e+00> : vector<1xf32>
      %94 = vector.multi_reduction <add>, %93, %cst_37 [1, 2] : vector<1x8x1xf32> to vector<1xf32>
      %95 = vector.shape_cast %94 : vector<1xf32> to vector<1x1x1xf32>
      %96 = vector.extract %95[0, 0, 0] : f32 from vector<1x1x1xf32>
      %cst_38 = arith.constant 4.096000e+03 : f32
      %97 = arith.subf %cst_38, %96 : f32
      %c0_39 = arith.constant 0 : index
      %c0_40 = arith.constant 0 : index
      %98 = vector.load %arg11[%c0_39, %c0_40] : memref<8x1xf32, #tpu.memory_space<vmem>>, vector<8x1xf32>
      %99 = vector.shape_cast %98 : vector<8x1xf32> to vector<1x8x1xf32>
      %cst_41 = arith.constant dense<0.000000e+00> : vector<1xf32>
      %100 = vector.multi_reduction <add>, %99, %cst_41 [1, 2] : vector<1x8x1xf32> to vector<1xf32>
      %101 = vector.shape_cast %100 : vector<1xf32> to vector<1x1x1xf32>
      %102 = vector.extract %101[0, 0, 0] : f32 from vector<1x1x1xf32>
      %c0_42 = arith.constant 0 : index
      %c0_43 = arith.constant 0 : index
      %103 = vector.load %arg12[%c0_42, %c0_43] : memref<8x1xf32, #tpu.memory_space<vmem>>, vector<8x1xf32>
      %104 = vector.shape_cast %103 : vector<8x1xf32> to vector<1x8x1xf32>
      %cst_44 = arith.constant dense<0.000000e+00> : vector<1xf32>
      %105 = vector.multi_reduction <add>, %104, %cst_44 [1, 2] : vector<1x8x1xf32> to vector<1xf32>
      %106 = vector.shape_cast %105 : vector<1xf32> to vector<1x1x1xf32>
      %107 = vector.extract %106[0, 0, 0] : f32 from vector<1x1x1xf32>
      %108 = arith.subf %107, %102 : f32
      %cst_45 = arith.constant 0.000000e+00 : f32
      %109 = arith.cmpf ogt, %96, %cst_45 : f32
      %110 = arith.divf %102, %96 : f32
      %cst_46 = arith.constant 0.000000e+00 : f32
      %111 = arith.select %109, %110, %cst_46 : f32
      %cst_47 = arith.constant 0.000000e+00 : f32
      %112 = arith.cmpf ogt, %97, %cst_47 : f32
      %113 = arith.divf %108, %97 : f32
      %cst_48 = arith.constant 0.000000e+00 : f32
      %114 = arith.select %112, %113, %cst_48 : f32
      %115 = arith.addf %111, %114 : f32
      %c0_49 = arith.constant 0 : index
      %c0_50 = arith.constant 0 : index
      %116 = memref.load %arg6[%c0_49, %c0_50] : memref<1x1xf32, #tpu.memory_space<smem>>
      memref.store %115, %arg6[%c0_49, %c0_50] : memref<1x1xf32, #tpu.memory_space<smem>>
    } else {
    }
    return
  }
  func.func @transform_0(%arg0: i32, %arg1: memref<8xi32, #tpu.memory_space<smem>>) -> (i32, i32) {
    %c0_i32 = arith.constant 0 : i32
    %c0_i32_0 = arith.constant 0 : i32
    %c0_i32_1 = arith.constant 0 : i32
    return %c0_i32, %c0_i32_0 : i32, i32
  }
  func.func @transform_1(%arg0: i32, %arg1: memref<8xi32, #tpu.memory_space<smem>>) -> (i32, i32) {
    %c0_i32 = arith.constant 0 : i32
    %c0_i32_0 = arith.constant 0 : i32
    %c0_i32_1 = arith.constant 0 : i32
    return %c0_i32, %c0_i32_0 : i32, i32
  }
  func.func @transform_2(%arg0: i32, %arg1: memref<8xi32, #tpu.memory_space<smem>>) -> (i32, i32) {
    %c0_i32 = arith.constant 0 : i32
    %c0_i32_0 = arith.constant 0 : i32
    return %arg0, %c0_i32 : i32, i32
  }
  func.func @transform_3(%arg0: i32, %arg1: memref<8xi32, #tpu.memory_space<smem>>) -> (i32, i32) {
    %c0_i32 = arith.constant 0 : i32
    %c0_i32_0 = arith.constant 0 : i32
    return %arg0, %c0_i32 : i32, i32
  }
  func.func @transform_4(%arg0: i32, %arg1: memref<8xi32, #tpu.memory_space<smem>>) -> (i32, i32) {
    %c0_i32 = arith.constant 0 : i32
    %c0_i32_0 = arith.constant 0 : i32
    %c0_i32_1 = arith.constant 0 : i32
    return %c0_i32, %c0_i32_0 : i32, i32
  }
}

</mosaic_0001>

<llo_original>
// kernel: tpu_custom_call.1
$region0: #{tpu_custom_call.1}
  #allocation0 [shape = 'u32[]', space=smem, size = 0x4, offset = 0x4, fixed_abs, tag = 'smem constant byte address 0x4 - core index']
  #allocation1 [shape = 'u32[72,128]{1,0:T(1,128)}', space=vmem, size = 0x9000, scoped, tag = 'internal scratch']
  #allocation2 [shape = 'f32[8,64]{1,0:T(8,128)}', space=vmem, size = 0x1000, scoped, tag = 'scratch operand']
  #allocation3 [shape = 'f32[8,16]{1,0:T(8,128)}', space=vmem, size = 0x1000, scoped, tag = 'scratch operand']
  #allocation4 [shape = 'f32[8,1]{1,0:T(8,128)}', space=vmem, size = 0x1000, scoped, tag = 'scratch operand']
  #allocation5 [shape = 'f32[8,1]{1,0:T(8,128)}', space=vmem, size = 0x1000, scoped, tag = 'scratch operand']
  #allocation6 [shape = 'f32[8,1]{1,0:T(8,128)}', space=vmem, size = 0x1000, scoped, tag = 'scratch operand']
  #allocation7 [shape = 's32[16]{0}', space=sflag, size = 0x40, scoped, tag = 'scratch operand']
  #allocation8 [shape = 's32[1]{0}', space=sflag, size = 0x4, scoped, tag = 'scoped memory for tpu_custom_call.1']
  #allocation9 [shape = 'u8[512]{0}', space=smem, size = 0x200, scoped, tag = 'prefetched SMEM operand 0']
  #allocation12 [shape = 's32[]', space=sflag, size = 0x4, offset = 0, fixed_abs, tag = 'sflag constant byte address 0x0 - dummy sync flag']
  #allocation13 [shape = 's32[]', space=sflag, size = 0x4, offset = 0, fixed_abs, tag = 'sflag constant byte address 0x0 - dummy sync flag']
  #allocation14 [shape = 's32[]', space=sflag, size = 0x4, offset = 0, fixed_abs, tag = 'sflag constant byte address 0x0 - dummy sync flag']
  #allocation15 [shape = 's32[]', space=sflag, size = 0x4, offset = 0, fixed_abs, tag = 'sflag constant byte address 0x0 - dummy sync flag']
  #allocation16 [shape = 's32[]', space=sflag, size = 0x4, offset = 0, fixed_abs, tag = 'sflag constant byte address 0x0 - dummy sync flag']
  #allocation17 [shape = 's32[]', space=sflag, size = 0x4, offset = 0, fixed_abs, tag = 'sflag constant byte address 0x0 - dummy sync flag']
  #allocation18 [shape = 's32[]', space=sflag, size = 0x4, offset = 0, fixed_abs, tag = 'sflag constant byte address 0x0 - dummy sync flag']
  #allocation19 [shape = 's32[]', space=sflag, size = 0x4, offset = 0, fixed_abs, tag = 'sflag constant byte address 0x0 - dummy sync flag']
  #allocation20 [shape = 's32[]', space=sflag, size = 0x4, offset = 0, fixed_abs, tag = 'sflag constant byte address 0x0 - dummy sync flag']
  #allocation21 [shape = 's32[]', space=sflag, size = 0x4, offset = 0, fixed_abs, tag = 'sflag constant byte address 0x0 - dummy sync flag']
  #allocation22 [shape = 's32[]', space=sflag, size = 0x4, offset = 0, fixed_abs, tag = 'sflag constant byte address 0x0 - dummy sync flag']
  #allocation23 [shape = 's32[]', space=sflag, size = 0x4, offset = 0, fixed_abs, tag = 'sflag constant byte address 0x0 - dummy sync flag']
  #allocation24 [shape = 's32[]', space=sflag, size = 0x4, offset = 0, fixed_abs, tag = 'sflag constant byte address 0x0 - dummy sync flag']
  #allocation25 [shape = 's32[]', space=sflag, size = 0x4, offset = 0, fixed_abs, tag = 'sflag constant byte address 0x0 - dummy sync flag']
  #allocation26 [shape = 's32[]', space=sflag, size = 0x4, offset = 0, fixed_abs, tag = 'sflag constant byte address 0x0 - dummy sync flag']
  #allocation27 [shape = 's32[]', space=sflag, size = 0x4, offset = 0, fixed_abs, tag = 'sflag constant byte address 0x0 - dummy sync flag']
  %s0 = inlined_call_operand.vmem [shape: s32[8], index: 0, kind: input, shape index: {}]
  %s1 = inlined_call_operand.vmem [shape: f32[8,64], index: 1, kind: input, shape index: {}]
  %s2 = inlined_call_operand.vmem [shape: f32[8,16], index: 2, kind: input, shape index: {}]
  %s3 = inlined_call_operand.vmem [shape: f32[512,64], index: 3, kind: input, shape index: {}, may-alias: {3,6}]
  %s4 = inlined_call_operand.vmem [shape: f32[512,16], index: 4, kind: input, shape index: {}, may-alias: {4,7}]
  %s5 = inlined_call_operand.hbm [shape: f32[1,1], index: 5, kind: output, shape index: {0}]
  %s6 = inlined_call_operand.vmem [shape: f32[512,64], index: 6, kind: output, shape index: {1}, may-alias: {3,6}]
  %s7 = inlined_call_operand.vmem [shape: f32[512,16], index: 7, kind: output, shape index: {2}, may-alias: {4,7}]
  %8 = xla_tuple %s5, %s6, %s7
  %s9 = sld [smem:[#allocation0]]
  $region537: #{tpu_custom_call.1} parent=0
    _
  %s11 = ssub.s32 1, %s9
  %s12 = scalar_select 0, %s11, %s9
  %s14 = sshll.u32 %s0, 4
  %s15 = int_to_ptr.vmem [resolvable:$true] %s14
  %17 = dma.vmem_to_smem %s15, 16, [#allocation9], [#allocation8]
  %19 = dma.done [#allocation8], 16
  %20 = sfence
  $region1: #{tpu_custom_call.1} parent=0
    #allocation10 [shape = 'u8[512]{0}', space=smem, size = 0x200, scoped, tag = 'output window, operand 0, single buffered']
    #allocation11 [shape = 's32[2]{0}', space=sflag, size = 0x8, scoped, tag = 'scoped memory for tpu_custom_call.1']
    %21 = vsyncpa [#allocation11], 0
    loop: start=0, step=1, limit=6
    $region2: #{tpu_custom_call.1} parent=1 // loop_pre_header
      _
    $region3: #{tpu_custom_call.1} parent=1 // loop_header
      %s23 = sphi 0, %s27
      %p24 = scmp.ge.s32.totalorder %s23, 6
      %s31 = sphi 0, %s31
      %s33 = sphi 0, %s31
      %s34 = sphi 0, %s33
      %s48 = sphi 0, %s34
      %s52 = sphi 0, %s52
      %s54 = sphi 0, %s52
      %s55 = sphi 0, %s54
      %s69 = sphi 0, %s55
      %s75 = sphi 0, %s77
      %s78 = sphi 0, %s75
      %s79 = sphi 0, %s78
      %s95 = sphi 0, %s79
      %s101 = sphi 0, %s103
      %s104 = sphi 0, %s101
      %s105 = sphi 0, %s104
      %s121 = sphi 0, %s105
      %s125 = sphi 0, %s125
      %s127 = sphi 0, %s125
      %s128 = sphi 0, %s127
      %s142 = sphi 0, %s128
    $region4: #{tpu_custom_call.1} parent=1 // loop_header_branch
      %26 = sbr.rel (%p24) target = $region8
    $region5: #{tpu_custom_call.1} parent=1 // loop_body
      %s28 = ssub.s32 %s23, 1
      %s29 = ssub.s32 %s23, 2
      %s30 = sadd.s32 %s23, 1
      %s32 = sadd.s32 %s31, 1
      %p35 = scmp.eq.s32.totalorder %s23, 3
      %p36 = scmp.ne.s32.totalorder %s31, %s33
      %p37 = scmp.eq.s32.totalorder %s23, 0
      %p38 = por %p36, %p37
      %p39 = scmp.ne.s32.totalorder %s31, %s33
      %p40 = scmp.eq.s32.totalorder %s28, 3
      %p41 = por %p39, %p40
      %p42 = scmp.ne.s32.totalorder %s33, %s34
      %p43 = scmp.eq.s32.totalorder %s28, 0
      %p44 = por %p42, %p43
      %p45 = scmp.ne.s32.totalorder %s33, %s34
      %p46 = scmp.eq.s32.totalorder %s29, 3
      %p47 = por %p45, %p46
      %p49 = scmp.ne.s32.totalorder %s34, %s48
      %p50 = scmp.eq.s32.totalorder %s29, 0
      %p51 = por %p49, %p50
      %s53 = sadd.s32 %s52, 1
      %p56 = scmp.eq.s32.totalorder %s23, 3
      %p57 = scmp.ne.s32.totalorder %s52, %s54
      %p58 = scmp.eq.s32.totalorder %s23, 0
      %p59 = por %p57, %p58
      %p60 = scmp.ne.s32.totalorder %s52, %s54
      %p61 = scmp.eq.s32.totalorder %s28, 3
      %p62 = por %p60, %p61
      %p63 = scmp.ne.s32.totalorder %s54, %s55
      %p64 = scmp.eq.s32.totalorder %s28, 0
      %p65 = por %p63, %p64
      %p66 = scmp.ne.s32.totalorder %s54, %s55
      %p67 = scmp.eq.s32.totalorder %s29, 3
      %p68 = por %p66, %p67
      %p70 = scmp.ne.s32.totalorder %s55, %s69
      %p71 = scmp.eq.s32.totalorder %s29, 0
      %p72 = por %p70, %p71
      %s73 = ssub.s32 %s23, %s30
      %p74 = scmp.eq.s32.totalorder %s73, 0
      %s76 = sadd.s32 %s75, 1
      %s77 = scalar_select %p74, %s75, %s76
      %p80 = pneg %p74
      %p81 = scmp.eq.s32.totalorder %s23, 3
      %p82 = por %p80, %p81
      %p83 = scmp.ne.s32.totalorder %s75, %s78
      %p84 = scmp.eq.s32.totalorder %s23, 0
      %p85 = por %p83, %p84
      %p86 = scmp.ne.s32.totalorder %s75, %s78
      %p87 = scmp.eq.s32.totalorder %s28, 3
      %p88 = por %p86, %p87
      %p89 = scmp.ne.s32.totalorder %s78, %s79
      %p90 = scmp.eq.s32.totalorder %s28, 0
      %p91 = por %p89, %p90
      %p92 = scmp.ne.s32.totalorder %s78, %s79
      %p93 = scmp.eq.s32.totalorder %s29, 3
      %p94 = por %p92, %p93
      %p96 = scmp.ne.s32.totalorder %s79, %s95
      %p97 = scmp.eq.s32.totalorder %s29, 0
      %p98 = por %p96, %p97
      %s99 = ssub.s32 %s23, %s30
      %p100 = scmp.eq.s32.totalorder %s99, 0
      %s102 = sadd.s32 %s101, 1
      %s103 = scalar_select %p100, %s101, %s102
      %p106 = pneg %p100
      %p107 = scmp.eq.s32.totalorder %s23, 3
      %p108 = por %p106, %p107
      %p109 = scmp.ne.s32.totalorder %s101, %s104
      %p110 = scmp.eq.s32.totalorder %s23, 0
      %p111 = por %p109, %p110
      %p112 = scmp.ne.s32.totalorder %s101, %s104
      %p113 = scmp.eq.s32.totalorder %s28, 3
      %p114 = por %p112, %p113
      %p115 = scmp.ne.s32.totalorder %s104, %s105
      %p116 = scmp.eq.s32.totalorder %s28, 0
      %p117 = por %p115, %p116
      %p118 = scmp.ne.s32.totalorder %s104, %s105
      %p119 = scmp.eq.s32.totalorder %s29, 3
      %p120 = por %p118, %p119
      %p122 = scmp.ne.s32.totalorder %s105, %s121
      %p123 = scmp.eq.s32.totalorder %s29, 0
      %p124 = por %p122, %p123
      %s126 = sadd.s32 %s125, 1
      %p129 = scmp.eq.s32.totalorder %s23, 3
      %p130 = scmp.ne.s32.totalorder %s125, %s127
      %p131 = scmp.eq.s32.totalorder %s23, 0
      %p132 = por %p130, %p131
      %p133 = scmp.ne.s32.totalorder %s125, %s127
      %p134 = scmp.eq.s32.totalorder %s28, 3
      %p135 = por %p133, %p134
      %p136 = scmp.ne.s32.totalorder %s127, %s128
      %p137 = scmp.eq.s32.totalorder %s28, 0
      %p138 = por %p136, %p137
      %p139 = scmp.ne.s32.totalorder %s127, %s128
      %p140 = scmp.eq.s32.totalorder %s29, 3
      %p141 = por %p139, %p140
      %p143 = scmp.ne.s32.totalorder %s128, %s142
      %p144 = scmp.eq.s32.totalorder %s29, 0
      %p145 = por %p143, %p144
      %p146 = scmp.le.s32.totalorder 1, %s23
      %p147 = scmp.lt.s32.totalorder %s23, 5
      %p148 = pnand %p146, %p147
      %p149 = pneg %p148
      // Predicated region
      $region9: #{tpu_custom_call.1} parent=5 // pred_check
        _
      $region10: #{tpu_custom_call.1} parent=5 // pred_check_branch
        %151 = sbr.rel (%p148) target = $region12
      $region11: #{tpu_custom_call.1} parent=5 // pred_region
        %s152 = ssub.s32 %s23, 1
        // Predicated region
        $region13: #{tpu_custom_call.1} parent=11 // pred_check
          %p153 = pneg %p44
        $region14: #{tpu_custom_call.1} parent=11 // pred_check_branch
          %155 = sbr.rel (%p153) target = $region16
        $region15: #{tpu_custom_call.1} parent=11 // pred_region
          _
        $region16: #{tpu_custom_call.1} parent=11 // pred_fallthru
          _
        // Predicated region
        $region17: #{tpu_custom_call.1} parent=11 // pred_check
          %p156 = pneg %p65
        $region18: #{tpu_custom_call.1} parent=11 // pred_check_branch
          %158 = sbr.rel (%p156) target = $region20
        $region19: #{tpu_custom_call.1} parent=11 // pred_region
          _
        $region20: #{tpu_custom_call.1} parent=11 // pred_fallthru
          _
      $region12: #{tpu_custom_call.1} parent=5 // pred_fallthru
        _
      %p159 = scmp.lt.s32.totalorder %s23, 4
      // Predicated region
      $region21: #{tpu_custom_call.1} parent=5 // pred_check
        %p160 = pneg %p159
      $region22: #{tpu_custom_call.1} parent=5 // pred_check_branch
        %162 = sbr.rel (%p160) target = $region24
      $region23: #{tpu_custom_call.1} parent=5 // pred_region
        // Predicated region
        $region25: #{tpu_custom_call.1} parent=23 // pred_check
          %p163 = pneg %p85
        $region26: #{tpu_custom_call.1} parent=23 // pred_check_branch
          %165 = sbr.rel (%p163) target = $region28
        $region27: #{tpu_custom_call.1} parent=23 // pred_region
          %s166 = smul.u32 16, %s23
          %p167 = scmp.lt.s32.totalorder %s166, 63
          %s168 = scalar_select %p167, %s166, 63
          %s169 = smul.addr %s168, 8
          %s170 = scalar_lea.vmem %s3, %s169
          %s171 = smul.u32 16, %s23
        $region28: #{tpu_custom_call.1} parent=23 // pred_fallthru
          _
        // Predicated region
        $region29: #{tpu_custom_call.1} parent=23 // pred_check
          %p172 = pneg %p111
        $region30: #{tpu_custom_call.1} parent=23 // pred_check_branch
          %174 = sbr.rel (%p172) target = $region32
        $region31: #{tpu_custom_call.1} parent=23 // pred_region
          %s175 = smul.u32 16, %s23
          %p176 = scmp.lt.s32.totalorder %s175, 63
          %s177 = scalar_select %p176, %s175, 63
          %s178 = smul.addr %s177, 8
          %s179 = scalar_lea.vmem %s4, %s178
          %s180 = smul.u32 16, %s23
        $region32: #{tpu_custom_call.1} parent=23 // pred_fallthru
          _
      $region24: #{tpu_custom_call.1} parent=5 // pred_fallthru
        _
      %p181 = scmp.le.s32.totalorder 1, %s23
      %p182 = scmp.lt.s32.totalorder %s23, 5
      %p183 = pnand %p181, %p182
      %p184 = pneg %p183
      // Predicated region
      $region33: #{tpu_custom_call.1} parent=5 // pred_check
        _
      $region34: #{tpu_custom_call.1} parent=5 // pred_check_branch
        %186 = sbr.rel (%p183) target = $region36
      $region35: #{tpu_custom_call.1} parent=5 // pred_region
        %s187 = ssub.s32 %s23, 1
        %p188 = pneg %p44
        %p189 = pneg %p41
        %p190 = pneg %p65
        %p191 = pneg %p62
        %s192 = smul.u32 16, %s28
        %p193 = scmp.lt.s32.totalorder %s192, 63
        %s194 = scalar_select %p193, %s192, 63
        %s195 = smul.addr %s194, 8
        %s196 = scalar_lea.vmem %s3, %s195
        %p197 = pneg %p91
        %p198 = pneg %p88
        %s199 = smul.u32 16, %s28
        %p200 = scmp.lt.s32.totalorder %s199, 63
        %s201 = scalar_select %p200, %s199, 63
        %s202 = smul.addr %s201, 8
        %s203 = scalar_lea.vmem %s4, %s202
        %p204 = pneg %p117
        %p205 = pneg %p114
        %p206 = pneg %p138
        %p207 = pneg %p135
        %s208 = smul.u32 16, %s28
        %p209 = scmp.lt.s32.totalorder %s208, 63
        %s210 = scalar_select %p209, %s208, 63
        %s211 = smul.addr %s210, 8
        %s212 = scalar_lea.vmem %s3, %s211
        %s213 = smul.u32 16, %s28
        %s214 = smul.u32 16, %s28
        %p215 = scmp.lt.s32.totalorder %s214, 63
        %s216 = scalar_select %p215, %s214, 63
        %s217 = smul.addr %s216, 8
        %s218 = scalar_lea.vmem %s4, %s217
        %s219 = smul.u32 16, %s28
        %p220 = scmp.eq.s32.totalorder %s28, 0
        // Predicated region
        $region37: #{tpu_custom_call.1} parent=35 // pred_check
          %p221 = pneg %p220
        $region38: #{tpu_custom_call.1} parent=35 // pred_check_branch
          %223 = sbr.rel (%p221) target = $region40
        $region39: #{tpu_custom_call.1} parent=35 // pred_region
          %v224 = vld [vmem:[%s1] sm:$0xff]
          %v225 = vtanh.pop %v224
          %vm226 = vcmask 523264
          %227 = vst.msk [vmem:[#allocation2] sm:$0xff] %vm226, %v225
          %v228 = vld [vmem:[%s2] sm:$0xff]
          %vm229 = vcmask 130048
          %230 = vst.msk [vmem:[#allocation3] sm:$0xff] %vm229, %v228
          %vm231 = vcmask 7168
          %232 = vst.msk [vmem:[#allocation4] sm:$0xff] %vm231, 0.0
          %233 = vst.msk [vmem:[#allocation5] sm:$0xff] %vm231, 0.0
          %234 = vst.msk [vmem:[#allocation6] sm:$0xff] %vm231, 0.0
          %s235 = sld [smem:[#allocation9]]
          %s236 = scalar_lea.vmem %s6, %s235
          // Predicated region
          $region41: #{tpu_custom_call.1} parent=39 // pred_check
            _
          $region42: #{tpu_custom_call.1} parent=39 // pred_check_branch
            %238 = sbr.rel target = $region44
          $region43: #{tpu_custom_call.1} parent=39 // pred_region
            // Predicated region
            $region56: #{tpu_custom_call.1} parent=43 // pred_check
              _
            $region57: #{tpu_custom_call.1} parent=43 // pred_check_branch
              %254 = sbr.rel (0) target = $region59
            $region58: #{tpu_custom_call.1} parent=43 // pred_region
              %s256 = ssub.s32 2, 1
              loop: start=0, step=1, limit=1
              $region60: #{tpu_custom_call.1} parent=58 // loop_pre_header
                _
              $region61: #{tpu_custom_call.1} parent=58 // loop_header
                %s258 = sphi 0, %s262
                %p259 = scmp.ge.s32.totalorder %s258, 1
                %s263 = sphi [#allocation2], [#allocation2]
                %s264 = sphi %s236, %s236
              $region62: #{tpu_custom_call.1} parent=58 // loop_header_branch
                %261 = sbr.rel (%p259) target = $region66
              $region63: #{tpu_custom_call.1} parent=58 // loop_body
                %v265 = vld [vmem:[%s263] sm:%s256]
                %266 = vst [vmem:[%s264] sm:%s256] %v265
              $region64: #{tpu_custom_call.1} parent=58 // loop_footer
                %s262 = sadd.s32 1, %s258
              $region65: #{tpu_custom_call.1} parent=58 // loop_footer_branch
                %257 = sbr.rel target = $region61
              $region66: #{tpu_custom_call.1} parent=58 // loop_exit
                _
            $region59: #{tpu_custom_call.1} parent=43 // pred_fallthru
              _
          $region44: #{tpu_custom_call.1} parent=39 // pred_fallthru
            _
          // Predicated region
          $region45: #{tpu_custom_call.1} parent=39 // pred_check
            _
          $region46: #{tpu_custom_call.1} parent=39 // pred_check_branch
            %240 = sbr.rel (0) target = $region48
          $region47: #{tpu_custom_call.1} parent=39 // pred_region
            %s242 = ssub.s32 2, 1
            loop: start=0, step=1, limit=1
            $region49: #{tpu_custom_call.1} parent=47 // loop_pre_header
              _
            $region50: #{tpu_custom_call.1} parent=47 // loop_header
              %s244 = sphi 0, %s248
              %p245 = scmp.ge.s32.totalorder %s244, 1
              %s249 = sphi [#allocation2], [#allocation2]
              %s250 = sphi %s236, %s236
            $region51: #{tpu_custom_call.1} parent=47 // loop_header_branch
              %247 = sbr.rel (%p245) target = $region55
            $region52: #{tpu_custom_call.1} parent=47 // loop_body
              %v251 = vld [vmem:[%s249] sm:%s242]
              %252 = vst [vmem:[%s250] sm:%s242] %v251
            $region53: #{tpu_custom_call.1} parent=47 // loop_footer
              %s248 = sadd.s32 1, %s244
            $region54: #{tpu_custom_call.1} parent=47 // loop_footer_branch
              %243 = sbr.rel target = $region50
            $region55: #{tpu_custom_call.1} parent=47 // loop_exit
              _
          $region48: #{tpu_custom_call.1} parent=39 // pred_fallthru
            _
          // Predicated region
          $region67: #{tpu_custom_call.1} parent=39 // pred_check
            _
          $region68: #{tpu_custom_call.1} parent=39 // pred_check_branch
            %269 = sbr.rel (0) target = $region70
          $region69: #{tpu_custom_call.1} parent=39 // pred_region
            %270 = vsyncadd [#allocation7], 16
          $region70: #{tpu_custom_call.1} parent=39 // pred_fallthru
            _
          %s271 = scalar_lea.vmem %s7, %s235
          %s272 = scalar_lea.sflag [#allocation7], 8
          // Predicated region
          $region71: #{tpu_custom_call.1} parent=39 // pred_check
            _
          $region72: #{tpu_custom_call.1} parent=39 // pred_check_branch
            %274 = sbr.rel target = $region74
          $region73: #{tpu_custom_call.1} parent=39 // pred_region
            // Predicated region
            $region86: #{tpu_custom_call.1} parent=73 // pred_check
              _
            $region87: #{tpu_custom_call.1} parent=73 // pred_check_branch
              %290 = sbr.rel (0) target = $region89
            $region88: #{tpu_custom_call.1} parent=73 // pred_region
              %s292 = ssub.s32 2, 1
              loop: start=0, step=1, limit=1
              $region90: #{tpu_custom_call.1} parent=88 // loop_pre_header
                _
              $region91: #{tpu_custom_call.1} parent=88 // loop_header
                %s294 = sphi 0, %s298
                %p295 = scmp.ge.s32.totalorder %s294, 1
                %s299 = sphi [#allocation3], [#allocation3]
                %s300 = sphi %s271, %s271
              $region92: #{tpu_custom_call.1} parent=88 // loop_header_branch
                %297 = sbr.rel (%p295) target = $region96
              $region93: #{tpu_custom_call.1} parent=88 // loop_body
                %v301 = vld [vmem:[%s299] sm:%s292]
                %302 = vst [vmem:[%s300] sm:%s292] %v301
              $region94: #{tpu_custom_call.1} parent=88 // loop_footer
                %s298 = sadd.s32 1, %s294
              $region95: #{tpu_custom_call.1} parent=88 // loop_footer_branch
                %293 = sbr.rel target = $region91
              $region96: #{tpu_custom_call.1} parent=88 // loop_exit
                _
            $region89: #{tpu_custom_call.1} parent=73 // pred_fallthru
              _
          $region74: #{tpu_custom_call.1} parent=39 // pred_fallthru
            _
          // Predicated region
          $region75: #{tpu_custom_call.1} parent=39 // pred_check
            _
          $region76: #{tpu_custom_call.1} parent=39 // pred_check_branch
            %276 = sbr.rel (0) target = $region78
          $region77: #{tpu_custom_call.1} parent=39 // pred_region
            %s278 = ssub.s32 2, 1
            loop: start=0, step=1, limit=1
            $region79: #{tpu_custom_call.1} parent=77 // loop_pre_header
              _
            $region80: #{tpu_custom_call.1} parent=77 // loop_header
              %s280 = sphi 0, %s284
              %p281 = scmp.ge.s32.totalorder %s280, 1
              %s285 = sphi [#allocation3], [#allocation3]
              %s286 = sphi %s271, %s271
            $region81: #{tpu_custom_call.1} parent=77 // loop_header_branch
              %283 = sbr.rel (%p281) target = $region85
            $region82: #{tpu_custom_call.1} parent=77 // loop_body
              %v287 = vld [vmem:[%s285] sm:%s278]
              %288 = vst [vmem:[%s286] sm:%s278] %v287
            $region83: #{tpu_custom_call.1} parent=77 // loop_footer
              %s284 = sadd.s32 1, %s280
            $region84: #{tpu_custom_call.1} parent=77 // loop_footer_branch
              %279 = sbr.rel target = $region80
            $region85: #{tpu_custom_call.1} parent=77 // loop_exit
              _
          $region78: #{tpu_custom_call.1} parent=39 // pred_fallthru
            _
          // Predicated region
          $region97: #{tpu_custom_call.1} parent=39 // pred_check
            _
          $region98: #{tpu_custom_call.1} parent=39 // pred_check_branch
            %305 = sbr.rel (0) target = $region100
          $region99: #{tpu_custom_call.1} parent=39 // pred_region
            %306 = vsyncadd %s272, 16
          $region100: #{tpu_custom_call.1} parent=39 // pred_fallthru
            _
          %s307 = sld [smem:[#allocation9 + $0x1]]
          %s308 = scalar_lea.vmem [#allocation2], 1
          %s309 = scalar_lea.vmem %s6, %s307
          %s310 = scalar_lea.sflag [#allocation7], 1
          // Predicated region
          $region101: #{tpu_custom_call.1} parent=39 // pred_check
            _
          $region102: #{tpu_custom_call.1} parent=39 // pred_check_branch
            %312 = sbr.rel target = $region104
          $region103: #{tpu_custom_call.1} parent=39 // pred_region
            // Predicated region
            $region116: #{tpu_custom_call.1} parent=103 // pred_check
              _
            $region117: #{tpu_custom_call.1} parent=103 // pred_check_branch
              %328 = sbr.rel (0) target = $region119
            $region118: #{tpu_custom_call.1} parent=103 // pred_region
              %s330 = ssub.s32 2, 1
              loop: start=0, step=1, limit=1
              $region120: #{tpu_custom_call.1} parent=118 // loop_pre_header
                _
              $region121: #{tpu_custom_call.1} parent=118 // loop_header
                %s332 = sphi 0, %s336
                %p333 = scmp.ge.s32.totalorder %s332, 1
                %s337 = sphi %s308, %s308
                %s338 = sphi %s309, %s309
              $region122: #{tpu_custom_call.1} parent=118 // loop_header_branch
                %335 = sbr.rel (%p333) target = $region126
              $region123: #{tpu_custom_call.1} parent=118 // loop_body
                %v339 = vld [vmem:[%s337] sm:%s330]
                %340 = vst [vmem:[%s338] sm:%s330] %v339
              $region124: #{tpu_custom_call.1} parent=118 // loop_footer
                %s336 = sadd.s32 1, %s332
              $region125: #{tpu_custom_call.1} parent=118 // loop_footer_branch
                %331 = sbr.rel target = $region121
              $region126: #{tpu_custom_call.1} parent=118 // loop_exit
                _
            $region119: #{tpu_custom_call.1} parent=103 // pred_fallthru
              _
          $region104: #{tpu_custom_call.1} parent=39 // pred_fallthru
            _
          // Predicated region
          $region105: #{tpu_custom_call.1} parent=39 // pred_check
            _
          $region106: #{tpu_custom_call.1} parent=39 // pred_check_branch
            %314 = sbr.rel (0) target = $region108
          $region107: #{tpu_custom_call.1} parent=39 // pred_region
            %s316 = ssub.s32 2, 1
            loop: start=0, step=1, limit=1
            $region109: #{tpu_custom_call.1} parent=107 // loop_pre_header
              _
            $region110: #{tpu_custom_call.1} parent=107 // loop_header
              %s318 = sphi 0, %s322
              %p319 = scmp.ge.s32.totalorder %s318, 1
              %s323 = sphi %s308, %s308
              %s324 = sphi %s309, %s309
            $region111: #{tpu_custom_call.1} parent=107 // loop_header_branch
              %321 = sbr.rel (%p319) target = $region115
            $region112: #{tpu_custom_call.1} parent=107 // loop_body
              %v325 = vld [vmem:[%s323] sm:%s316]
              %326 = vst [vmem:[%s324] sm:%s316] %v325
            $region113: #{tpu_custom_call.1} parent=107 // loop_footer
              %s322 = sadd.s32 1, %s318
            $region114: #{tpu_custom_call.1} parent=107 // loop_footer_branch
              %317 = sbr.rel target = $region110
            $region115: #{tpu_custom_call.1} parent=107 // loop_exit
              _
          $region108: #{tpu_custom_call.1} parent=39 // pred_fallthru
            _
          // Predicated region
          $region127: #{tpu_custom_call.1} parent=39 // pred_check
            _
          $region128: #{tpu_custom_call.1} parent=39 // pred_check_branch
            %343 = sbr.rel (0) target = $region130
          $region129: #{tpu_custom_call.1} parent=39 // pred_region
            %344 = vsyncadd %s310, 16
          $region130: #{tpu_custom_call.1} parent=39 // pred_fallthru
            _
          %s345 = scalar_lea.vmem [#allocation3], 1
          %s346 = scalar_lea.vmem %s7, %s307
          %s347 = scalar_lea.sflag [#allocation7], 9
          // Predicated region
          $region131: #{tpu_custom_call.1} parent=39 // pred_check
            _
          $region132: #{tpu_custom_call.1} parent=39 // pred_check_branch
            %349 = sbr.rel target = $region134
          $region133: #{tpu_custom_call.1} parent=39 // pred_region
            // Predicated region
            $region146: #{tpu_custom_call.1} parent=133 // pred_check
              _
            $region147: #{tpu_custom_call.1} parent=133 // pred_check_branch
              %365 = sbr.rel (0) target = $region149
            $region148: #{tpu_custom_call.1} parent=133 // pred_region
              %s367 = ssub.s32 2, 1
              loop: start=0, step=1, limit=1
              $region150: #{tpu_custom_call.1} parent=148 // loop_pre_header
                _
              $region151: #{tpu_custom_call.1} parent=148 // loop_header
                %s369 = sphi 0, %s373
                %p370 = scmp.ge.s32.totalorder %s369, 1
                %s374 = sphi %s345, %s345
                %s375 = sphi %s346, %s346
              $region152: #{tpu_custom_call.1} parent=148 // loop_header_branch
                %372 = sbr.rel (%p370) target = $region156
              $region153: #{tpu_custom_call.1} parent=148 // loop_body
                %v376 = vld [vmem:[%s374] sm:%s367]
                %377 = vst [vmem:[%s375] sm:%s367] %v376
              $region154: #{tpu_custom_call.1} parent=148 // loop_footer
                %s373 = sadd.s32 1, %s369
              $region155: #{tpu_custom_call.1} parent=148 // loop_footer_branch
                %368 = sbr.rel target = $region151
              $region156: #{tpu_custom_call.1} parent=148 // loop_exit
                _
            $region149: #{tpu_custom_call.1} parent=133 // pred_fallthru
              _
          $region134: #{tpu_custom_call.1} parent=39 // pred_fallthru
            _
          // Predicated region
          $region135: #{tpu_custom_call.1} parent=39 // pred_check
            _
          $region136: #{tpu_custom_call.1} parent=39 // pred_check_branch
            %351 = sbr.rel (0) target = $region138
          $region137: #{tpu_custom_call.1} parent=39 // pred_region
            %s353 = ssub.s32 2, 1
            loop: start=0, step=1, limit=1
            $region139: #{tpu_custom_call.1} parent=137 // loop_pre_header
              _
            $region140: #{tpu_custom_call.1} parent=137 // loop_header
              %s355 = sphi 0, %s359
              %p356 = scmp.ge.s32.totalorder %s355, 1
              %s360 = sphi %s345, %s345
              %s361 = sphi %s346, %s346
            $region141: #{tpu_custom_call.1} parent=137 // loop_header_branch
              %358 = sbr.rel (%p356) target = $region145
            $region142: #{tpu_custom_call.1} parent=137 // loop_body
              %v362 = vld [vmem:[%s360] sm:%s353]
              %363 = vst [vmem:[%s361] sm:%s353] %v362
            $region143: #{tpu_custom_call.1} parent=137 // loop_footer
              %s359 = sadd.s32 1, %s355
            $region144: #{tpu_custom_call.1} parent=137 // loop_footer_branch
              %354 = sbr.rel target = $region140
            $region145: #{tpu_custom_call.1} parent=137 // loop_exit
              _
          $region138: #{tpu_custom_call.1} parent=39 // pred_fallthru
            _
          // Predicated region
          $region157: #{tpu_custom_call.1} parent=39 // pred_check
            _
          $region158: #{tpu_custom_call.1} parent=39 // pred_check_branch
            %380 = sbr.rel (0) target = $region160
          $region159: #{tpu_custom_call.1} parent=39 // pred_region
            %381 = vsyncadd %s347, 16
          $region160: #{tpu_custom_call.1} parent=39 // pred_fallthru
            _
          %s382 = sld [smem:[#allocation9 + $0x2]]
          %s383 = scalar_lea.vmem [#allocation2], 2
          %s384 = scalar_lea.vmem %s6, %s382
          %s385 = scalar_lea.sflag [#allocation7], 2
          // Predicated region
          $region161: #{tpu_custom_call.1} parent=39 // pred_check
            _
          $region162: #{tpu_custom_call.1} parent=39 // pred_check_branch
            %387 = sbr.rel target = $region164
          $region163: #{tpu_custom_call.1} parent=39 // pred_region
            // Predicated region
            $region176: #{tpu_custom_call.1} parent=163 // pred_check
              _
            $region177: #{tpu_custom_call.1} parent=163 // pred_check_branch
              %403 = sbr.rel (0) target = $region179
            $region178: #{tpu_custom_call.1} parent=163 // pred_region
              %s405 = ssub.s32 2, 1
              loop: start=0, step=1, limit=1
              $region180: #{tpu_custom_call.1} parent=178 // loop_pre_header
                _
              $region181: #{tpu_custom_call.1} parent=178 // loop_header
                %s407 = sphi 0, %s411
                %p408 = scmp.ge.s32.totalorder %s407, 1
                %s412 = sphi %s383, %s383
                %s413 = sphi %s384, %s384
              $region182: #{tpu_custom_call.1} parent=178 // loop_header_branch
                %410 = sbr.rel (%p408) target = $region186
              $region183: #{tpu_custom_call.1} parent=178 // loop_body
                %v414 = vld [vmem:[%s412] sm:%s405]
                %415 = vst [vmem:[%s413] sm:%s405] %v414
              $region184: #{tpu_custom_call.1} parent=178 // loop_footer
                %s411 = sadd.s32 1, %s407
              $region185: #{tpu_custom_call.1} parent=178 // loop_footer_branch
                %406 = sbr.rel target = $region181
              $region186: #{tpu_custom_call.1} parent=178 // loop_exit
                _
            $region179: #{tpu_custom_call.1} parent=163 // pred_fallthru
              _
          $region164: #{tpu_custom_call.1} parent=39 // pred_fallthru
            _
          // Predicated region
          $region165: #{tpu_custom_call.1} parent=39 // pred_check
            _
          $region166: #{tpu_custom_call.1} parent=39 // pred_check_branch
            %389 = sbr.rel (0) target = $region168
          $region167: #{tpu_custom_call.1} parent=39 // pred_region
            %s391 = ssub.s32 2, 1
            loop: start=0, step=1, limit=1
            $region169: #{tpu_custom_call.1} parent=167 // loop_pre_header
              _
            $region170: #{tpu_custom_call.1} parent=167 // loop_header
              %s393 = sphi 0, %s397
              %p394 = scmp.ge.s32.totalorder %s393, 1
              %s398 = sphi %s383, %s383
              %s399 = sphi %s384, %s384
            $region171: #{tpu_custom_call.1} parent=167 // loop_header_branch
              %396 = sbr.rel (%p394) target = $region175
            $region172: #{tpu_custom_call.1} parent=167 // loop_body
              %v400 = vld [vmem:[%s398] sm:%s391]
              %401 = vst [vmem:[%s399] sm:%s391] %v400
            $region173: #{tpu_custom_call.1} parent=167 // loop_footer
              %s397 = sadd.s32 1, %s393
            $region174: #{tpu_custom_call.1} parent=167 // loop_footer_branch
              %392 = sbr.rel target = $region170
            $region175: #{tpu_custom_call.1} parent=167 // loop_exit
              _
          $region168: #{tpu_custom_call.1} parent=39 // pred_fallthru
            _
          // Predicated region
          $region187: #{tpu_custom_call.1} parent=39 // pred_check
            _
          $region188: #{tpu_custom_call.1} parent=39 // pred_check_branch
            %418 = sbr.rel (0) target = $region190
          $region189: #{tpu_custom_call.1} parent=39 // pred_region
            %419 = vsyncadd %s385, 16
          $region190: #{tpu_custom_call.1} parent=39 // pred_fallthru
            _
          %s420 = scalar_lea.vmem [#allocation3], 2
          %s421 = scalar_lea.vmem %s7, %s382
          %s422 = scalar_lea.sflag [#allocation7], 10
          // Predicated region
          $region191: #{tpu_custom_call.1} parent=39 // pred_check
            _
          $region192: #{tpu_custom_call.1} parent=39 // pred_check_branch
            %424 = sbr.rel target = $region194
          $region193: #{tpu_custom_call.1} parent=39 // pred_region
            // Predicated region
            $region206: #{tpu_custom_call.1} parent=193 // pred_check
              _
            $region207: #{tpu_custom_call.1} parent=193 // pred_check_branch
              %440 = sbr.rel (0) target = $region209
            $region208: #{tpu_custom_call.1} parent=193 // pred_region
              %s442 = ssub.s32 2, 1
              loop: start=0, step=1, limit=1
              $region210: #{tpu_custom_call.1} parent=208 // loop_pre_header
                _
              $region211: #{tpu_custom_call.1} parent=208 // loop_header
                %s444 = sphi 0, %s448
                %p445 = scmp.ge.s32.totalorder %s444, 1
                %s449 = sphi %s420, %s420
                %s450 = sphi %s421, %s421
              $region212: #{tpu_custom_call.1} parent=208 // loop_header_branch
                %447 = sbr.rel (%p445) target = $region216
              $region213: #{tpu_custom_call.1} parent=208 // loop_body
                %v451 = vld [vmem:[%s449] sm:%s442]
                %452 = vst [vmem:[%s450] sm:%s442] %v451
              $region214: #{tpu_custom_call.1} parent=208 // loop_footer
                %s448 = sadd.s32 1, %s444
              $region215: #{tpu_custom_call.1} parent=208 // loop_footer_branch
                %443 = sbr.rel target = $region211
              $region216: #{tpu_custom_call.1} parent=208 // loop_exit
                _
            $region209: #{tpu_custom_call.1} parent=193 // pred_fallthru
              _
          $region194: #{tpu_custom_call.1} parent=39 // pred_fallthru
            _
          // Predicated region
          $region195: #{tpu_custom_call.1} parent=39 // pred_check
            _
          $region196: #{tpu_custom_call.1} parent=39 // pred_check_branch
            %426 = sbr.rel (0) target = $region198
          $region197: #{tpu_custom_call.1} parent=39 // pred_region
            %s428 = ssub.s32 2, 1
            loop: start=0, step=1, limit=1
            $region199: #{tpu_custom_call.1} parent=197 // loop_pre_header
              _
            $region200: #{tpu_custom_call.1} parent=197 // loop_header
              %s430 = sphi 0, %s434
              %p431 = scmp.ge.s32.totalorder %s430, 1
              %s435 = sphi %s420, %s420
              %s436 = sphi %s421, %s421
            $region201: #{tpu_custom_call.1} parent=197 // loop_header_branch
              %433 = sbr.rel (%p431) target = $region205
            $region202: #{tpu_custom_call.1} parent=197 // loop_body
              %v437 = vld [vmem:[%s435] sm:%s428]
              %438 = vst [vmem:[%s436] sm:%s428] %v437
            $region203: #{tpu_custom_call.1} parent=197 // loop_footer
              %s434 = sadd.s32 1, %s430
            $region204: #{tpu_custom_call.1} parent=197 // loop_footer_branch
              %429 = sbr.rel target = $region200
            $region205: #{tpu_custom_call.1} parent=197 // loop_exit
              _
          $region198: #{tpu_custom_call.1} parent=39 // pred_fallthru
            _
          // Predicated region
          $region217: #{tpu_custom_call.1} parent=39 // pred_check
            _
          $region218: #{tpu_custom_call.1} parent=39 // pred_check_branch
            %455 = sbr.rel (0) target = $region220
          $region219: #{tpu_custom_call.1} parent=39 // pred_region
            %456 = vsyncadd %s422, 16
          $region220: #{tpu_custom_call.1} parent=39 // pred_fallthru
            _
          %s457 = sld [smem:[#allocation9 + $0x3]]
          %s458 = scalar_lea.vmem [#allocation2], 3
          %s459 = scalar_lea.vmem %s6, %s457
          %s460 = scalar_lea.sflag [#allocation7], 3
          // Predicated region
          $region221: #{tpu_custom_call.1} parent=39 // pred_check
            _
          $region222: #{tpu_custom_call.1} parent=39 // pred_check_branch
            %462 = sbr.rel target = $region224
          $region223: #{tpu_custom_call.1} parent=39 // pred_region
            // Predicated region
            $region236: #{tpu_custom_call.1} parent=223 // pred_check
              _
            $region237: #{tpu_custom_call.1} parent=223 // pred_check_branch
              %478 = sbr.rel (0) target = $region239
            $region238: #{tpu_custom_call.1} parent=223 // pred_region
              %s480 = ssub.s32 2, 1
              loop: start=0, step=1, limit=1
              $region240: #{tpu_custom_call.1} parent=238 // loop_pre_header
                _
              $region241: #{tpu_custom_call.1} parent=238 // loop_header
                %s482 = sphi 0, %s486
                %p483 = scmp.ge.s32.totalorder %s482, 1
                %s487 = sphi %s458, %s458
                %s488 = sphi %s459, %s459
              $region242: #{tpu_custom_call.1} parent=238 // loop_header_branch
                %485 = sbr.rel (%p483) target = $region246
              $region243: #{tpu_custom_call.1} parent=238 // loop_body
                %v489 = vld [vmem:[%s487] sm:%s480]
                %490 = vst [vmem:[%s488] sm:%s480] %v489
              $region244: #{tpu_custom_call.1} parent=238 // loop_footer
                %s486 = sadd.s32 1, %s482
              $region245: #{tpu_custom_call.1} parent=238 // loop_footer_branch
                %481 = sbr.rel target = $region241
              $region246: #{tpu_custom_call.1} parent=238 // loop_exit
                _
            $region239: #{tpu_custom_call.1} parent=223 // pred_fallthru
              _
          $region224: #{tpu_custom_call.1} parent=39 // pred_fallthru
            _
          // Predicated region
          $region225: #{tpu_custom_call.1} parent=39 // pred_check
            _
          $region226: #{tpu_custom_call.1} parent=39 // pred_check_branch
            %464 = sbr.rel (0) target = $region228
          $region227: #{tpu_custom_call.1} parent=39 // pred_region
            %s466 = ssub.s32 2, 1
            loop: start=0, step=1, limit=1
            $region229: #{tpu_custom_call.1} parent=227 // loop_pre_header
              _
            $region230: #{tpu_custom_call.1} parent=227 // loop_header
              %s468 = sphi 0, %s472
              %p469 = scmp.ge.s32.totalorder %s468, 1
              %s473 = sphi %s458, %s458
              %s474 = sphi %s459, %s459
            $region231: #{tpu_custom_call.1} parent=227 // loop_header_branch
              %471 = sbr.rel (%p469) target = $region235
            $region232: #{tpu_custom_call.1} parent=227 // loop_body
              %v475 = vld [vmem:[%s473] sm:%s466]
              %476 = vst [vmem:[%s474] sm:%s466] %v475
            $region233: #{tpu_custom_call.1} parent=227 // loop_footer
              %s472 = sadd.s32 1, %s468
            $region234: #{tpu_custom_call.1} parent=227 // loop_footer_branch
              %467 = sbr.rel target = $region230
            $region235: #{tpu_custom_call.1} parent=227 // loop_exit
              _
          $region228: #{tpu_custom_call.1} parent=39 // pred_fallthru
            _
          // Predicated region
          $region247: #{tpu_custom_call.1} parent=39 // pred_check
            _
          $region248: #{tpu_custom_call.1} parent=39 // pred_check_branch
            %493 = sbr.rel (0) target = $region250
          $region249: #{tpu_custom_call.1} parent=39 // pred_region
            %494 = vsyncadd %s460, 16
          $region250: #{tpu_custom_call.1} parent=39 // pred_fallthru
            _
          %s495 = scalar_lea.vmem [#allocation3], 3
          %s496 = scalar_lea.vmem %s7, %s457
          %s497 = scalar_lea.sflag [#allocation7], 11
          // Predicated region
          $region251: #{tpu_custom_call.1} parent=39 // pred_check
            _
          $region252: #{tpu_custom_call.1} parent=39 // pred_check_branch
            %499 = sbr.rel target = $region254
          $region253: #{tpu_custom_call.1} parent=39 // pred_region
            // Predicated region
            $region266: #{tpu_custom_call.1} parent=253 // pred_check
              _
            $region267: #{tpu_custom_call.1} parent=253 // pred_check_branch
              %515 = sbr.rel (0) target = $region269
            $region268: #{tpu_custom_call.1} parent=253 // pred_region
              %s517 = ssub.s32 2, 1
              loop: start=0, step=1, limit=1
              $region270: #{tpu_custom_call.1} parent=268 // loop_pre_header
                _
              $region271: #{tpu_custom_call.1} parent=268 // loop_header
                %s519 = sphi 0, %s523
                %p520 = scmp.ge.s32.totalorder %s519, 1
                %s524 = sphi %s495, %s495
                %s525 = sphi %s496, %s496
              $region272: #{tpu_custom_call.1} parent=268 // loop_header_branch
                %522 = sbr.rel (%p520) target = $region276
              $region273: #{tpu_custom_call.1} parent=268 // loop_body
                %v526 = vld [vmem:[%s524] sm:%s517]
                %527 = vst [vmem:[%s525] sm:%s517] %v526
              $region274: #{tpu_custom_call.1} parent=268 // loop_footer
                %s523 = sadd.s32 1, %s519
              $region275: #{tpu_custom_call.1} parent=268 // loop_footer_branch
                %518 = sbr.rel target = $region271
              $region276: #{tpu_custom_call.1} parent=268 // loop_exit
                _
            $region269: #{tpu_custom_call.1} parent=253 // pred_fallthru
              _
          $region254: #{tpu_custom_call.1} parent=39 // pred_fallthru
            _
          // Predicated region
          $region255: #{tpu_custom_call.1} parent=39 // pred_check
            _
          $region256: #{tpu_custom_call.1} parent=39 // pred_check_branch
            %501 = sbr.rel (0) target = $region258
          $region257: #{tpu_custom_call.1} parent=39 // pred_region
            %s503 = ssub.s32 2, 1
            loop: start=0, step=1, limit=1
            $region259: #{tpu_custom_call.1} parent=257 // loop_pre_header
              _
            $region260: #{tpu_custom_call.1} parent=257 // loop_header
              %s505 = sphi 0, %s509
              %p506 = scmp.ge.s32.totalorder %s505, 1
              %s510 = sphi %s495, %s495
              %s511 = sphi %s496, %s496
            $region261: #{tpu_custom_call.1} parent=257 // loop_header_branch
              %508 = sbr.rel (%p506) target = $region265
            $region262: #{tpu_custom_call.1} parent=257 // loop_body
              %v512 = vld [vmem:[%s510] sm:%s503]
              %513 = vst [vmem:[%s511] sm:%s503] %v512
            $region263: #{tpu_custom_call.1} parent=257 // loop_footer
              %s509 = sadd.s32 1, %s505
            $region264: #{tpu_custom_call.1} parent=257 // loop_footer_branch
              %504 = sbr.rel target = $region260
            $region265: #{tpu_custom_call.1} parent=257 // loop_exit
              _
          $region258: #{tpu_custom_call.1} parent=39 // pred_fallthru
            _
          // Predicated region
          $region277: #{tpu_custom_call.1} parent=39 // pred_check
            _
          $region278: #{tpu_custom_call.1} parent=39 // pred_check_branch
            %530 = sbr.rel (0) target = $region280
          $region279: #{tpu_custom_call.1} parent=39 // pred_region
            %531 = vsyncadd %s497, 16
          $region280: #{tpu_custom_call.1} parent=39 // pred_fallthru
            _
          %s532 = sld [smem:[#allocation9 + $0x4]]
          %s533 = scalar_lea.vmem [#allocation2], 4
          %s534 = scalar_lea.vmem %s6, %s532
          %s535 = scalar_lea.sflag [#allocation7], 4
          // Predicated region
          $region281: #{tpu_custom_call.1} parent=39 // pred_check
            _
          $region282: #{tpu_custom_call.1} parent=39 // pred_check_branch
            %537 = sbr.rel target = $region284
          $region283: #{tpu_custom_call.1} parent=39 // pred_region
            // Predicated region
            $region296: #{tpu_custom_call.1} parent=283 // pred_check
              _
            $region297: #{tpu_custom_call.1} parent=283 // pred_check_branch
              %553 = sbr.rel (0) target = $region299
            $region298: #{tpu_custom_call.1} parent=283 // pred_region
              %s555 = ssub.s32 2, 1
              loop: start=0, step=1, limit=1
              $region300: #{tpu_custom_call.1} parent=298 // loop_pre_header
                _
              $region301: #{tpu_custom_call.1} parent=298 // loop_header
                %s557 = sphi 0, %s561
                %p558 = scmp.ge.s32.totalorder %s557, 1
                %s562 = sphi %s533, %s533
                %s563 = sphi %s534, %s534
              $region302: #{tpu_custom_call.1} parent=298 // loop_header_branch
                %560 = sbr.rel (%p558) target = $region306
              $region303: #{tpu_custom_call.1} parent=298 // loop_body
                %v564 = vld [vmem:[%s562] sm:%s555]
                %565 = vst [vmem:[%s563] sm:%s555] %v564
              $region304: #{tpu_custom_call.1} parent=298 // loop_footer
                %s561 = sadd.s32 1, %s557
              $region305: #{tpu_custom_call.1} parent=298 // loop_footer_branch
                %556 = sbr.rel target = $region301
              $region306: #{tpu_custom_call.1} parent=298 // loop_exit
                _
            $region299: #{tpu_custom_call.1} parent=283 // pred_fallthru
              _
          $region284: #{tpu_custom_call.1} parent=39 // pred_fallthru
            _
          // Predicated region
          $region285: #{tpu_custom_call.1} parent=39 // pred_check
            _
          $region286: #{tpu_custom_call.1} parent=39 // pred_check_branch
            %539 = sbr.rel (0) target = $region288
          $region287: #{tpu_custom_call.1} parent=39 // pred_region
            %s541 = ssub.s32 2, 1
            loop: start=0, step=1, limit=1
            $region289: #{tpu_custom_call.1} parent=287 // loop_pre_header
              _
            $region290: #{tpu_custom_call.1} parent=287 // loop_header
              %s543 = sphi 0, %s547
              %p544 = scmp.ge.s32.totalorder %s543, 1
              %s548 = sphi %s533, %s533
              %s549 = sphi %s534, %s534
            $region291: #{tpu_custom_call.1} parent=287 // loop_header_branch
              %546 = sbr.rel (%p544) target = $region295
            $region292: #{tpu_custom_call.1} parent=287 // loop_body
              %v550 = vld [vmem:[%s548] sm:%s541]
              %551 = vst [vmem:[%s549] sm:%s541] %v550
            $region293: #{tpu_custom_call.1} parent=287 // loop_footer
              %s547 = sadd.s32 1, %s543
            $region294: #{tpu_custom_call.1} parent=287 // loop_footer_branch
              %542 = sbr.rel target = $region290
            $region295: #{tpu_custom_call.1} parent=287 // loop_exit
              _
          $region288: #{tpu_custom_call.1} parent=39 // pred_fallthru
            _
          // Predicated region
          $region307: #{tpu_custom_call.1} parent=39 // pred_check
            _
          $region308: #{tpu_custom_call.1} parent=39 // pred_check_branch
            %568 = sbr.rel (0) target = $region310
          $region309: #{tpu_custom_call.1} parent=39 // pred_region
            %569 = vsyncadd %s535, 16
          $region310: #{tpu_custom_call.1} parent=39 // pred_fallthru
            _
          %s570 = scalar_lea.vmem [#allocation3], 4
          %s571 = scalar_lea.vmem %s7, %s532
          %s572 = scalar_lea.sflag [#allocation7], 12
          // Predicated region
          $region311: #{tpu_custom_call.1} parent=39 // pred_check
            _
          $region312: #{tpu_custom_call.1} parent=39 // pred_check_branch
            %574 = sbr.rel target = $region314
          $region313: #{tpu_custom_call.1} parent=39 // pred_region
            // Predicated region
            $region326: #{tpu_custom_call.1} parent=313 // pred_check
              _
            $region327: #{tpu_custom_call.1} parent=313 // pred_check_branch
              %590 = sbr.rel (0) target = $region329
            $region328: #{tpu_custom_call.1} parent=313 // pred_region
              %s592 = ssub.s32 2, 1
              loop: start=0, step=1, limit=1
              $region330: #{tpu_custom_call.1} parent=328 // loop_pre_header
                _
              $region331: #{tpu_custom_call.1} parent=328 // loop_header
                %s594 = sphi 0, %s598
                %p595 = scmp.ge.s32.totalorder %s594, 1
                %s599 = sphi %s570, %s570
                %s600 = sphi %s571, %s571
              $region332: #{tpu_custom_call.1} parent=328 // loop_header_branch
                %597 = sbr.rel (%p595) target = $region336
              $region333: #{tpu_custom_call.1} parent=328 // loop_body
                %v601 = vld [vmem:[%s599] sm:%s592]
                %602 = vst [vmem:[%s600] sm:%s592] %v601
              $region334: #{tpu_custom_call.1} parent=328 // loop_footer
                %s598 = sadd.s32 1, %s594
              $region335: #{tpu_custom_call.1} parent=328 // loop_footer_branch
                %593 = sbr.rel target = $region331
              $region336: #{tpu_custom_call.1} parent=328 // loop_exit
                _
            $region329: #{tpu_custom_call.1} parent=313 // pred_fallthru
              _
          $region314: #{tpu_custom_call.1} parent=39 // pred_fallthru
            _
          // Predicated region
          $region315: #{tpu_custom_call.1} parent=39 // pred_check
            _
          $region316: #{tpu_custom_call.1} parent=39 // pred_check_branch
            %576 = sbr.rel (0) target = $region318
          $region317: #{tpu_custom_call.1} parent=39 // pred_region
            %s578 = ssub.s32 2, 1
            loop: start=0, step=1, limit=1
            $region319: #{tpu_custom_call.1} parent=317 // loop_pre_header
              _
            $region320: #{tpu_custom_call.1} parent=317 // loop_header
              %s580 = sphi 0, %s584
              %p581 = scmp.ge.s32.totalorder %s580, 1
              %s585 = sphi %s570, %s570
              %s586 = sphi %s571, %s571
            $region321: #{tpu_custom_call.1} parent=317 // loop_header_branch
              %583 = sbr.rel (%p581) target = $region325
            $region322: #{tpu_custom_call.1} parent=317 // loop_body
              %v587 = vld [vmem:[%s585] sm:%s578]
              %588 = vst [vmem:[%s586] sm:%s578] %v587
            $region323: #{tpu_custom_call.1} parent=317 // loop_footer
              %s584 = sadd.s32 1, %s580
            $region324: #{tpu_custom_call.1} parent=317 // loop_footer_branch
              %579 = sbr.rel target = $region320
            $region325: #{tpu_custom_call.1} parent=317 // loop_exit
              _
          $region318: #{tpu_custom_call.1} parent=39 // pred_fallthru
            _
          // Predicated region
          $region337: #{tpu_custom_call.1} parent=39 // pred_check
            _
          $region338: #{tpu_custom_call.1} parent=39 // pred_check_branch
            %605 = sbr.rel (0) target = $region340
          $region339: #{tpu_custom_call.1} parent=39 // pred_region
            %606 = vsyncadd %s572, 16
          $region340: #{tpu_custom_call.1} parent=39 // pred_fallthru
            _
          %s607 = sld [smem:[#allocation9 + $0x5]]
          %s608 = scalar_lea.vmem [#allocation2], 5
          %s609 = scalar_lea.vmem %s6, %s607
          %s610 = scalar_lea.sflag [#allocation7], 5
          // Predicated region
          $region341: #{tpu_custom_call.1} parent=39 // pred_check
            _
          $region342: #{tpu_custom_call.1} parent=39 // pred_check_branch
            %612 = sbr.rel target = $region344
          $region343: #{tpu_custom_call.1} parent=39 // pred_region
            // Predicated region
            $region356: #{tpu_custom_call.1} parent=343 // pred_check
              _
            $region357: #{tpu_custom_call.1} parent=343 // pred_check_branch
              %628 = sbr.rel (0) target = $region359
            $region358: #{tpu_custom_call.1} parent=343 // pred_region
              %s630 = ssub.s32 2, 1
              loop: start=0, step=1, limit=1
              $region360: #{tpu_custom_call.1} parent=358 // loop_pre_header
                _
              $region361: #{tpu_custom_call.1} parent=358 // loop_header
                %s632 = sphi 0, %s636
                %p633 = scmp.ge.s32.totalorder %s632, 1
                %s637 = sphi %s608, %s608
                %s638 = sphi %s609, %s609
              $region362: #{tpu_custom_call.1} parent=358 // loop_header_branch
                %635 = sbr.rel (%p633) target = $region366
              $region363: #{tpu_custom_call.1} parent=358 // loop_body
                %v639 = vld [vmem:[%s637] sm:%s630]
                %640 = vst [vmem:[%s638] sm:%s630] %v639
              $region364: #{tpu_custom_call.1} parent=358 // loop_footer
                %s636 = sadd.s32 1, %s632
              $region365: #{tpu_custom_call.1} parent=358 // loop_footer_branch
                %631 = sbr.rel target = $region361
              $region366: #{tpu_custom_call.1} parent=358 // loop_exit
                _
            $region359: #{tpu_custom_call.1} parent=343 // pred_fallthru
              _
          $region344: #{tpu_custom_call.1} parent=39 // pred_fallthru
            _
          // Predicated region
          $region345: #{tpu_custom_call.1} parent=39 // pred_check
            _
          $region346: #{tpu_custom_call.1} parent=39 // pred_check_branch
            %614 = sbr.rel (0) target = $region348
          $region347: #{tpu_custom_call.1} parent=39 // pred_region
            %s616 = ssub.s32 2, 1
            loop: start=0, step=1, limit=1
            $region349: #{tpu_custom_call.1} parent=347 // loop_pre_header
              _
            $region350: #{tpu_custom_call.1} parent=347 // loop_header
              %s618 = sphi 0, %s622
              %p619 = scmp.ge.s32.totalorder %s618, 1
              %s623 = sphi %s608, %s608
              %s624 = sphi %s609, %s609
            $region351: #{tpu_custom_call.1} parent=347 // loop_header_branch
              %621 = sbr.rel (%p619) target = $region355
            $region352: #{tpu_custom_call.1} parent=347 // loop_body
              %v625 = vld [vmem:[%s623] sm:%s616]
              %626 = vst [vmem:[%s624] sm:%s616] %v625
            $region353: #{tpu_custom_call.1} parent=347 // loop_footer
              %s622 = sadd.s32 1, %s618
            $region354: #{tpu_custom_call.1} parent=347 // loop_footer_branch
              %617 = sbr.rel target = $region350
            $region355: #{tpu_custom_call.1} parent=347 // loop_exit
              _
          $region348: #{tpu_custom_call.1} parent=39 // pred_fallthru
            _
          // Predicated region
          $region367: #{tpu_custom_call.1} parent=39 // pred_check
            _
          $region368: #{tpu_custom_call.1} parent=39 // pred_check_branch
            %643 = sbr.rel (0) target = $region370
          $region369: #{tpu_custom_call.1} parent=39 // pred_region
            %644 = vsyncadd %s610, 16
          $region370: #{tpu_custom_call.1} parent=39 // pred_fallthru
            _
          %s645 = scalar_lea.vmem [#allocation3], 5
          %s646 = scalar_lea.vmem %s7, %s607
          %s647 = scalar_lea.sflag [#allocation7], 13
          // Predicated region
          $region371: #{tpu_custom_call.1} parent=39 // pred_check
            _
          $region372: #{tpu_custom_call.1} parent=39 // pred_check_branch
            %649 = sbr.rel target = $region374
          $region373: #{tpu_custom_call.1} parent=39 // pred_region
            // Predicated region
            $region386: #{tpu_custom_call.1} parent=373 // pred_check
              _
            $region387: #{tpu_custom_call.1} parent=373 // pred_check_branch
              %665 = sbr.rel (0) target = $region389
            $region388: #{tpu_custom_call.1} parent=373 // pred_region
              %s667 = ssub.s32 2, 1
              loop: start=0, step=1, limit=1
              $region390: #{tpu_custom_call.1} parent=388 // loop_pre_header
                _
              $region391: #{tpu_custom_call.1} parent=388 // loop_header
                %s669 = sphi 0, %s673
                %p670 = scmp.ge.s32.totalorder %s669, 1
                %s674 = sphi %s645, %s645
                %s675 = sphi %s646, %s646
              $region392: #{tpu_custom_call.1} parent=388 // loop_header_branch
                %672 = sbr.rel (%p670) target = $region396
              $region393: #{tpu_custom_call.1} parent=388 // loop_body
                %v676 = vld [vmem:[%s674] sm:%s667]
                %677 = vst [vmem:[%s675] sm:%s667] %v676
              $region394: #{tpu_custom_call.1} parent=388 // loop_footer
                %s673 = sadd.s32 1, %s669
              $region395: #{tpu_custom_call.1} parent=388 // loop_footer_branch
                %668 = sbr.rel target = $region391
              $region396: #{tpu_custom_call.1} parent=388 // loop_exit
                _
            $region389: #{tpu_custom_call.1} parent=373 // pred_fallthru
              _
          $region374: #{tpu_custom_call.1} parent=39 // pred_fallthru
            _
          // Predicated region
          $region375: #{tpu_custom_call.1} parent=39 // pred_check
            _
          $region376: #{tpu_custom_call.1} parent=39 // pred_check_branch
            %651 = sbr.rel (0) target = $region378
          $region377: #{tpu_custom_call.1} parent=39 // pred_region
            %s653 = ssub.s32 2, 1
            loop: start=0, step=1, limit=1
            $region379: #{tpu_custom_call.1} parent=377 // loop_pre_header
              _
            $region380: #{tpu_custom_call.1} parent=377 // loop_header
              %s655 = sphi 0, %s659
              %p656 = scmp.ge.s32.totalorder %s655, 1
              %s660 = sphi %s645, %s645
              %s661 = sphi %s646, %s646
            $region381: #{tpu_custom_call.1} parent=377 // loop_header_branch
              %658 = sbr.rel (%p656) target = $region385
            $region382: #{tpu_custom_call.1} parent=377 // loop_body
              %v662 = vld [vmem:[%s660] sm:%s653]
              %663 = vst [vmem:[%s661] sm:%s653] %v662
            $region383: #{tpu_custom_call.1} parent=377 // loop_footer
              %s659 = sadd.s32 1, %s655
            $region384: #{tpu_custom_call.1} parent=377 // loop_footer_branch
              %654 = sbr.rel target = $region380
            $region385: #{tpu_custom_call.1} parent=377 // loop_exit
              _
          $region378: #{tpu_custom_call.1} parent=39 // pred_fallthru
            _
          // Predicated region
          $region397: #{tpu_custom_call.1} parent=39 // pred_check
            _
          $region398: #{tpu_custom_call.1} parent=39 // pred_check_branch
            %680 = sbr.rel (0) target = $region400
          $region399: #{tpu_custom_call.1} parent=39 // pred_region
            %681 = vsyncadd %s647, 16
          $region400: #{tpu_custom_call.1} parent=39 // pred_fallthru
            _
          %s682 = sld [smem:[#allocation9 + $0x6]]
          %s683 = scalar_lea.vmem [#allocation2], 6
          %s684 = scalar_lea.vmem %s6, %s682
          %s685 = scalar_lea.sflag [#allocation7], 6
          // Predicated region
          $region401: #{tpu_custom_call.1} parent=39 // pred_check
            _
          $region402: #{tpu_custom_call.1} parent=39 // pred_check_branch
            %687 = sbr.rel target = $region404
          $region403: #{tpu_custom_call.1} parent=39 // pred_region
            // Predicated region
            $region416: #{tpu_custom_call.1} parent=403 // pred_check
              _
            $region417: #{tpu_custom_call.1} parent=403 // pred_check_branch
              %703 = sbr.rel (0) target = $region419
            $region418: #{tpu_custom_call.1} parent=403 // pred_region
              %s705 = ssub.s32 2, 1
              loop: start=0, step=1, limit=1
              $region420: #{tpu_custom_call.1} parent=418 // loop_pre_header
                _
              $region421: #{tpu_custom_call.1} parent=418 // loop_header
                %s707 = sphi 0, %s711
                %p708 = scmp.ge.s32.totalorder %s707, 1
                %s712 = sphi %s683, %s683
                %s713 = sphi %s684, %s684
              $region422: #{tpu_custom_call.1} parent=418 // loop_header_branch
                %710 = sbr.rel (%p708) target = $region426
              $region423: #{tpu_custom_call.1} parent=418 // loop_body
                %v714 = vld [vmem:[%s712] sm:%s705]
                %715 = vst [vmem:[%s713] sm:%s705] %v714
              $region424: #{tpu_custom_call.1} parent=418 // loop_footer
                %s711 = sadd.s32 1, %s707
              $region425: #{tpu_custom_call.1} parent=418 // loop_footer_branch
                %706 = sbr.rel target = $region421
              $region426: #{tpu_custom_call.1} parent=418 // loop_exit
                _
            $region419: #{tpu_custom_call.1} parent=403 // pred_fallthru
              _
          $region404: #{tpu_custom_call.1} parent=39 // pred_fallthru
            _
          // Predicated region
          $region405: #{tpu_custom_call.1} parent=39 // pred_check
            _
          $region406: #{tpu_custom_call.1} parent=39 // pred_check_branch
            %689 = sbr.rel (0) target = $region408
          $region407: #{tpu_custom_call.1} parent=39 // pred_region
            %s691 = ssub.s32 2, 1
            loop: start=0, step=1, limit=1
            $region409: #{tpu_custom_call.1} parent=407 // loop_pre_header
              _
            $region410: #{tpu_custom_call.1} parent=407 // loop_header
              %s693 = sphi 0, %s697
              %p694 = scmp.ge.s32.totalorder %s693, 1
              %s698 = sphi %s683, %s683
              %s699 = sphi %s684, %s684
            $region411: #{tpu_custom_call.1} parent=407 // loop_header_branch
              %696 = sbr.rel (%p694) target = $region415
            $region412: #{tpu_custom_call.1} parent=407 // loop_body
              %v700 = vld [vmem:[%s698] sm:%s691]
              %701 = vst [vmem:[%s699] sm:%s691] %v700
            $region413: #{tpu_custom_call.1} parent=407 // loop_footer
              %s697 = sadd.s32 1, %s693
            $region414: #{tpu_custom_call.1} parent=407 // loop_footer_branch
              %692 = sbr.rel target = $region410
            $region415: #{tpu_custom_call.1} parent=407 // loop_exit
              _
          $region408: #{tpu_custom_call.1} parent=39 // pred_fallthru
            _
          // Predicated region
          $region427: #{tpu_custom_call.1} parent=39 // pred_check
            _
          $region428: #{tpu_custom_call.1} parent=39 // pred_check_branch
            %718 = sbr.rel (0) target = $region430
          $region429: #{tpu_custom_call.1} parent=39 // pred_region
            %719 = vsyncadd %s685, 16
          $region430: #{tpu_custom_call.1} parent=39 // pred_fallthru
            _
          %s720 = scalar_lea.vmem [#allocation3], 6
          %s721 = scalar_lea.vmem %s7, %s682
          %s722 = scalar_lea.sflag [#allocation7], 14
          // Predicated region
          $region431: #{tpu_custom_call.1} parent=39 // pred_check
            _
          $region432: #{tpu_custom_call.1} parent=39 // pred_check_branch
            %724 = sbr.rel target = $region434
          $region433: #{tpu_custom_call.1} parent=39 // pred_region
            // Predicated region
            $region446: #{tpu_custom_call.1} parent=433 // pred_check
              _
            $region447: #{tpu_custom_call.1} parent=433 // pred_check_branch
              %740 = sbr.rel (0) target = $region449
            $region448: #{tpu_custom_call.1} parent=433 // pred_region
              %s742 = ssub.s32 2, 1
              loop: start=0, step=1, limit=1
              $region450: #{tpu_custom_call.1} parent=448 // loop_pre_header
                _
              $region451: #{tpu_custom_call.1} parent=448 // loop_header
                %s744 = sphi 0, %s748
                %p745 = scmp.ge.s32.totalorder %s744, 1
                %s749 = sphi %s720, %s720
                %s750 = sphi %s721, %s721
              $region452: #{tpu_custom_call.1} parent=448 // loop_header_branch
                %747 = sbr.rel (%p745) target = $region456
              $region453: #{tpu_custom_call.1} parent=448 // loop_body
                %v751 = vld [vmem:[%s749] sm:%s742]
                %752 = vst [vmem:[%s750] sm:%s742] %v751
              $region454: #{tpu_custom_call.1} parent=448 // loop_footer
                %s748 = sadd.s32 1, %s744
              $region455: #{tpu_custom_call.1} parent=448 // loop_footer_branch
                %743 = sbr.rel target = $region451
              $region456: #{tpu_custom_call.1} parent=448 // loop_exit
                _
            $region449: #{tpu_custom_call.1} parent=433 // pred_fallthru
              _
          $region434: #{tpu_custom_call.1} parent=39 // pred_fallthru
            _
          // Predicated region
          $region435: #{tpu_custom_call.1} parent=39 // pred_check
            _
          $region436: #{tpu_custom_call.1} parent=39 // pred_check_branch
            %726 = sbr.rel (0) target = $region438
          $region437: #{tpu_custom_call.1} parent=39 // pred_region
            %s728 = ssub.s32 2, 1
            loop: start=0, step=1, limit=1
            $region439: #{tpu_custom_call.1} parent=437 // loop_pre_header
              _
            $region440: #{tpu_custom_call.1} parent=437 // loop_header
              %s730 = sphi 0, %s734
              %p731 = scmp.ge.s32.totalorder %s730, 1
              %s735 = sphi %s720, %s720
              %s736 = sphi %s721, %s721
            $region441: #{tpu_custom_call.1} parent=437 // loop_header_branch
              %733 = sbr.rel (%p731) target = $region445
            $region442: #{tpu_custom_call.1} parent=437 // loop_body
              %v737 = vld [vmem:[%s735] sm:%s728]
              %738 = vst [vmem:[%s736] sm:%s728] %v737
            $region443: #{tpu_custom_call.1} parent=437 // loop_footer
              %s734 = sadd.s32 1, %s730
            $region444: #{tpu_custom_call.1} parent=437 // loop_footer_branch
              %729 = sbr.rel target = $region440
            $region445: #{tpu_custom_call.1} parent=437 // loop_exit
              _
          $region438: #{tpu_custom_call.1} parent=39 // pred_fallthru
            _
          // Predicated region
          $region457: #{tpu_custom_call.1} parent=39 // pred_check
            _
          $region458: #{tpu_custom_call.1} parent=39 // pred_check_branch
            %755 = sbr.rel (0) target = $region460
          $region459: #{tpu_custom_call.1} parent=39 // pred_region
            %756 = vsyncadd %s722, 16
          $region460: #{tpu_custom_call.1} parent=39 // pred_fallthru
            _
          %s757 = sld [smem:[#allocation9 + $0x7]]
          %s758 = scalar_lea.vmem [#allocation2], 7
          %s759 = scalar_lea.vmem %s6, %s757
          %s760 = scalar_lea.sflag [#allocation7], 7
          // Predicated region
          $region461: #{tpu_custom_call.1} parent=39 // pred_check
            _
          $region462: #{tpu_custom_call.1} parent=39 // pred_check_branch
            %762 = sbr.rel target = $region464
          $region463: #{tpu_custom_call.1} parent=39 // pred_region
            // Predicated region
            $region476: #{tpu_custom_call.1} parent=463 // pred_check
              _
            $region477: #{tpu_custom_call.1} parent=463 // pred_check_branch
              %778 = sbr.rel (0) target = $region479
            $region478: #{tpu_custom_call.1} parent=463 // pred_region
              %s780 = ssub.s32 2, 1
              loop: start=0, step=1, limit=1
              $region480: #{tpu_custom_call.1} parent=478 // loop_pre_header
                _
              $region481: #{tpu_custom_call.1} parent=478 // loop_header
                %s782 = sphi 0, %s786
                %p783 = scmp.ge.s32.totalorder %s782, 1
                %s787 = sphi %s758, %s758
                %s788 = sphi %s759, %s759
              $region482: #{tpu_custom_call.1} parent=478 // loop_header_branch
                %785 = sbr.rel (%p783) target = $region486
              $region483: #{tpu_custom_call.1} parent=478 // loop_body
                %v789 = vld [vmem:[%s787] sm:%s780]
                %790 = vst [vmem:[%s788] sm:%s780] %v789
              $region484: #{tpu_custom_call.1} parent=478 // loop_footer
                %s786 = sadd.s32 1, %s782
              $region485: #{tpu_custom_call.1} parent=478 // loop_footer_branch
                %781 = sbr.rel target = $region481
              $region486: #{tpu_custom_call.1} parent=478 // loop_exit
                _
            $region479: #{tpu_custom_call.1} parent=463 // pred_fallthru
              _
          $region464: #{tpu_custom_call.1} parent=39 // pred_fallthru
            _
          // Predicated region
          $region465: #{tpu_custom_call.1} parent=39 // pred_check
            _
          $region466: #{tpu_custom_call.1} parent=39 // pred_check_branch
            %764 = sbr.rel (0) target = $region468
          $region467: #{tpu_custom_call.1} parent=39 // pred_region
            %s766 = ssub.s32 2, 1
            loop: start=0, step=1, limit=1
            $region469: #{tpu_custom_call.1} parent=467 // loop_pre_header
              _
            $region470: #{tpu_custom_call.1} parent=467 // loop_header
              %s768 = sphi 0, %s772
              %p769 = scmp.ge.s32.totalorder %s768, 1
              %s773 = sphi %s758, %s758
              %s774 = sphi %s759, %s759
            $region471: #{tpu_custom_call.1} parent=467 // loop_header_branch
              %771 = sbr.rel (%p769) target = $region475
            $region472: #{tpu_custom_call.1} parent=467 // loop_body
              %v775 = vld [vmem:[%s773] sm:%s766]
              %776 = vst [vmem:[%s774] sm:%s766] %v775
            $region473: #{tpu_custom_call.1} parent=467 // loop_footer
              %s772 = sadd.s32 1, %s768
            $region474: #{tpu_custom_call.1} parent=467 // loop_footer_branch
              %767 = sbr.rel target = $region470
            $region475: #{tpu_custom_call.1} parent=467 // loop_exit
              _
          $region468: #{tpu_custom_call.1} parent=39 // pred_fallthru
            _
          // Predicated region
          $region487: #{tpu_custom_call.1} parent=39 // pred_check
            _
          $region488: #{tpu_custom_call.1} parent=39 // pred_check_branch
            %793 = sbr.rel (0) target = $region490
          $region489: #{tpu_custom_call.1} parent=39 // pred_region
            %794 = vsyncadd %s760, 16
          $region490: #{tpu_custom_call.1} parent=39 // pred_fallthru
            _
          %s795 = scalar_lea.vmem [#allocation3], 7
          %s796 = scalar_lea.vmem %s7, %s757
          %s797 = scalar_lea.sflag [#allocation7], 15
          // Predicated region
          $region491: #{tpu_custom_call.1} parent=39 // pred_check
            _
          $region492: #{tpu_custom_call.1} parent=39 // pred_check_branch
            %799 = sbr.rel target = $region494
          $region493: #{tpu_custom_call.1} parent=39 // pred_region
            // Predicated region
            $region506: #{tpu_custom_call.1} parent=493 // pred_check
              _
            $region507: #{tpu_custom_call.1} parent=493 // pred_check_branch
              %815 = sbr.rel (0) target = $region509
            $region508: #{tpu_custom_call.1} parent=493 // pred_region
              %s817 = ssub.s32 2, 1
              loop: start=0, step=1, limit=1
              $region510: #{tpu_custom_call.1} parent=508 // loop_pre_header
                _
              $region511: #{tpu_custom_call.1} parent=508 // loop_header
                %s819 = sphi 0, %s823
                %p820 = scmp.ge.s32.totalorder %s819, 1
                %s824 = sphi %s795, %s795
                %s825 = sphi %s796, %s796
              $region512: #{tpu_custom_call.1} parent=508 // loop_header_branch
                %822 = sbr.rel (%p820) target = $region516
              $region513: #{tpu_custom_call.1} parent=508 // loop_body
                %v826 = vld [vmem:[%s824] sm:%s817]
                %827 = vst [vmem:[%s825] sm:%s817] %v826
              $region514: #{tpu_custom_call.1} parent=508 // loop_footer
                %s823 = sadd.s32 1, %s819
              $region515: #{tpu_custom_call.1} parent=508 // loop_footer_branch
                %818 = sbr.rel target = $region511
              $region516: #{tpu_custom_call.1} parent=508 // loop_exit
                _
            $region509: #{tpu_custom_call.1} parent=493 // pred_fallthru
              _
          $region494: #{tpu_custom_call.1} parent=39 // pred_fallthru
            _
          // Predicated region
          $region495: #{tpu_custom_call.1} parent=39 // pred_check
            _
          $region496: #{tpu_custom_call.1} parent=39 // pred_check_branch
            %801 = sbr.rel (0) target = $region498
          $region497: #{tpu_custom_call.1} parent=39 // pred_region
            %s803 = ssub.s32 2, 1
            loop: start=0, step=1, limit=1
            $region499: #{tpu_custom_call.1} parent=497 // loop_pre_header
              _
            $region500: #{tpu_custom_call.1} parent=497 // loop_header
              %s805 = sphi 0, %s809
              %p806 = scmp.ge.s32.totalorder %s805, 1
              %s810 = sphi %s795, %s795
              %s811 = sphi %s796, %s796
            $region501: #{tpu_custom_call.1} parent=497 // loop_header_branch
              %808 = sbr.rel (%p806) target = $region505
            $region502: #{tpu_custom_call.1} parent=497 // loop_body
              %v812 = vld [vmem:[%s810] sm:%s803]
              %813 = vst [vmem:[%s811] sm:%s803] %v812
            $region503: #{tpu_custom_call.1} parent=497 // loop_footer
              %s809 = sadd.s32 1, %s805
            $region504: #{tpu_custom_call.1} parent=497 // loop_footer_branch
              %804 = sbr.rel target = $region500
            $region505: #{tpu_custom_call.1} parent=497 // loop_exit
              _
          $region498: #{tpu_custom_call.1} parent=39 // pred_fallthru
            _
          // Predicated region
          $region517: #{tpu_custom_call.1} parent=39 // pred_check
            _
          $region518: #{tpu_custom_call.1} parent=39 // pred_check_branch
            %830 = sbr.rel (0) target = $region520
          $region519: #{tpu_custom_call.1} parent=39 // pred_region
            %831 = vsyncadd %s797, 16
          $region520: #{tpu_custom_call.1} parent=39 // pred_fallthru
            _
          %s832 = sld [smem:[#allocation9]]
          %s833 = smul.u32 1, 1
          %s834 = sshll.u32 %s833, 4
          %835 = dma.done [#allocation7], %s834
          %s836 = sshll.u32 %s833, 4
          %837 = dma.done %s272, %s836
          %s838 = sld [smem:[#allocation9 + $0x1]]
          %s839 = sshll.u32 %s833, 4
          %840 = dma.done %s310, %s839
          %s841 = sshll.u32 %s833, 4
          %842 = dma.done %s347, %s841
          %s843 = sld [smem:[#allocation9 + $0x2]]
          %s844 = sshll.u32 %s833, 4
          %845 = dma.done %s385, %s844
          %s846 = sshll.u32 %s833, 4
          %847 = dma.done %s422, %s846
          %s848 = sld [smem:[#allocation9 + $0x3]]
          %s849 = sshll.u32 %s833, 4
          %850 = dma.done %s460, %s849
          %s851 = sshll.u32 %s833, 4
          %852 = dma.done %s497, %s851
          %s853 = sld [smem:[#allocation9 + $0x4]]
          %s854 = sshll.u32 %s833, 4
          %855 = dma.done %s535, %s854
          %s856 = sshll.u32 %s833, 4
          %857 = dma.done %s572, %s856
          %s858 = sld [smem:[#allocation9 + $0x5]]
          %s859 = sshll.u32 %s833, 4
          %860 = dma.done %s610, %s859
          %s861 = sshll.u32 %s833, 4
          %862 = dma.done %s647, %s861
          %s863 = sld [smem:[#allocation9 + $0x6]]
          %s864 = sshll.u32 %s833, 4
          %865 = dma.done %s685, %s864
          %s866 = sshll.u32 %s833, 4
          %867 = dma.done %s722, %s866
          %s868 = sld [smem:[#allocation9 + $0x7]]
          %s869 = sshll.u32 %s833, 4
          %870 = dma.done %s760, %s869
          %s871 = sshll.u32 %s833, 4
          %872 = dma.done %s797, %s871
          %v873 = vld [vmem:[#allocation2] sm:$0xff]
          %v874 = vld [vmem:[%s2] sm:$0xff]
          %v876 = vsel %vm229, %v874, 0
          %878 = vmatpush.xpose.msra.mxu0 0.0
          %879 = vmatpush.xpose.msra.mxu0 0.0
          %880 = vmatpush.xpose.msra.mxu0 0.0
          %881 = vmatpush.xpose.msra.mxu0 0.0
          %882 = vmatpush.xpose.msra.mxu0 0.0
          %883 = vmatpush.xpose.msra.mxu0 0.0
          %884 = vmatpush.xpose.msra.mxu0 0.0
          %885 = vmatpush.xpose.msra.mxu0 0.0
          %886 = vmatpush.xpose.msra.mxu0 0.0
          %887 = vmatpush.xpose.msra.mxu0 0.0
          %888 = vmatpush.xpose.msra.mxu0 0.0
          %889 = vmatpush.xpose.msra.mxu0 0.0
          %890 = vmatpush.xpose.msra.mxu0 0.0
          %891 = vmatpush.xpose.msra.mxu0 0.0
          %892 = vmatpush.xpose.msra.mxu0 0.0
          %893 = vmatpush.xpose.msra.mxu0 %v876
          %894 = vmatmul.f32.gmra.mxu0 %v876
          %v895 = vpop.f32.mrf.mxu0
          %v896 = vadd.f32 0.0, %v895
          %897 = vdwg.mxu0
          %vm898 = vcmp.gt.f32.partialorder %v896, 0.0
          %v900 = vsel %vm226, %v873, 0
          %902 = vmatpush.xpose.msra.mxu0 0.0
          %903 = vmatpush.xpose.msra.mxu0 0.0
          %904 = vmatpush.xpose.msra.mxu0 0.0
          %905 = vmatpush.xpose.msra.mxu0 0.0
          %906 = vmatpush.xpose.msra.mxu0 0.0
          %907 = vmatpush.xpose.msra.mxu0 0.0
          %908 = vmatpush.xpose.msra.mxu0 0.0
          %909 = vmatpush.xpose.msra.mxu0 0.0
          %910 = vmatpush.xpose.msra.mxu0 0.0
          %911 = vmatpush.xpose.msra.mxu0 0.0
          %912 = vmatpush.xpose.msra.mxu0 0.0
          %913 = vmatpush.xpose.msra.mxu0 0.0
          %914 = vmatpush.xpose.msra.mxu0 0.0
          %915 = vmatpush.xpose.msra.mxu0 0.0
          %916 = vmatpush.xpose.msra.mxu0 0.0
          %v917 = vand.u32 %v900, 4294901760
          %918 = vmatpush.xpose.msra.mxu0 %v917
          %v919 = vand.u32 %v900, 4294901760
          %v920 = vsub.f32 %v900, %v919
          %v921 = vand.u32 %v920, 4294901760
          %v922 = vsub.f32 %v920, %v921
          %v923 = vand.u32 %v922, 4294901760
          %924 = vmatmul.f32.gmra.mxu0 %v923
          %v925 = vpop.f32.mrf.mxu0
          %v926 = vadd.f32 0.0, %v925
          %927 = vdwg.mxu0
          %928 = vmatpush.xpose.msra.mxu0 0.0
          %929 = vmatpush.xpose.msra.mxu0 0.0
          %930 = vmatpush.xpose.msra.mxu0 0.0
          %931 = vmatpush.xpose.msra.mxu0 0.0
          %932 = vmatpush.xpose.msra.mxu0 0.0
          %933 = vmatpush.xpose.msra.mxu0 0.0
          %934 = vmatpush.xpose.msra.mxu0 0.0
          %935 = vmatpush.xpose.msra.mxu0 0.0
          %936 = vmatpush.xpose.msra.mxu0 0.0
          %937 = vmatpush.xpose.msra.mxu0 0.0
          %938 = vmatpush.xpose.msra.mxu0 0.0
          %939 = vmatpush.xpose.msra.mxu0 0.0
          %940 = vmatpush.xpose.msra.mxu0 0.0
          %941 = vmatpush.xpose.msra.mxu0 0.0
          %942 = vmatpush.xpose.msra.mxu0 0.0
          %v943 = vand.u32 %v900, 4294901760
          %v944 = vsub.f32 %v900, %v943
          %v945 = vand.u32 %v944, 4294901760
          %v946 = vsub.f32 %v944, %v945
          %v947 = vand.u32 %v946, 4294901760
          %948 = vmatpush.xpose.msra.mxu0 %v947
          %v949 = vand.u32 %v900, 4294901760
          %950 = vmatmul.f32.gmra.mxu0 %v949
          %v951 = vpop.f32.mrf.mxu0
          %v952 = vadd.f32 %v926, %v951
          %953 = vdwg.mxu0
          %954 = vmatpush.xpose.msra.mxu0 0.0
          %955 = vmatpush.xpose.msra.mxu0 0.0
          %956 = vmatpush.xpose.msra.mxu0 0.0
          %957 = vmatpush.xpose.msra.mxu0 0.0
          %958 = vmatpush.xpose.msra.mxu0 0.0
          %959 = vmatpush.xpose.msra.mxu0 0.0
          %960 = vmatpush.xpose.msra.mxu0 0.0
          %961 = vmatpush.xpose.msra.mxu0 0.0
          %962 = vmatpush.xpose.msra.mxu0 0.0
          %963 = vmatpush.xpose.msra.mxu0 0.0
          %964 = vmatpush.xpose.msra.mxu0 0.0
          %965 = vmatpush.xpose.msra.mxu0 0.0
          %966 = vmatpush.xpose.msra.mxu0 0.0
          %967 = vmatpush.xpose.msra.mxu0 0.0
          %968 = vmatpush.xpose.msra.mxu0 0.0
          %v969 = vand.u32 %v900, 4294901760
          %v970 = vsub.f32 %v900, %v969
          %971 = vmatpush.xpose.msra.mxu0 %v970
          %v972 = vand.u32 %v900, 4294901760
          %v973 = vsub.f32 %v900, %v972
          %974 = vmatmul.f32.gmra.mxu0 %v973
          %v975 = vpop.f32.mrf.mxu0
          %v976 = vadd.f32 %v952, %v975
          %977 = vdwg.mxu0
          %978 = vmatpush.xpose.msra.mxu0 0.0
          %979 = vmatpush.xpose.msra.mxu0 0.0
          %980 = vmatpush.xpose.msra.mxu0 0.0
          %981 = vmatpush.xpose.msra.mxu0 0.0
          %982 = vmatpush.xpose.msra.mxu0 0.0
          %983 = vmatpush.xpose.msra.mxu0 0.0
          %984 = vmatpush.xpose.msra.mxu0 0.0
          %985 = vmatpush.xpose.msra.mxu0 0.0
          %986 = vmatpush.xpose.msra.mxu0 0.0
          %987 = vmatpush.xpose.msra.mxu0 0.0
          %988 = vmatpush.xpose.msra.mxu0 0.0
          %989 = vmatpush.xpose.msra.mxu0 0.0
          %990 = vmatpush.xpose.msra.mxu0 0.0
          %991 = vmatpush.xpose.msra.mxu0 0.0
          %992 = vmatpush.xpose.msra.mxu0 0.0
          %v993 = vand.u32 %v900, 4294901760
          %994 = vmatpush.xpose.msra.mxu0 %v993
          %v995 = vand.u32 %v900, 4294901760
          %v996 = vsub.f32 %v900, %v995
          %v997 = vand.u32 %v996, 4294901760
          %998 = vmatmul.f32.gmra.mxu0 %v997
          %v999 = vpop.f32.mrf.mxu0
          %v1000 = vadd.f32 %v976, %v999
          %1001 = vdwg.mxu0
          %1002 = vmatpush.xpose.msra.mxu0 0.0
          %1003 = vmatpush.xpose.msra.mxu0 0.0
          %1004 = vmatpush.xpose.msra.mxu0 0.0
          %1005 = vmatpush.xpose.msra.mxu0 0.0
          %1006 = vmatpush.xpose.msra.mxu0 0.0
          %1007 = vmatpush.xpose.msra.mxu0 0.0
          %1008 = vmatpush.xpose.msra.mxu0 0.0
          %1009 = vmatpush.xpose.msra.mxu0 0.0
          %1010 = vmatpush.xpose.msra.mxu0 0.0
          %1011 = vmatpush.xpose.msra.mxu0 0.0
          %1012 = vmatpush.xpose.msra.mxu0 0.0
          %1013 = vmatpush.xpose.msra.mxu0 0.0
          %1014 = vmatpush.xpose.msra.mxu0 0.0
          %1015 = vmatpush.xpose.msra.mxu0 0.0
          %1016 = vmatpush.xpose.msra.mxu0 0.0
          %v1017 = vand.u32 %v900, 4294901760
          %v1018 = vsub.f32 %v900, %v1017
          %v1019 = vand.u32 %v1018, 4294901760
          %1020 = vmatpush.xpose.msra.mxu0 %v1019
          %v1021 = vand.u32 %v900, 4294901760
          %1022 = vmatmul.f32.gmra.mxu0 %v1021
          %v1023 = vpop.f32.mrf.mxu0
          %v1024 = vadd.f32 %v1000, %v1023
          %1025 = vdwg.mxu0
          %1026 = vmatpush.xpose.msra.mxu0 0.0
          %1027 = vmatpush.xpose.msra.mxu0 0.0
          %1028 = vmatpush.xpose.msra.mxu0 0.0
          %1029 = vmatpush.xpose.msra.mxu0 0.0
          %1030 = vmatpush.xpose.msra.mxu0 0.0
          %1031 = vmatpush.xpose.msra.mxu0 0.0
          %1032 = vmatpush.xpose.msra.mxu0 0.0
          %1033 = vmatpush.xpose.msra.mxu0 0.0
          %1034 = vmatpush.xpose.msra.mxu0 0.0
          %1035 = vmatpush.xpose.msra.mxu0 0.0
          %1036 = vmatpush.xpose.msra.mxu0 0.0
          %1037 = vmatpush.xpose.msra.mxu0 0.0
          %1038 = vmatpush.xpose.msra.mxu0 0.0
          %1039 = vmatpush.xpose.msra.mxu0 0.0
          %1040 = vmatpush.xpose.msra.mxu0 0.0
          %v1041 = vand.u32 %v900, 4294901760
          %1042 = vmatpush.xpose.msra.mxu0 %v1041
          %v1043 = vand.u32 %v900, 4294901760
          %1044 = vmatmul.f32.gmra.mxu0 %v1043
          %v1045 = vpop.f32.mrf.mxu0
          %v1046 = vadd.f32 %v1024, %v1045
          %1047 = vdwg.mxu0
          %v1048 = vmul.f32 %v1046, 0.1
          %v1049 = vand.u32 2147483647, %v1048
          %v1050 = vsub.f32 0.0, %v1049
          %v1051 = vmul.f32 %v1050, 1.442695
          %v1052 = vpow.pop %v1051
          %v1053 = vadd.f32 %v1052, 1.0
          %v1054 = vlog2.pop %v1053
          %v1055 = vmul.f32 %v1054, 0.6931472
          %v1056 = vmax.f32 %v1048, 0.0
          %v1057 = vadd.f32 %v1055, %v1056
          %v1058 = vsel %vm898, %v1048, 0.0
          %v1059 = vsub.f32 %v1057, %v1058
          %v1060 = vsel %vm898, 1, 0
          %v1061 = vcvt.s32.f32 %v1060
          %v1062 = vld [vmem:[#allocation4] sm:$0xff]
          %v1063 = vmul.f32 %v1059, %v1061
          %vm1064 = vcmask 64512
          %v1065 = vsel %vm1064, %v1063, 0.0
          %1066 = vadd.xlane.f32.xlu0 %v1065
          %v1067 = vpop.xlane.xlu0 %1066
          %v1068 = vadd.f32 %v1062, %v1067
          %1069 = vst.msk [vmem:[#allocation4] sm:$0xff] %vm231, %v1068
          %v1070 = vld [vmem:[#allocation5] sm:$0xff]
          %v1071 = vsel %vm1064, %v1059, 0.0
          %1072 = vadd.xlane.f32.xlu0 %v1071
          %v1073 = vpop.xlane.xlu0 %1072
          %v1074 = vadd.f32 %v1070, %v1073
          %1075 = vst.msk [vmem:[#allocation5] sm:$0xff] %vm231, %v1074
          %v1076 = vld [vmem:[#allocation6] sm:$0xff]
          %v1077 = vsel %vm1064, %v1061, 0.0
          %1078 = vadd.xlane.f32.xlu0 %v1077
          %v1079 = vpop.xlane.xlu0 %1078
          %v1080 = vadd.f32 %v1076, %v1079
          %1081 = vst.msk [vmem:[#allocation6] sm:$0xff] %vm231, %v1080
        $region40: #{tpu_custom_call.1} parent=35 // pred_fallthru
          _
        %v1082 = vld [vmem:[#allocation2] sm:$0xff]
        %v1083 = vld [vmem:[%s2] sm:$0xff]
        %v1084 = vld [vmem:[%s212] sm:$0xff]
        %v1085 = vld [vmem:[%s212 + $0x8] sm:$0xff]
        %v1086 = vld [vmem:[%s212 + $0x10] sm:$0xff]
        %v1087 = vld [vmem:[%s212 + $0x18] sm:$0xff]
        %v1088 = vld [vmem:[%s212 + $0x20] sm:$0xff]
        %v1089 = vld [vmem:[%s212 + $0x28] sm:$0xff]
        %v1090 = vld [vmem:[%s212 + $0x30] sm:$0xff]
        %v1091 = vld [vmem:[%s212 + $0x38] sm:$0xff]
        %v1092 = vld [vmem:[%s212 + $0x40] sm:$0xff]
        %v1093 = vld [vmem:[%s212 + $0x48] sm:$0xff]
        %v1094 = vld [vmem:[%s212 + $0x50] sm:$0xff]
        %v1095 = vld [vmem:[%s212 + $0x58] sm:$0xff]
        %v1096 = vld [vmem:[%s212 + $0x60] sm:$0xff]
        %v1097 = vld [vmem:[%s212 + $0x68] sm:$0xff]
        %v1098 = vld [vmem:[%s212 + $0x70] sm:$0xff]
        %v1099 = vld [vmem:[%s212 + $0x78] sm:$0xff]
        %v1100 = vld [vmem:[%s218] sm:$0xff]
        %v1101 = vld [vmem:[%s218 + $0x8] sm:$0xff]
        %v1102 = vld [vmem:[%s218 + $0x10] sm:$0xff]
        %v1103 = vld [vmem:[%s218 + $0x18] sm:$0xff]
        %v1104 = vld [vmem:[%s218 + $0x20] sm:$0xff]
        %v1105 = vld [vmem:[%s218 + $0x28] sm:$0xff]
        %v1106 = vld [vmem:[%s218 + $0x30] sm:$0xff]
        %v1107 = vld [vmem:[%s218 + $0x38] sm:$0xff]
        %v1108 = vld [vmem:[%s218 + $0x40] sm:$0xff]
        %v1109 = vld [vmem:[%s218 + $0x48] sm:$0xff]
        %v1110 = vld [vmem:[%s218 + $0x50] sm:$0xff]
        %v1111 = vld [vmem:[%s218 + $0x58] sm:$0xff]
        %v1112 = vld [vmem:[%s218 + $0x60] sm:$0xff]
        %v1113 = vld [vmem:[%s218 + $0x68] sm:$0xff]
        %v1114 = vld [vmem:[%s218 + $0x70] sm:$0xff]
        %v1115 = vld [vmem:[%s218 + $0x78] sm:$0xff]
        %s1116 = smul.u32 %s28, 128
        %v1117 = vlaneseq
        %v1118 = vand.u32 %v1117, 127
        %v1119 = vstv %s1116
        %v1120 = vadd.s32 %v1119, %v1118
        %vm1121 = vcmp.lt.s32.totalorder %v1120, 512
        %s1122 = sld [smem:[#allocation9]]
        %v1123 = vstv %s1122
        %vm1124 = vcmp.ne.s32.totalorder %v1120, %v1123
        %vm1125 = vmand %vm1121, %vm1124
        %s1126 = sld [smem:[#allocation9 + $0x1]]
        %v1127 = vstv %s1126
        %vm1128 = vcmp.ne.s32.totalorder %v1120, %v1127
        %vm1129 = vmand %vm1125, %vm1128
        %s1130 = sld [smem:[#allocation9 + $0x2]]
        %v1131 = vstv %s1130
        %vm1132 = vcmp.ne.s32.totalorder %v1120, %v1131
        %vm1133 = vmand %vm1129, %vm1132
        %s1134 = sld [smem:[#allocation9 + $0x3]]
        %v1135 = vstv %s1134
        %vm1136 = vcmp.ne.s32.totalorder %v1120, %v1135
        %vm1137 = vmand %vm1133, %vm1136
        %s1138 = sld [smem:[#allocation9 + $0x4]]
        %v1139 = vstv %s1138
        %vm1140 = vcmp.ne.s32.totalorder %v1120, %v1139
        %vm1141 = vmand %vm1137, %vm1140
        %s1142 = sld [smem:[#allocation9 + $0x5]]
        %v1143 = vstv %s1142
        %vm1144 = vcmp.ne.s32.totalorder %v1120, %v1143
        %vm1145 = vmand %vm1141, %vm1144
        %s1146 = sld [smem:[#allocation9 + $0x6]]
        %v1147 = vstv %s1146
        %vm1148 = vcmp.ne.s32.totalorder %v1120, %v1147
        %vm1149 = vmand %vm1145, %vm1148
        %s1150 = sld [smem:[#allocation9 + $0x7]]
        %v1151 = vstv %s1150
        %vm1152 = vcmp.ne.s32.totalorder %v1120, %v1151
        %vm1153 = vmand %vm1149, %vm1152
        %vm1154 = vcmask 130048
        %v1156 = vsel %vm1154, %v1083, 0
        %v1159 = vsel %vm1154, %v1100, 0
        %v1162 = vsel %vm1154, %v1101, 0
        %v1165 = vsel %vm1154, %v1102, 0
        %v1168 = vsel %vm1154, %v1103, 0
        %v1171 = vsel %vm1154, %v1104, 0
        %v1174 = vsel %vm1154, %v1105, 0
        %v1177 = vsel %vm1154, %v1106, 0
        %v1180 = vsel %vm1154, %v1107, 0
        %v1183 = vsel %vm1154, %v1108, 0
        %v1186 = vsel %vm1154, %v1109, 0
        %v1189 = vsel %vm1154, %v1110, 0
        %v1192 = vsel %vm1154, %v1111, 0
        %v1195 = vsel %vm1154, %v1112, 0
        %v1198 = vsel %vm1154, %v1113, 0
        %v1201 = vsel %vm1154, %v1114, 0
        %v1204 = vsel %vm1154, %v1115, 0
        %1206 = vmatpush.xpose.msra.mxu0 %v1204
        %1207 = vmatpush.xpose.msra.mxu0 %v1201
        %1208 = vmatpush.xpose.msra.mxu0 %v1198
        %1209 = vmatpush.xpose.msra.mxu0 %v1195
        %1210 = vmatpush.xpose.msra.mxu0 %v1192
        %1211 = vmatpush.xpose.msra.mxu0 %v1189
        %1212 = vmatpush.xpose.msra.mxu0 %v1186
        %1213 = vmatpush.xpose.msra.mxu0 %v1183
        %1214 = vmatpush.xpose.msra.mxu0 %v1180
        %1215 = vmatpush.xpose.msra.mxu0 %v1177
        %1216 = vmatpush.xpose.msra.mxu0 %v1174
        %1217 = vmatpush.xpose.msra.mxu0 %v1171
        %1218 = vmatpush.xpose.msra.mxu0 %v1168
        %1219 = vmatpush.xpose.msra.mxu0 %v1165
        %1220 = vmatpush.xpose.msra.mxu0 %v1162
        %1221 = vmatpush.xpose.msra.mxu0 %v1159
        %1222 = vmatmul.f32.gmra.mxu0 %v1156
        %v1223 = vpop.f32.mrf.mxu0
        %v1224 = vadd.f32 0.0, %v1223
        %1225 = vdwg.mxu0
        %vm1226 = vcmp.gt.f32.partialorder %v1224, 0.0
        %vm1227 = vcmask 523264
        %v1229 = vsel %vm1227, %v1082, 0
        %v1232 = vsel %vm1227, %v1084, 0
        %v1235 = vsel %vm1227, %v1085, 0
        %v1238 = vsel %vm1227, %v1086, 0
        %v1241 = vsel %vm1227, %v1087, 0
        %v1244 = vsel %vm1227, %v1088, 0
        %v1247 = vsel %vm1227, %v1089, 0
        %v1250 = vsel %vm1227, %v1090, 0
        %v1253 = vsel %vm1227, %v1091, 0
        %v1256 = vsel %vm1227, %v1092, 0
        %v1259 = vsel %vm1227, %v1093, 0
        %v1262 = vsel %vm1227, %v1094, 0
        %v1265 = vsel %vm1227, %v1095, 0
        %v1268 = vsel %vm1227, %v1096, 0
        %v1271 = vsel %vm1227, %v1097, 0
        %v1274 = vsel %vm1227, %v1098, 0
        %v1277 = vsel %vm1227, %v1099, 0
        %v1279 = vand.u32 %v1277, 4294901760
        %1280 = vmatpush.xpose.msra.mxu0 %v1279
        %v1281 = vand.u32 %v1274, 4294901760
        %1282 = vmatpush.xpose.msra.mxu0 %v1281
        %v1283 = vand.u32 %v1271, 4294901760
        %1284 = vmatpush.xpose.msra.mxu0 %v1283
        %v1285 = vand.u32 %v1268, 4294901760
        %1286 = vmatpush.xpose.msra.mxu0 %v1285
        %v1287 = vand.u32 %v1265, 4294901760
        %1288 = vmatpush.xpose.msra.mxu0 %v1287
        %v1289 = vand.u32 %v1262, 4294901760
        %1290 = vmatpush.xpose.msra.mxu0 %v1289
        %v1291 = vand.u32 %v1259, 4294901760
        %1292 = vmatpush.xpose.msra.mxu0 %v1291
        %v1293 = vand.u32 %v1256, 4294901760
        %1294 = vmatpush.xpose.msra.mxu0 %v1293
        %v1295 = vand.u32 %v1253, 4294901760
        %1296 = vmatpush.xpose.msra.mxu0 %v1295
        %v1297 = vand.u32 %v1250, 4294901760
        %1298 = vmatpush.xpose.msra.mxu0 %v1297
        %v1299 = vand.u32 %v1247, 4294901760
        %1300 = vmatpush.xpose.msra.mxu0 %v1299
        %v1301 = vand.u32 %v1244, 4294901760
        %1302 = vmatpush.xpose.msra.mxu0 %v1301
        %v1303 = vand.u32 %v1241, 4294901760
        %1304 = vmatpush.xpose.msra.mxu0 %v1303
        %v1305 = vand.u32 %v1238, 4294901760
        %1306 = vmatpush.xpose.msra.mxu0 %v1305
        %v1307 = vand.u32 %v1235, 4294901760
        %1308 = vmatpush.xpose.msra.mxu0 %v1307
        %v1309 = vand.u32 %v1232, 4294901760
        %1310 = vmatpush.xpose.msra.mxu0 %v1309
        %v1311 = vand.u32 %v1229, 4294901760
        %v1312 = vsub.f32 %v1229, %v1311
        %v1313 = vand.u32 %v1312, 4294901760
        %v1314 = vsub.f32 %v1312, %v1313
        %v1315 = vand.u32 %v1314, 4294901760
        %1316 = vmatmul.f32.gmra.mxu0 %v1315
        %v1317 = vpop.f32.mrf.mxu0
        %v1318 = vadd.f32 0.0, %v1317
        %1319 = vdwg.mxu0
        %v1320 = vand.u32 %v1277, 4294901760
        %v1321 = vsub.f32 %v1277, %v1320
        %v1322 = vand.u32 %v1321, 4294901760
        %v1323 = vsub.f32 %v1321, %v1322
        %v1324 = vand.u32 %v1323, 4294901760
        %1325 = vmatpush.xpose.msra.mxu0 %v1324
        %v1326 = vand.u32 %v1274, 4294901760
        %v1327 = vsub.f32 %v1274, %v1326
        %v1328 = vand.u32 %v1327, 4294901760
        %v1329 = vsub.f32 %v1327, %v1328
        %v1330 = vand.u32 %v1329, 4294901760
        %1331 = vmatpush.xpose.msra.mxu0 %v1330
        %v1332 = vand.u32 %v1271, 4294901760
        %v1333 = vsub.f32 %v1271, %v1332
        %v1334 = vand.u32 %v1333, 4294901760
        %v1335 = vsub.f32 %v1333, %v1334
        %v1336 = vand.u32 %v1335, 4294901760
        %1337 = vmatpush.xpose.msra.mxu0 %v1336
        %v1338 = vand.u32 %v1268, 4294901760
        %v1339 = vsub.f32 %v1268, %v1338
        %v1340 = vand.u32 %v1339, 4294901760
        %v1341 = vsub.f32 %v1339, %v1340
        %v1342 = vand.u32 %v1341, 4294901760
        %1343 = vmatpush.xpose.msra.mxu0 %v1342
        %v1344 = vand.u32 %v1265, 4294901760
        %v1345 = vsub.f32 %v1265, %v1344
        %v1346 = vand.u32 %v1345, 4294901760
        %v1347 = vsub.f32 %v1345, %v1346
        %v1348 = vand.u32 %v1347, 4294901760
        %1349 = vmatpush.xpose.msra.mxu0 %v1348
        %v1350 = vand.u32 %v1262, 4294901760
        %v1351 = vsub.f32 %v1262, %v1350
        %v1352 = vand.u32 %v1351, 4294901760
        %v1353 = vsub.f32 %v1351, %v1352
        %v1354 = vand.u32 %v1353, 4294901760
        %1355 = vmatpush.xpose.msra.mxu0 %v1354
        %v1356 = vand.u32 %v1259, 4294901760
        %v1357 = vsub.f32 %v1259, %v1356
        %v1358 = vand.u32 %v1357, 4294901760
        %v1359 = vsub.f32 %v1357, %v1358
        %v1360 = vand.u32 %v1359, 4294901760
        %1361 = vmatpush.xpose.msra.mxu0 %v1360
        %v1362 = vand.u32 %v1256, 4294901760
        %v1363 = vsub.f32 %v1256, %v1362
        %v1364 = vand.u32 %v1363, 4294901760
        %v1365 = vsub.f32 %v1363, %v1364
        %v1366 = vand.u32 %v1365, 4294901760
        %1367 = vmatpush.xpose.msra.mxu0 %v1366
        %v1368 = vand.u32 %v1253, 4294901760
        %v1369 = vsub.f32 %v1253, %v1368
        %v1370 = vand.u32 %v1369, 4294901760
        %v1371 = vsub.f32 %v1369, %v1370
        %v1372 = vand.u32 %v1371, 4294901760
        %1373 = vmatpush.xpose.msra.mxu0 %v1372
        %v1374 = vand.u32 %v1250, 4294901760
        %v1375 = vsub.f32 %v1250, %v1374
        %v1376 = vand.u32 %v1375, 4294901760
        %v1377 = vsub.f32 %v1375, %v1376
        %v1378 = vand.u32 %v1377, 4294901760
        %1379 = vmatpush.xpose.msra.mxu0 %v1378
        %v1380 = vand.u32 %v1247, 4294901760
        %v1381 = vsub.f32 %v1247, %v1380
        %v1382 = vand.u32 %v1381, 4294901760
        %v1383 = vsub.f32 %v1381, %v1382
        %v1384 = vand.u32 %v1383, 4294901760
        %1385 = vmatpush.xpose.msra.mxu0 %v1384
        %v1386 = vand.u32 %v1244, 4294901760
        %v1387 = vsub.f32 %v1244, %v1386
        %v1388 = vand.u32 %v1387, 4294901760
        %v1389 = vsub.f32 %v1387, %v1388
        %v1390 = vand.u32 %v1389, 4294901760
        %1391 = vmatpush.xpose.msra.mxu0 %v1390
        %v1392 = vand.u32 %v1241, 4294901760
        %v1393 = vsub.f32 %v1241, %v1392
        %v1394 = vand.u32 %v1393, 4294901760
        %v1395 = vsub.f32 %v1393, %v1394
        %v1396 = vand.u32 %v1395, 4294901760
        %1397 = vmatpush.xpose.msra.mxu0 %v1396
        %v1398 = vand.u32 %v1238, 4294901760
        %v1399 = vsub.f32 %v1238, %v1398
        %v1400 = vand.u32 %v1399, 4294901760
        %v1401 = vsub.f32 %v1399, %v1400
        %v1402 = vand.u32 %v1401, 4294901760
        %1403 = vmatpush.xpose.msra.mxu0 %v1402
        %v1404 = vand.u32 %v1235, 4294901760
        %v1405 = vsub.f32 %v1235, %v1404
        %v1406 = vand.u32 %v1405, 4294901760
        %v1407 = vsub.f32 %v1405, %v1406
        %v1408 = vand.u32 %v1407, 4294901760
        %1409 = vmatpush.xpose.msra.mxu0 %v1408
        %v1410 = vand.u32 %v1232, 4294901760
        %v1411 = vsub.f32 %v1232, %v1410
        %v1412 = vand.u32 %v1411, 4294901760
        %v1413 = vsub.f32 %v1411, %v1412
        %v1414 = vand.u32 %v1413, 4294901760
        %1415 = vmatpush.xpose.msra.mxu0 %v1414
        %v1416 = vand.u32 %v1229, 4294901760
        %1417 = vmatmul.f32.gmra.mxu0 %v1416
        %v1418 = vpop.f32.mrf.mxu0
        %v1419 = vadd.f32 %v1318, %v1418
        %1420 = vdwg.mxu0
        %v1421 = vand.u32 %v1277, 4294901760
        %v1422 = vsub.f32 %v1277, %v1421
        %1423 = vmatpush.xpose.msra.mxu0 %v1422
        %v1424 = vand.u32 %v1274, 4294901760
        %v1425 = vsub.f32 %v1274, %v1424
        %1426 = vmatpush.xpose.msra.mxu0 %v1425
        %v1427 = vand.u32 %v1271, 4294901760
        %v1428 = vsub.f32 %v1271, %v1427
        %1429 = vmatpush.xpose.msra.mxu0 %v1428
        %v1430 = vand.u32 %v1268, 4294901760
        %v1431 = vsub.f32 %v1268, %v1430
        %1432 = vmatpush.xpose.msra.mxu0 %v1431
        %v1433 = vand.u32 %v1265, 4294901760
        %v1434 = vsub.f32 %v1265, %v1433
        %1435 = vmatpush.xpose.msra.mxu0 %v1434
        %v1436 = vand.u32 %v1262, 4294901760
        %v1437 = vsub.f32 %v1262, %v1436
        %1438 = vmatpush.xpose.msra.mxu0 %v1437
        %v1439 = vand.u32 %v1259, 4294901760
        %v1440 = vsub.f32 %v1259, %v1439
        %1441 = vmatpush.xpose.msra.mxu0 %v1440
        %v1442 = vand.u32 %v1256, 4294901760
        %v1443 = vsub.f32 %v1256, %v1442
        %1444 = vmatpush.xpose.msra.mxu0 %v1443
        %v1445 = vand.u32 %v1253, 4294901760
        %v1446 = vsub.f32 %v1253, %v1445
        %1447 = vmatpush.xpose.msra.mxu0 %v1446
        %v1448 = vand.u32 %v1250, 4294901760
        %v1449 = vsub.f32 %v1250, %v1448
        %1450 = vmatpush.xpose.msra.mxu0 %v1449
        %v1451 = vand.u32 %v1247, 4294901760
        %v1452 = vsub.f32 %v1247, %v1451
        %1453 = vmatpush.xpose.msra.mxu0 %v1452
        %v1454 = vand.u32 %v1244, 4294901760
        %v1455 = vsub.f32 %v1244, %v1454
        %1456 = vmatpush.xpose.msra.mxu0 %v1455
        %v1457 = vand.u32 %v1241, 4294901760
        %v1458 = vsub.f32 %v1241, %v1457
        %1459 = vmatpush.xpose.msra.mxu0 %v1458
        %v1460 = vand.u32 %v1238, 4294901760
        %v1461 = vsub.f32 %v1238, %v1460
        %1462 = vmatpush.xpose.msra.mxu0 %v1461
        %v1463 = vand.u32 %v1235, 4294901760
        %v1464 = vsub.f32 %v1235, %v1463
        %1465 = vmatpush.xpose.msra.mxu0 %v1464
        %v1466 = vand.u32 %v1232, 4294901760
        %v1467 = vsub.f32 %v1232, %v1466
        %1468 = vmatpush.xpose.msra.mxu0 %v1467
        %v1469 = vand.u32 %v1229, 4294901760
        %v1470 = vsub.f32 %v1229, %v1469
        %1471 = vmatmul.f32.gmra.mxu0 %v1470
        %v1472 = vpop.f32.mrf.mxu0
        %v1473 = vadd.f32 %v1419, %v1472
        %1474 = vdwg.mxu0
        %v1475 = vand.u32 %v1277, 4294901760
        %1476 = vmatpush.xpose.msra.mxu0 %v1475
        %v1477 = vand.u32 %v1274, 4294901760
        %1478 = vmatpush.xpose.msra.mxu0 %v1477
        %v1479 = vand.u32 %v1271, 4294901760
        %1480 = vmatpush.xpose.msra.mxu0 %v1479
        %v1481 = vand.u32 %v1268, 4294901760
        %1482 = vmatpush.xpose.msra.mxu0 %v1481
        %v1483 = vand.u32 %v1265, 4294901760
        %1484 = vmatpush.xpose.msra.mxu0 %v1483
        %v1485 = vand.u32 %v1262, 4294901760
        %1486 = vmatpush.xpose.msra.mxu0 %v1485
        %v1487 = vand.u32 %v1259, 4294901760
        %1488 = vmatpush.xpose.msra.mxu0 %v1487
        %v1489 = vand.u32 %v1256, 4294901760
        %1490 = vmatpush.xpose.msra.mxu0 %v1489
        %v1491 = vand.u32 %v1253, 4294901760
        %1492 = vmatpush.xpose.msra.mxu0 %v1491
        %v1493 = vand.u32 %v1250, 4294901760
        %1494 = vmatpush.xpose.msra.mxu0 %v1493
        %v1495 = vand.u32 %v1247, 4294901760
        %1496 = vmatpush.xpose.msra.mxu0 %v1495
        %v1497 = vand.u32 %v1244, 4294901760
        %1498 = vmatpush.xpose.msra.mxu0 %v1497
        %v1499 = vand.u32 %v1241, 4294901760
        %1500 = vmatpush.xpose.msra.mxu0 %v1499
        %v1501 = vand.u32 %v1238, 4294901760
        %1502 = vmatpush.xpose.msra.mxu0 %v1501
        %v1503 = vand.u32 %v1235, 4294901760
        %1504 = vmatpush.xpose.msra.mxu0 %v1503
        %v1505 = vand.u32 %v1232, 4294901760
        %1506 = vmatpush.xpose.msra.mxu0 %v1505
        %v1507 = vand.u32 %v1229, 4294901760
        %v1508 = vsub.f32 %v1229, %v1507
        %v1509 = vand.u32 %v1508, 4294901760
        %1510 = vmatmul.f32.gmra.mxu0 %v1509
        %v1511 = vpop.f32.mrf.mxu0
        %v1512 = vadd.f32 %v1473, %v1511
        %1513 = vdwg.mxu0
        %v1514 = vand.u32 %v1277, 4294901760
        %v1515 = vsub.f32 %v1277, %v1514
        %v1516 = vand.u32 %v1515, 4294901760
        %1517 = vmatpush.xpose.msra.mxu0 %v1516
        %v1518 = vand.u32 %v1274, 4294901760
        %v1519 = vsub.f32 %v1274, %v1518
        %v1520 = vand.u32 %v1519, 4294901760
        %1521 = vmatpush.xpose.msra.mxu0 %v1520
        %v1522 = vand.u32 %v1271, 4294901760
        %v1523 = vsub.f32 %v1271, %v1522
        %v1524 = vand.u32 %v1523, 4294901760
        %1525 = vmatpush.xpose.msra.mxu0 %v1524
        %v1526 = vand.u32 %v1268, 4294901760
        %v1527 = vsub.f32 %v1268, %v1526
        %v1528 = vand.u32 %v1527, 4294901760
        %1529 = vmatpush.xpose.msra.mxu0 %v1528
        %v1530 = vand.u32 %v1265, 4294901760
        %v1531 = vsub.f32 %v1265, %v1530
        %v1532 = vand.u32 %v1531, 4294901760
        %1533 = vmatpush.xpose.msra.mxu0 %v1532
        %v1534 = vand.u32 %v1262, 4294901760
        %v1535 = vsub.f32 %v1262, %v1534
        %v1536 = vand.u32 %v1535, 4294901760
        %1537 = vmatpush.xpose.msra.mxu0 %v1536
        %v1538 = vand.u32 %v1259, 4294901760
        %v1539 = vsub.f32 %v1259, %v1538
        %v1540 = vand.u32 %v1539, 4294901760
        %1541 = vmatpush.xpose.msra.mxu0 %v1540
        %v1542 = vand.u32 %v1256, 4294901760
        %v1543 = vsub.f32 %v1256, %v1542
        %v1544 = vand.u32 %v1543, 4294901760
        %1545 = vmatpush.xpose.msra.mxu0 %v1544
        %v1546 = vand.u32 %v1253, 4294901760
        %v1547 = vsub.f32 %v1253, %v1546
        %v1548 = vand.u32 %v1547, 4294901760
        %1549 = vmatpush.xpose.msra.mxu0 %v1548
        %v1550 = vand.u32 %v1250, 4294901760
        %v1551 = vsub.f32 %v1250, %v1550
        %v1552 = vand.u32 %v1551, 4294901760
        %1553 = vmatpush.xpose.msra.mxu0 %v1552
        %v1554 = vand.u32 %v1247, 4294901760
        %v1555 = vsub.f32 %v1247, %v1554
        %v1556 = vand.u32 %v1555, 4294901760
        %1557 = vmatpush.xpose.msra.mxu0 %v1556
        %v1558 = vand.u32 %v1244, 4294901760
        %v1559 = vsub.f32 %v1244, %v1558
        %v1560 = vand.u32 %v1559, 4294901760
        %1561 = vmatpush.xpose.msra.mxu0 %v1560
        %v1562 = vand.u32 %v1241, 4294901760
        %v1563 = vsub.f32 %v1241, %v1562
        %v1564 = vand.u32 %v1563, 4294901760
        %1565 = vmatpush.xpose.msra.mxu0 %v1564
        %v1566 = vand.u32 %v1238, 4294901760
        %v1567 = vsub.f32 %v1238, %v1566
        %v1568 = vand.u32 %v1567, 4294901760
        %1569 = vmatpush.xpose.msra.mxu0 %v1568
        %v1570 = vand.u32 %v1235, 4294901760
        %v1571 = vsub.f32 %v1235, %v1570
        %v1572 = vand.u32 %v1571, 4294901760
        %1573 = vmatpush.xpose.msra.mxu0 %v1572
        %v1574 = vand.u32 %v1232, 4294901760
        %v1575 = vsub.f32 %v1232, %v1574
        %v1576 = vand.u32 %v1575, 4294901760
        %1577 = vmatpush.xpose.msra.mxu0 %v1576
        %v1578 = vand.u32 %v1229, 4294901760
        %1579 = vmatmul.f32.gmra.mxu0 %v1578
        %v1580 = vpop.f32.mrf.mxu0
        %v1581 = vadd.f32 %v1512, %v1580
        %1582 = vdwg.mxu0
        %v1583 = vand.u32 %v1277, 4294901760
        %1584 = vmatpush.xpose.msra.mxu0 %v1583
        %v1585 = vand.u32 %v1274, 4294901760
        %1586 = vmatpush.xpose.msra.mxu0 %v1585
        %v1587 = vand.u32 %v1271, 4294901760
        %1588 = vmatpush.xpose.msra.mxu0 %v1587
        %v1589 = vand.u32 %v1268, 4294901760
        %1590 = vmatpush.xpose.msra.mxu0 %v1589
        %v1591 = vand.u32 %v1265, 4294901760
        %1592 = vmatpush.xpose.msra.mxu0 %v1591
        %v1593 = vand.u32 %v1262, 4294901760
        %1594 = vmatpush.xpose.msra.mxu0 %v1593
        %v1595 = vand.u32 %v1259, 4294901760
        %1596 = vmatpush.xpose.msra.mxu0 %v1595
        %v1597 = vand.u32 %v1256, 4294901760
        %1598 = vmatpush.xpose.msra.mxu0 %v1597
        %v1599 = vand.u32 %v1253, 4294901760
        %1600 = vmatpush.xpose.msra.mxu0 %v1599
        %v1601 = vand.u32 %v1250, 4294901760
        %1602 = vmatpush.xpose.msra.mxu0 %v1601
        %v1603 = vand.u32 %v1247, 4294901760
        %1604 = vmatpush.xpose.msra.mxu0 %v1603
        %v1605 = vand.u32 %v1244, 4294901760
        %1606 = vmatpush.xpose.msra.mxu0 %v1605
        %v1607 = vand.u32 %v1241, 4294901760
        %1608 = vmatpush.xpose.msra.mxu0 %v1607
        %v1609 = vand.u32 %v1238, 4294901760
        %1610 = vmatpush.xpose.msra.mxu0 %v1609
        %v1611 = vand.u32 %v1235, 4294901760
        %1612 = vmatpush.xpose.msra.mxu0 %v1611
        %v1613 = vand.u32 %v1232, 4294901760
        %1614 = vmatpush.xpose.msra.mxu0 %v1613
        %v1615 = vand.u32 %v1229, 4294901760
        %1616 = vmatmul.f32.gmra.mxu0 %v1615
        %v1617 = vpop.f32.mrf.mxu0
        %v1618 = vadd.f32 %v1581, %v1617
        %1619 = vdwg.mxu0
        %v1620 = vmul.f32 %v1618, 0.1
        %v1621 = vand.u32 2147483647, %v1620
        %v1622 = vsub.f32 0.0, %v1621
        %v1623 = vmul.f32 %v1622, 1.442695
        %v1624 = vpow.pop %v1623
        %v1625 = vadd.f32 %v1624, 1.0
        %v1626 = vlog2.pop %v1625
        %v1627 = vmul.f32 %v1626, 0.6931472
        %v1628 = vmax.f32 %v1620, 0.0
        %v1629 = vadd.f32 %v1627, %v1628
        %v1630 = vsel %vm1226, %v1620, 0.0
        %v1631 = vsub.f32 %v1629, %v1630
        %v1632 = vsel %vm1153, 1, 0
        %vm1633 = vcmp.eq.s32.totalorder %v1632, 1
        %vm1634 = vmand %vm1633, %vm1226
        %v1635 = vsel %vm1634, 1.0, 0.0
        %v1636 = vsel %vm1633, %v1631, 0.0
        %v1637 = vld [vmem:[#allocation4] sm:$0xff]
        %v1638 = vmul.f32 %v1636, %v1635
        %1639 = vadd.xlane.f32.xlu0 %v1638
        %v1640 = vpop.xlane.xlu0 %1639
        %v1641 = vadd.f32 %v1637, %v1640
        %vm1642 = vcmask 7168
        %1643 = vst.msk [vmem:[#allocation4] sm:$0xff] %vm1642, %v1641
        %v1644 = vld [vmem:[#allocation5] sm:$0xff]
        %1645 = vadd.xlane.f32.xlu0 %v1636
        %v1646 = vpop.xlane.xlu0 %1645
        %v1647 = vadd.f32 %v1644, %v1646
        %1648 = vst.msk [vmem:[#allocation5] sm:$0xff] %vm1642, %v1647
        %v1649 = vld [vmem:[#allocation6] sm:$0xff]
        %1650 = vadd.xlane.f32.xlu0 %v1635
        %v1651 = vpop.xlane.xlu0 %1650
        %v1652 = vadd.f32 %v1649, %v1651
        %1653 = vst.msk [vmem:[#allocation6] sm:$0xff] %vm1642, %v1652
        %p1654 = scmp.eq.s32.totalorder %s28, 3
        // Predicated region
        $region521: #{tpu_custom_call.1} parent=35 // pred_check
          %p1655 = pneg %p1654
        $region522: #{tpu_custom_call.1} parent=35 // pred_check_branch
          %1657 = sbr.rel (%p1655) target = $region524
        $region523: #{tpu_custom_call.1} parent=35 // pred_region
          %v1658 = vld [vmem:[#allocation6] sm:$0xff]
          %v1659 = vsel %vm1642, %v1658, 0.0
          %1660 = vadd.xlane.f32.xlu0 %v1659
          %v1661 = vpop.xlane.xlu0 %1660
          %v1662 = vrot.slane %v1661, 4
          %v1663 = vadd.f32 %v1661, %v1662
          %v1664 = vrot.slane %v1663, 2
          %v1665 = vadd.f32 %v1663, %v1664
          %v1666 = vrot.slane %v1665, 1
          %v1667 = vadd.f32 %v1665, %v1666
          %s1668 = vtos %v1667
          %s1669 = ssub.f32 4096.0, %s1668
          %v1670 = vld [vmem:[#allocation4] sm:$0xff]
          %v1671 = vsel %vm1642, %v1670, 0.0
          %1672 = vadd.xlane.f32.xlu0 %v1671
          %v1673 = vpop.xlane.xlu0 %1672
          %v1674 = vrot.slane %v1673, 4
          %v1675 = vadd.f32 %v1673, %v1674
          %v1676 = vrot.slane %v1675, 2
          %v1677 = vadd.f32 %v1675, %v1676
          %v1678 = vrot.slane %v1677, 1
          %v1679 = vadd.f32 %v1677, %v1678
          %s1680 = vtos %v1679
          %v1681 = vld [vmem:[#allocation5] sm:$0xff]
          %v1682 = vsel %vm1642, %v1681, 0.0
          %1683 = vadd.xlane.f32.xlu0 %v1682
          %v1684 = vpop.xlane.xlu0 %1683
          %v1685 = vrot.slane %v1684, 4
          %v1686 = vadd.f32 %v1684, %v1685
          %v1687 = vrot.slane %v1686, 2
          %v1688 = vadd.f32 %v1686, %v1687
          %v1689 = vrot.slane %v1688, 1
          %v1690 = vadd.f32 %v1688, %v1689
          %s1691 = vtos %v1690
          %s1692 = ssub.f32 %s1691, %s1680
          %p1693 = scmp.gt.f32.partialorder %s1668, 0.0
          %v1694 = vstv %s1668
          %v1695 = vrcp.pop %v1694
          %v1696 = vmul.f32 %v1694, %v1695
          %v1697 = vsub.f32 1.0, %v1696
          %v1698 = vmul.f32 %v1695, %v1697
          %v1699 = vadd.f32 %v1695, %v1698
          %vm1700 = vweird.f32 %v1694
          %vm1701 = vweird.f32 %v1695
          %vm1702 = vmor %vm1700, %vm1701
          %v1703 = vsel %vm1702, %v1695, %v1699
          %v1704 = vand.u32 2147483647, %v1694
          %vm1705 = vcmp.eq.f32.partialorder %v1704, 8.507059e+37
          %v1706 = vand.u32 %v1694, 2147483648
          %v1707 = vor.u32 1.1754944e-38, %v1706
          %v1708 = vsel %vm1705, %v1707, %v1703
          %s1709 = vtos %v1708
          %s1710 = smul.f32 %s1680, %s1709
          %s1711 = scalar_select %p1693, %s1710, 0.0
          %p1712 = scmp.gt.f32.partialorder %s1669, 0.0
          %v1713 = vstv %s1669
          %v1714 = vrcp.pop %v1713
          %v1715 = vmul.f32 %v1713, %v1714
          %v1716 = vsub.f32 1.0, %v1715
          %v1717 = vmul.f32 %v1714, %v1716
          %v1718 = vadd.f32 %v1714, %v1717
          %vm1719 = vweird.f32 %v1713
          %vm1720 = vweird.f32 %v1714
          %vm1721 = vmor %vm1719, %vm1720
          %v1722 = vsel %vm1721, %v1714, %v1718
          %v1723 = vand.u32 2147483647, %v1713
          %vm1724 = vcmp.eq.f32.partialorder %v1723, 8.507059e+37
          %v1725 = vand.u32 %v1713, 2147483648
          %v1726 = vor.u32 1.1754944e-38, %v1725
          %v1727 = vsel %vm1724, %v1726, %v1722
          %s1728 = vtos %v1727
          %s1729 = smul.f32 %s1692, %s1728
          %s1730 = scalar_select %p1712, %s1729, 0.0
          %s1731 = sadd.f32 %s1711, %s1730
          %s1732 = scalar_lea.smem [#allocation10], 0
          %1733 = sst [smem:[%s1732]] %s1731
        $region524: #{tpu_custom_call.1} parent=35 // pred_fallthru
          _
        // Predicated region
        $region525: #{tpu_custom_call.1} parent=35 // pred_check
          %p1734 = pneg %p135
        $region526: #{tpu_custom_call.1} parent=35 // pred_check_branch
          %1736 = sbr.rel (%p1734) target = $region528
        $region527: #{tpu_custom_call.1} parent=35 // pred_region
          %1738 = vsyncadd [#allocation11], 0
          %s1740 = sshll.u32 %s5, 4
          %s1741 = int_to_ptr.hbm [resolvable:$true] %s1740
          %1743 = dma.smem_to_hbm [#allocation10], 16, %s1741, [#allocation11]
        $region528: #{tpu_custom_call.1} parent=35 // pred_fallthru
          _
        // Predicated region
        $region529: #{tpu_custom_call.1} parent=35 // pred_check
          %p1744 = pneg %p135
        $region530: #{tpu_custom_call.1} parent=35 // pred_check_branch
          %1746 = sbr.rel (%p1744) target = $region532
        $region531: #{tpu_custom_call.1} parent=35 // pred_region
          %1748 = dma.done [#allocation11], 16
        $region532: #{tpu_custom_call.1} parent=35 // pred_fallthru
          _
        %1749 = sfence
      $region36: #{tpu_custom_call.1} parent=5 // pred_fallthru
        _
      %p1750 = scmp.le.s32.totalorder 2, %s23
      // Predicated region
      $region533: #{tpu_custom_call.1} parent=5 // pred_check
        %p1751 = pneg %p1750
      $region534: #{tpu_custom_call.1} parent=5 // pred_check_branch
        %1753 = sbr.rel (%p1751) target = $region536
      $region535: #{tpu_custom_call.1} parent=5 // pred_region
        %s1754 = ssub.s32 %s23, 2
      $region536: #{tpu_custom_call.1} parent=5 // pred_fallthru
        _
    $region6: #{tpu_custom_call.1} parent=1 // loop_footer
      %s27 = sadd.s32 1, %s23
    $region7: #{tpu_custom_call.1} parent=1 // loop_footer_branch
      %22 = sbr.rel target = $region3
    $region8: #{tpu_custom_call.1} parent=1 // loop_exit
      _
    %1755 = vsyncpa [#allocation11], 1
    %s1756 = scalar_lea.sflag [#allocation11], 1
    %1757 = vsyncpa %s1756, 1
  %1758 = vsyncmov [#allocation7]
  %s1759 = vpop.sfrf %1758
  %p1760 = scmp.eq.s32.totalorder %s1759, 0
  %p1761 = pneg %p1760
  %1763 = shalt.err (%p1761)
  %s1764 = scalar_lea.sflag [#allocation7], 1
  %1765 = vsyncmov %s1764
  %s1766 = vpop.sfrf %1765
  %p1767 = scmp.eq.s32.totalorder %s1766, 0
  %p1768 = pneg %p1767
  %1770 = shalt.err (%p1768)
  %s1771 = scalar_lea.sflag [#allocation7], 2
  %1772 = vsyncmov %s1771
  %s1773 = vpop.sfrf %1772
  %p1774 = scmp.eq.s32.totalorder %s1773, 0
  %p1775 = pneg %p1774
  %1777 = shalt.err (%p1775)
  %s1778 = scalar_lea.sflag [#allocation7], 3
  %1779 = vsyncmov %s1778
  %s1780 = vpop.sfrf %1779
  %p1781 = scmp.eq.s32.totalorder %s1780, 0
  %p1782 = pneg %p1781
  %1784 = shalt.err (%p1782)
  %s1785 = scalar_lea.sflag [#allocation7], 4
  %1786 = vsyncmov %s1785
  %s1787 = vpop.sfrf %1786
  %p1788 = scmp.eq.s32.totalorder %s1787, 0
  %p1789 = pneg %p1788
  %1791 = shalt.err (%p1789)
  %s1792 = scalar_lea.sflag [#allocation7], 5
  %1793 = vsyncmov %s1792
  %s1794 = vpop.sfrf %1793
  %p1795 = scmp.eq.s32.totalorder %s1794, 0
  %p1796 = pneg %p1795
  %1798 = shalt.err (%p1796)
  %s1799 = scalar_lea.sflag [#allocation7], 6
  %1800 = vsyncmov %s1799
  %s1801 = vpop.sfrf %1800
  %p1802 = scmp.eq.s32.totalorder %s1801, 0
  %p1803 = pneg %p1802
  %1805 = shalt.err (%p1803)
  %s1806 = scalar_lea.sflag [#allocation7], 7
  %1807 = vsyncmov %s1806
  %s1808 = vpop.sfrf %1807
  %p1809 = scmp.eq.s32.totalorder %s1808, 0
  %p1810 = pneg %p1809
  %1812 = shalt.err (%p1810)
  %s1813 = scalar_lea.sflag [#allocation7], 8
  %1814 = vsyncmov %s1813
  %s1815 = vpop.sfrf %1814
  %p1816 = scmp.eq.s32.totalorder %s1815, 0
  %p1817 = pneg %p1816
  %1819 = shalt.err (%p1817)
  %s1820 = scalar_lea.sflag [#allocation7], 9
  %1821 = vsyncmov %s1820
  %s1822 = vpop.sfrf %1821
  %p1823 = scmp.eq.s32.totalorder %s1822, 0
  %p1824 = pneg %p1823
  %1826 = shalt.err (%p1824)
  %s1827 = scalar_lea.sflag [#allocation7], 10
  %1828 = vsyncmov %s1827
  %s1829 = vpop.sfrf %1828
  %p1830 = scmp.eq.s32.totalorder %s1829, 0
  %p1831 = pneg %p1830
  %1833 = shalt.err (%p1831)
  %s1834 = scalar_lea.sflag [#allocation7], 11
  %1835 = vsyncmov %s1834
  %s1836 = vpop.sfrf %1835
  %p1837 = scmp.eq.s32.totalorder %s1836, 0
  %p1838 = pneg %p1837
  %1840 = shalt.err (%p1838)
  %s1841 = scalar_lea.sflag [#allocation7], 12
  %1842 = vsyncmov %s1841
  %s1843 = vpop.sfrf %1842
  %p1844 = scmp.eq.s32.totalorder %s1843, 0
  %p1845 = pneg %p1844
  %1847 = shalt.err (%p1845)
  %s1848 = scalar_lea.sflag [#allocation7], 13
  %1849 = vsyncmov %s1848
  %s1850 = vpop.sfrf %1849
  %p1851 = scmp.eq.s32.totalorder %s1850, 0
  %p1852 = pneg %p1851
  %1854 = shalt.err (%p1852)
  %s1855 = scalar_lea.sflag [#allocation7], 14
  %1856 = vsyncmov %s1855
  %s1857 = vpop.sfrf %1856
  %p1858 = scmp.eq.s32.totalorder %s1857, 0
  %p1859 = pneg %p1858
  %1861 = shalt.err (%p1859)
  %s1862 = scalar_lea.sflag [#allocation7], 15
  %1863 = vsyncmov %s1862
  %s1864 = vpop.sfrf %1863
  %p1865 = scmp.eq.s32.totalorder %s1864, 0
  %p1866 = pneg %p1865
  %1868 = shalt.err (%p1866)

</llo_original>
